<compile_context>
chip_gen: v7x
topology: tpu7x:2x2x1
jax: 0.10.0
libtpu: 0.0.40
codegen_flags: <defaults>
</compile_context>

<pallas_src>
import functools

import jax
import jax.numpy as jnp
from jax.experimental import pallas as pl
from jax.experimental.pallas import tpu as pltpu


def fw_unfold_kernel(grad_ss_ref, extra_ss_ref, gamma_ref,
                     x_ini_ref, Htc_ref, x_out_ref, *, L):
    # Per grid step (TB = batch tile):
    #   grad_ss/extra_ss/gamma : (L,) f32 in SMEM
    #   x_ini_ref : (TB, N+1) f32   augmented init state, lane N pinned to -1
    #   Htc_ref   : (TB, N+1, M) bf16   rows 0..N-1 = H^T, row N = y^T
    #   x_out_ref : (TB, N) f32
    TB, Naug = x_ini_ref.shape
    N = x_out_ref.shape[1]                                  # Naug == N + 1

    Htc = Htc_ref[...]                                      # (TB, N+1, M) bf16
    # Fused Gram matmul (bf16 MXU, f32 accumulation), minor-axis contraction on
    # both operands (no in-kernel transposes):
    #   G[b, n, k] = sum_m Htc[b, n, m] * Htc[b, k, m]
    #   G[:, :N, :N] = H^T H ; G[:, :N, N] = H^T y ; row N / corner unused.
    G = jnp.einsum('bnm,bkm->bnk', Htc, Htc,
                   preferred_element_type=jnp.float32)      # (TB, N+1, N+1) f32

    # Augmented state: lanes 0..N-1 carry the detector state, lane N is pinned
    # to -1 so that sum_k G[n, k] * state[k] == (H^T H y_x - H^T y)[n] in a
    # single VPU broadcast-multiply + lane reduce (no q=1 MXU matvec, no bf16
    # HTH copy).  Mask is hoisted out of the unrolled loop.
    lane = jax.lax.broadcasted_iota(jnp.int32, (TB, Naug), 1)
    is_aug_lane = lane == N

    x_a = x_ini_ref[...]                                    # (TB, N+1) f32
    y_xa = x_a
    for ii in range(L):          # L static -> fully unrolled (LLO visibility)
        gss2 = 2.0 * grad_ss_ref[ii]                        # scalar unit, free
        # (HTH @ y_x - HTy) in one shot on the f32 Gram matrix.
        red = jnp.sum(G * y_xa[:, None, :], axis=-1)        # (TB, N+1) f32
        x_buff = y_xa - gss2 * red
        # 2*sigmoid(2*g*t) - 1 == tanh(g*t): single EUP op, shorter chain.
        ply = jnp.tanh(gamma_ref[ii] * x_buff)
        y_new = x_a + extra_ss_ref[ii] * (ply - x_a)
        # Re-pin the augmentation lane to -1 (it would otherwise drift and
        # corrupt the H^T y column contribution on the next iteration).
        y_xa = jnp.where(is_aug_lane, -1.0, y_new)
        x_a = y_xa

    x_out_ref[...] = x_a[:, :N]                             # dense (TB, N) store


def fw_unfold_forward(x_ini, y, H, xt, grad_ss, extra_ss, gamma, L, block_b=32):
    """x_ini, xt: (B, N, 1); y: (B, M, 1); H: (B, M, N).
    Returns (x: (B, N, 1), loss: (1, 1)) matching the PyTorch module.

    block_b: batches per grid step (TB).  32 fits comfortably on every
    generation with the 64 MiB vmem limit set below (VMEM/step ~20 MiB at
    production N=M=160 including lane padding to 256); raise to 64+ on
    128-MiB-VMEM parts (v5e/v6e), keep <=32 on v7x, and keep grid length >= 2
    so the "parallel" batch axis can feed both TensorCores."""
    B, M, N = H.shape
    x_ini2 = x_ini[:, :, 0]                                 # (B, N) f32
    y2 = y[:, :, 0]                                         # (B, M) f32

    # One-time XLA transpose of H in HBM + y appended as an extra row, cast to
    # bf16: the kernel's single Gram matmul then yields both H^T H and H^T y.
    Ht = jnp.transpose(H, (0, 2, 1))                        # (B, N, M)
    Htc = jnp.concatenate([Ht, y2[:, None, :]], axis=1).astype(jnp.bfloat16)

    # Augmented initial state: lane N pinned to -1 (multiplies the H^T y column
    # inside the kernel's multiply+lane-reduce).
    x_ini_aug = jnp.concatenate(
        [x_ini2, jnp.full((B, 1), -1.0, x_ini2.dtype)], axis=1)   # (B, N+1)

    TB = min(block_b, B)
    Bp = pl.cdiv(B, TB) * TB
    if Bp != B:  # pad batch; padded rows are discarded below and never hit loss.
        pad = Bp - B
        x_ini_aug = jnp.pad(x_ini_aug, ((0, pad), (0, 0)))
        Htc = jnp.pad(Htc, ((0, pad), (0, 0), (0, 0)))

    x_row = pl.pallas_call(
        functools.partial(fw_unfold_kernel, L=L),
        out_shape=jax.ShapeDtypeStruct((Bp, N), jnp.float32),
        grid_spec=pltpu.PrefetchScalarGridSpec(
            num_scalar_prefetch=0,
            grid=(Bp // TB,),
            in_specs=[
                pl.BlockSpec(memory_space=pltpu.MemorySpace.SMEM),  # grad_ss  (L,)
                pl.BlockSpec(memory_space=pltpu.MemorySpace.SMEM),  # extra_ss (L,)
                pl.BlockSpec(memory_space=pltpu.MemorySpace.SMEM),  # gamma    (L,)
                pl.BlockSpec((TB, N + 1), lambda b: (b, 0)),        # x_ini (aug)
                pl.BlockSpec((TB, N + 1, M), lambda b: (b, 0, 0)),  # [H^T; y^T] bf16
            ],
            out_specs=pl.BlockSpec((TB, N), lambda b: (b, 0)),      # x rows
        ),
        compiler_params=pltpu.CompilerParams(
            dimension_semantics=("parallel",),       # batch axis -> both TCs
            vmem_limit_bytes=64 * 1024 * 1024),      # raised above scoped default
    )(grad_ss, extra_ss, gamma, x_ini_aug, Htc)

    x_col = x_row[:B, :, None]                              # (B, N, 1)
    diff = x_col - xt
    loss = jnp.sum(diff * diff).reshape(1, 1)               # (1, 1), as in torch
    return x_col, loss


def reference_forward(x_ini, y, H, xt, grad_ss, extra_ss, gamma, L):
    """Pure-JAX f32 transcription of the PyTorch forward (column-vector form)."""
    x = x_ini
    y_x = x_ini
    Ht = jnp.transpose(H, (0, 2, 1))
    HTH = jnp.matmul(Ht, H)
    HTy = jnp.matmul(Ht, y)
    for ii in range(L):
        grad_f = 2.0 * (jnp.matmul(HTH, y_x) - HTy)
        x_buff = y_x - grad_ss[ii] * grad_f
        temp = 2.0 * gamma[ii] * x_buff
        ply_x = 2.0 * jax.nn.sigmoid(temp) - 1.0
        y_x = x + extra_ss[ii] * (ply_x - x)
        x = y_x
    diff = x - xt
    loss = jnp.sum(jnp.matmul(jnp.transpose(diff, (0, 2, 1)), diff), axis=0)
    return x, loss


if __name__ == "__main__":
    # Small shapes consistent with the module (original M = N = 160):
    # B=16, M=N=32, L=5 -> TB=16, grid=(1,).
    B, M, N, L = 16, 32, 32, 5

    key = jax.random.PRNGKey(0)
    k1, k2, k3 = jax.random.split(key, 3)
    H = jax.random.normal(k1, (B, M, N), dtype=jnp.float32) / jnp.sqrt(jnp.float32(M))
    xt = jnp.sign(jax.random.normal(k2, (B, N, 1), dtype=jnp.float32))  # 4QAM-like +-1
    y = jnp.matmul(H, xt) + 0.1 * jax.random.normal(k3, (B, M, 1), dtype=jnp.float32)
    x_ini = jnp.zeros((B, N, 1), dtype=jnp.float32)

    # Deterministic parameter init matching __init__:
    grad_ss = jnp.full((L,), 1e-4, dtype=jnp.float32)
    extra_ss = jnp.full((L,), 0.01, dtype=jnp.float32)
    gamma = ((2.0 - 0.1) / L) * jnp.arange(L, dtype=jnp.float32) + 0.1

    x_out, loss = fw_unfold_forward(x_ini, y, H, xt, grad_ss, extra_ss, gamma, L,
                                    block_b=32)
    jax.block_until_ready((x_out, loss))

    x_ref, loss_ref = reference_forward(x_ini, y, H, xt, grad_ss, extra_ss, gamma, L)
    assert x_out.shape == (B, N, 1) and loss.shape == (1, 1)
    assert jnp.allclose(x_out, x_ref, atol=1e-5, rtol=1e-5)
    assert jnp.allclose(loss, loss_ref, atol=1e-4, rtol=1e-4)

    print("KERNEL_OK")
</pallas_src>

<mosaic_0001>
module attributes {stable_mosaic.version = 11 : i64} {
  func.func @fw_unfold_kernel(%arg0: i32, %arg1: memref<5xf32, #tpu.memory_space<smem>>, %arg2: memref<5xf32, #tpu.memory_space<smem>>, %arg3: memref<5xf32, #tpu.memory_space<smem>>, %arg4: memref<16x33xf32, #tpu.memory_space<vmem>>, %arg5: memref<16x33x32xbf16, #tpu.memory_space<vmem>>, %arg6: memref<16x32xf32, #tpu.memory_space<vmem>>) attributes {dimension_semantics = [#tpu.dimension_semantics<parallel>], iteration_bounds = array<i64: 1>, scalar_prefetch = 0 : i64, scratch_operands = 0 : i64, tpu.core_type = #tpu.core_type<tc>, window_params = [{transform_indices = @transform_0, window_bounds = array<i64: 5>}, {transform_indices = @transform_1, window_bounds = array<i64: 5>}, {transform_indices = @transform_2, window_bounds = array<i64: 5>}, {transform_indices = @transform_3, window_bounds = array<i64: 16, 33>}, {transform_indices = @transform_4, window_bounds = array<i64: 16, 33, 32>}, {transform_indices = @transform_5, window_bounds = array<i64: 16, 32>}]} {
    %c0 = arith.constant 0 : index
    %c0_0 = arith.constant 0 : index
    %c0_1 = arith.constant 0 : index
    %0 = vector.load %arg5[%c0, %c0_0, %c0_1] : memref<16x33x32xbf16, #tpu.memory_space<vmem>>, vector<16x33x32xbf16>
    "tpu.trace_start"() <{level = 10 : i32, message = "bnm,bkm->bnk"}> : () -> ()
    %cst = arith.constant dense<0.000000e+00> : vector<16x33x33xf32>
    %1 = tpu.matmul %0, %0, %cst {dimension_numbers = #tpu.dot_dimension_numbers<[2], [2], [1], [1], [0, 0, 0, 1, 1, 1], [0], [0]>} : vector<16x33x32xbf16>, vector<16x33x32xbf16>, vector<16x33x33xf32> -> vector<16x33x33xf32>
    "tpu.trace_stop"() : () -> ()
    %2 = tpu.iota {dimensions = array<i32: 1>} : vector<16x33xi32>
    %c32_i32 = arith.constant 32 : i32
    %3 = vector.broadcast %c32_i32 : i32 to vector<16x33xi32>
    %4 = arith.cmpi eq, %2, %3 : vector<16x33xi32>
    %c0_2 = arith.constant 0 : index
    %c0_3 = arith.constant 0 : index
    %5 = vector.load %arg4[%c0_2, %c0_3] : memref<16x33xf32, #tpu.memory_space<vmem>>, vector<16x33xf32>
    %c0_4 = arith.constant 0 : index
    %6 = memref.load %arg1[%c0_4] : memref<5xf32, #tpu.memory_space<smem>>
    %cst_5 = arith.constant 2.000000e+00 : f32
    %7 = arith.mulf %cst_5, %6 : f32
    %8 = vector.shape_cast %5 : vector<16x33xf32> to vector<16x1x33xf32>
    %9 = vector.broadcast %8 : vector<16x1x33xf32> to vector<16x33x33xf32>
    %10 = arith.mulf %1, %9 : vector<16x33x33xf32>
    %cst_6 = arith.constant dense<0.000000e+00> : vector<16x33xf32>
    %11 = vector.multi_reduction <add>, %10, %cst_6 [2] : vector<16x33x33xf32> to vector<16x33xf32>
    %12 = vector.broadcast %7 : f32 to vector<16x33xf32>
    %13 = arith.mulf %12, %11 : vector<16x33xf32>
    %14 = arith.subf %5, %13 : vector<16x33xf32>
    %c0_7 = arith.constant 0 : index
    %15 = memref.load %arg3[%c0_7] : memref<5xf32, #tpu.memory_space<smem>>
    %16 = vector.broadcast %15 : f32 to vector<16x33xf32>
    %17 = arith.mulf %16, %14 : vector<16x33xf32>
    %18 = math.tanh %17 : vector<16x33xf32>
    %c0_8 = arith.constant 0 : index
    %19 = memref.load %arg2[%c0_8] : memref<5xf32, #tpu.memory_space<smem>>
    %20 = arith.subf %18, %5 : vector<16x33xf32>
    %21 = vector.broadcast %19 : f32 to vector<16x33xf32>
    %22 = arith.mulf %21, %20 : vector<16x33xf32>
    %23 = arith.addf %5, %22 : vector<16x33xf32>
    %cst_9 = arith.constant -1.000000e+00 : f32
    %24 = vector.broadcast %cst_9 : f32 to vector<16x33xf32>
    %25 = arith.select %4, %24, %23 : vector<16x33xi1>, vector<16x33xf32>
    %c1 = arith.constant 1 : index
    %26 = memref.load %arg1[%c1] : memref<5xf32, #tpu.memory_space<smem>>
    %cst_10 = arith.constant 2.000000e+00 : f32
    %27 = arith.mulf %cst_10, %26 : f32
    %28 = vector.shape_cast %25 : vector<16x33xf32> to vector<16x1x33xf32>
    %29 = vector.broadcast %28 : vector<16x1x33xf32> to vector<16x33x33xf32>
    %30 = arith.mulf %1, %29 : vector<16x33x33xf32>
    %cst_11 = arith.constant dense<0.000000e+00> : vector<16x33xf32>
    %31 = vector.multi_reduction <add>, %30, %cst_11 [2] : vector<16x33x33xf32> to vector<16x33xf32>
    %32 = vector.broadcast %27 : f32 to vector<16x33xf32>
    %33 = arith.mulf %32, %31 : vector<16x33xf32>
    %34 = arith.subf %25, %33 : vector<16x33xf32>
    %c1_12 = arith.constant 1 : index
    %35 = memref.load %arg3[%c1_12] : memref<5xf32, #tpu.memory_space<smem>>
    %36 = vector.broadcast %35 : f32 to vector<16x33xf32>
    %37 = arith.mulf %36, %34 : vector<16x33xf32>
    %38 = math.tanh %37 : vector<16x33xf32>
    %c1_13 = arith.constant 1 : index
    %39 = memref.load %arg2[%c1_13] : memref<5xf32, #tpu.memory_space<smem>>
    %40 = arith.subf %38, %25 : vector<16x33xf32>
    %41 = vector.broadcast %39 : f32 to vector<16x33xf32>
    %42 = arith.mulf %41, %40 : vector<16x33xf32>
    %43 = arith.addf %25, %42 : vector<16x33xf32>
    %cst_14 = arith.constant -1.000000e+00 : f32
    %44 = vector.broadcast %cst_14 : f32 to vector<16x33xf32>
    %45 = arith.select %4, %44, %43 : vector<16x33xi1>, vector<16x33xf32>
    %c2 = arith.constant 2 : index
    %46 = memref.load %arg1[%c2] : memref<5xf32, #tpu.memory_space<smem>>
    %cst_15 = arith.constant 2.000000e+00 : f32
    %47 = arith.mulf %cst_15, %46 : f32
    %48 = vector.shape_cast %45 : vector<16x33xf32> to vector<16x1x33xf32>
    %49 = vector.broadcast %48 : vector<16x1x33xf32> to vector<16x33x33xf32>
    %50 = arith.mulf %1, %49 : vector<16x33x33xf32>
    %cst_16 = arith.constant dense<0.000000e+00> : vector<16x33xf32>
    %51 = vector.multi_reduction <add>, %50, %cst_16 [2] : vector<16x33x33xf32> to vector<16x33xf32>
    %52 = vector.broadcast %47 : f32 to vector<16x33xf32>
    %53 = arith.mulf %52, %51 : vector<16x33xf32>
    %54 = arith.subf %45, %53 : vector<16x33xf32>
    %c2_17 = arith.constant 2 : index
    %55 = memref.load %arg3[%c2_17] : memref<5xf32, #tpu.memory_space<smem>>
    %56 = vector.broadcast %55 : f32 to vector<16x33xf32>
    %57 = arith.mulf %56, %54 : vector<16x33xf32>
    %58 = math.tanh %57 : vector<16x33xf32>
    %c2_18 = arith.constant 2 : index
    %59 = memref.load %arg2[%c2_18] : memref<5xf32, #tpu.memory_space<smem>>
    %60 = arith.subf %58, %45 : vector<16x33xf32>
    %61 = vector.broadcast %59 : f32 to vector<16x33xf32>
    %62 = arith.mulf %61, %60 : vector<16x33xf32>
    %63 = arith.addf %45, %62 : vector<16x33xf32>
    %cst_19 = arith.constant -1.000000e+00 : f32
    %64 = vector.broadcast %cst_19 : f32 to vector<16x33xf32>
    %65 = arith.select %4, %64, %63 : vector<16x33xi1>, vector<16x33xf32>
    %c3 = arith.constant 3 : index
    %66 = memref.load %arg1[%c3] : memref<5xf32, #tpu.memory_space<smem>>
    %cst_20 = arith.constant 2.000000e+00 : f32
    %67 = arith.mulf %cst_20, %66 : f32
    %68 = vector.shape_cast %65 : vector<16x33xf32> to vector<16x1x33xf32>
    %69 = vector.broadcast %68 : vector<16x1x33xf32> to vector<16x33x33xf32>
    %70 = arith.mulf %1, %69 : vector<16x33x33xf32>
    %cst_21 = arith.constant dense<0.000000e+00> : vector<16x33xf32>
    %71 = vector.multi_reduction <add>, %70, %cst_21 [2] : vector<16x33x33xf32> to vector<16x33xf32>
    %72 = vector.broadcast %67 : f32 to vector<16x33xf32>
    %73 = arith.mulf %72, %71 : vector<16x33xf32>
    %74 = arith.subf %65, %73 : vector<16x33xf32>
    %c3_22 = arith.constant 3 : index
    %75 = memref.load %arg3[%c3_22] : memref<5xf32, #tpu.memory_space<smem>>
    %76 = vector.broadcast %75 : f32 to vector<16x33xf32>
    %77 = arith.mulf %76, %74 : vector<16x33xf32>
    %78 = math.tanh %77 : vector<16x33xf32>
    %c3_23 = arith.constant 3 : index
    %79 = memref.load %arg2[%c3_23] : memref<5xf32, #tpu.memory_space<smem>>
    %80 = arith.subf %78, %65 : vector<16x33xf32>
    %81 = vector.broadcast %79 : f32 to vector<16x33xf32>
    %82 = arith.mulf %81, %80 : vector<16x33xf32>
    %83 = arith.addf %65, %82 : vector<16x33xf32>
    %cst_24 = arith.constant -1.000000e+00 : f32
    %84 = vector.broadcast %cst_24 : f32 to vector<16x33xf32>
    %85 = arith.select %4, %84, %83 : vector<16x33xi1>, vector<16x33xf32>
    %c4 = arith.constant 4 : index
    %86 = memref.load %arg1[%c4] : memref<5xf32, #tpu.memory_space<smem>>
    %cst_25 = arith.constant 2.000000e+00 : f32
    %87 = arith.mulf %cst_25, %86 : f32
    %88 = vector.shape_cast %85 : vector<16x33xf32> to vector<16x1x33xf32>
    %89 = vector.broadcast %88 : vector<16x1x33xf32> to vector<16x33x33xf32>
    %90 = arith.mulf %1, %89 : vector<16x33x33xf32>
    %cst_26 = arith.constant dense<0.000000e+00> : vector<16x33xf32>
    %91 = vector.multi_reduction <add>, %90, %cst_26 [2] : vector<16x33x33xf32> to vector<16x33xf32>
    %92 = vector.broadcast %87 : f32 to vector<16x33xf32>
    %93 = arith.mulf %92, %91 : vector<16x33xf32>
    %94 = arith.subf %85, %93 : vector<16x33xf32>
    %c4_27 = arith.constant 4 : index
    %95 = memref.load %arg3[%c4_27] : memref<5xf32, #tpu.memory_space<smem>>
    %96 = vector.broadcast %95 : f32 to vector<16x33xf32>
    %97 = arith.mulf %96, %94 : vector<16x33xf32>
    %98 = math.tanh %97 : vector<16x33xf32>
    %c4_28 = arith.constant 4 : index
    %99 = memref.load %arg2[%c4_28] : memref<5xf32, #tpu.memory_space<smem>>
    %100 = arith.subf %98, %85 : vector<16x33xf32>
    %101 = vector.broadcast %99 : f32 to vector<16x33xf32>
    %102 = arith.mulf %101, %100 : vector<16x33xf32>
    %103 = arith.addf %85, %102 : vector<16x33xf32>
    %cst_29 = arith.constant -1.000000e+00 : f32
    %104 = vector.broadcast %cst_29 : f32 to vector<16x33xf32>
    %105 = arith.select %4, %104, %103 : vector<16x33xi1>, vector<16x33xf32>
    %106 = vector.extract_strided_slice %105 {offsets = [0, 0], sizes = [16, 32], strides = [1, 1]} : vector<16x33xf32> to vector<16x32xf32>
    %c0_30 = arith.constant 0 : index
    %c0_31 = arith.constant 0 : index
    %107 = vector.load %arg6[%c0_30, %c0_31] : memref<16x32xf32, #tpu.memory_space<vmem>>, vector<16x32xf32>
    tpu.vector_store %arg6[%c0_30, %c0_31], %106 {strides = array<i32>} : memref<16x32xf32, #tpu.memory_space<vmem>>, vector<16x32xf32>,
    return
  }
  func.func @transform_0(%arg0: i32) -> i32 {
    %c0_i32 = arith.constant 0 : i32
    %c0_i32_0 = arith.constant 0 : i32
    return %c0_i32 : i32
  }
  func.func @transform_1(%arg0: i32) -> i32 {
    %c0_i32 = arith.constant 0 : i32
    %c0_i32_0 = arith.constant 0 : i32
    return %c0_i32 : i32
  }
  func.func @transform_2(%arg0: i32) -> i32 {
    %c0_i32 = arith.constant 0 : i32
    %c0_i32_0 = arith.constant 0 : i32
    return %c0_i32 : i32
  }
  func.func @transform_3(%arg0: i32) -> (i32, i32) {
    %c0_i32 = arith.constant 0 : i32
    %c0_i32_0 = arith.constant 0 : i32
    return %arg0, %c0_i32 : i32, i32
  }
  func.func @transform_4(%arg0: i32) -> (i32, i32, i32) {
    %c0_i32 = arith.constant 0 : i32
    %c0_i32_0 = arith.constant 0 : i32
    %c0_i32_1 = arith.constant 0 : i32
    return %arg0, %c0_i32, %c0_i32_0 : i32, i32, i32
  }
  func.func @transform_5(%arg0: i32) -> (i32, i32) {
    %c0_i32 = arith.constant 0 : i32
    %c0_i32_0 = arith.constant 0 : i32
    return %arg0, %c0_i32 : i32, i32
  }
}

</mosaic_0001>

<llo_original>
// kernel: tpu_custom_call.1
$region0: #{tpu_custom_call.1}
  #allocation0 [shape = 'u32[]', space=smem, size = 0x4, offset = 0x4, fixed_abs, tag = 'smem constant byte address 0x4 - core index']
  #allocation1 [shape = 'u32[144,128]{1,0:T(1,128)}', space=vmem, size = 0x12000, scoped, tag = 'internal scratch']
  %s0 = inlined_call_operand.hbm [shape: f32[5], index: 0, kind: input, shape index: {}]
  %s1 = inlined_call_operand.hbm [shape: f32[5], index: 1, kind: input, shape index: {}]
  %s2 = inlined_call_operand.hbm [shape: f32[5], index: 2, kind: input, shape index: {}]
  %s3 = inlined_call_operand.hbm [shape: f32[16,33], index: 3, kind: input, shape index: {}]
  %s4 = inlined_call_operand.hbm [shape: bf16[16,33,32], index: 4, kind: input, shape index: {}]
  %s5 = inlined_call_operand.hbm [shape: f32[16,32], index: 5, kind: output, shape index: {}]
  %s6 = sld [smem:[#allocation0]]
  $region50: #{tpu_custom_call.1} parent=0
    _
  %s8 = ssub.s32 1, %s6
  %s9 = scalar_select 0, %s8, %s6
  $region1: #{tpu_custom_call.1} parent=0
    #allocation2 [shape = 'u8[512]{0}', space=smem, size = 0x200, scoped, tag = 'input window, operand 0, single buffered']
    #allocation3 [shape = 's32[1]{0}', space=sflag, size = 0x4, scoped, tag = 'scoped memory for tpu_custom_call.1']
    #allocation4 [shape = 's32[1]{0}', space=sflag, size = 0x4, scoped, tag = 'scoped memory for tpu_custom_call.1']
    #allocation5 [shape = 's32[1]{0}', space=sflag, size = 0x4, scoped, tag = 'scoped memory for tpu_custom_call.1']
    #allocation6 [shape = 'u8[512]{0}', space=smem, size = 0x200, scoped, tag = 'input window, operand 1, single buffered']
    #allocation7 [shape = 's32[1]{0}', space=sflag, size = 0x4, scoped, tag = 'scoped memory for tpu_custom_call.1']
    #allocation8 [shape = 'u8[512]{0}', space=smem, size = 0x200, scoped, tag = 'input window, operand 2, single buffered']
    #allocation9 [shape = 'u8[8192]{0}', space=vmem, size = 0x2000, scoped, tag = 'input window, operand 3, single buffered']
    #allocation10 [shape = 'u8[163840]{0}', space=vmem, size = 0x28000, scoped, tag = 'input window, operand 4, single buffered']
    #allocation11 [shape = 's32[1]{0}', space=sflag, size = 0x4, scoped, tag = 'scoped memory for tpu_custom_call.1']
    #allocation12 [shape = 'u8[8192]{0}', space=vmem, size = 0x2000, scoped, tag = 'output window, operand 0, single buffered']
    %10 = vsyncpa [#allocation5], 0
    %11 = vsyncpa [#allocation7], 0
    %12 = vsyncpa [#allocation3], 0
    %13 = vsyncpa [#allocation11], 0
    %14 = vsyncpa [#allocation4], 0
    // Predicated region
    $region2: #{tpu_custom_call.1} parent=1 // pred_check
      _
    $region3: #{tpu_custom_call.1} parent=1 // pred_check_branch
      %16 = sbr.rel (0) target = $region5
    $region4: #{tpu_custom_call.1} parent=1 // pred_region
      %s18 = ssub.s32 16, 16
      %19 = vsyncadd [#allocation5], %s18
      %22 = dma.hbm_to_smem %s0, 16, [#allocation2], [#allocation5]
    $region5: #{tpu_custom_call.1} parent=1 // pred_fallthru
      _
    // Predicated region
    $region6: #{tpu_custom_call.1} parent=1 // pred_check
      _
    $region7: #{tpu_custom_call.1} parent=1 // pred_check_branch
      %24 = sbr.rel (0) target = $region9
    $region8: #{tpu_custom_call.1} parent=1 // pred_region
      %s26 = ssub.s32 16, 16
      %27 = vsyncadd [#allocation7], %s26
      %30 = dma.hbm_to_smem %s1, 16, [#allocation6], [#allocation7]
    $region9: #{tpu_custom_call.1} parent=1 // pred_fallthru
      _
    // Predicated region
    $region10: #{tpu_custom_call.1} parent=1 // pred_check
      _
    $region11: #{tpu_custom_call.1} parent=1 // pred_check_branch
      %32 = sbr.rel (0) target = $region13
    $region12: #{tpu_custom_call.1} parent=1 // pred_region
      %s34 = ssub.s32 16, 16
      %35 = vsyncadd [#allocation7], %s34
      %38 = dma.hbm_to_smem %s2, 16, [#allocation8], [#allocation7]
    $region13: #{tpu_custom_call.1} parent=1 // pred_fallthru
      _
    // Predicated region
    $region14: #{tpu_custom_call.1} parent=1 // pred_check
      _
    $region15: #{tpu_custom_call.1} parent=1 // pred_check_branch
      %40 = sbr.rel (0) target = $region17
    $region16: #{tpu_custom_call.1} parent=1 // pred_region
      %s42 = ssub.s32 256, 256
      %43 = vsyncadd [#allocation3], %s42
      %s44 = sshll.u32 [#allocation9], 4
      %s45 = int_to_ptr.vmem [resolvable:$true] %s44
      %50 = dma.hbm_to_vmem [thread:$0]  %s3, 256, %s45, [#allocation3], 128, 128, 8
    $region17: #{tpu_custom_call.1} parent=1 // pred_fallthru
      _
    // Predicated region
    $region18: #{tpu_custom_call.1} parent=1 // pred_check
      _
    $region19: #{tpu_custom_call.1} parent=1 // pred_check_branch
      %52 = sbr.rel (0) target = $region21
    $region20: #{tpu_custom_call.1} parent=1 // pred_region
      %s54 = ssub.s32 5120, 5120
      %55 = vsyncadd [#allocation11], %s54
      %s56 = sshll.u32 [#allocation10], 4
      %s57 = int_to_ptr.vmem [resolvable:$true] %s56
      %62 = dma.hbm_to_vmem [thread:$0]  %s4, 5120, %s57, [#allocation11], 64, 64, 4
    $region21: #{tpu_custom_call.1} parent=1 // pred_fallthru
      _
    // Predicated region
    $region22: #{tpu_custom_call.1} parent=1 // pred_check
      _
    $region23: #{tpu_custom_call.1} parent=1 // pred_check_branch
      %64 = sbr.rel (0) target = $region25
    $region24: #{tpu_custom_call.1} parent=1 // pred_region
      %65 = dma.done [#allocation5], 16
    $region25: #{tpu_custom_call.1} parent=1 // pred_fallthru
      _
    // Predicated region
    $region26: #{tpu_custom_call.1} parent=1 // pred_check
      _
    $region27: #{tpu_custom_call.1} parent=1 // pred_check_branch
      %67 = sbr.rel (0) target = $region29
    $region28: #{tpu_custom_call.1} parent=1 // pred_region
      %68 = dma.done [#allocation7], 16
    $region29: #{tpu_custom_call.1} parent=1 // pred_fallthru
      _
    // Predicated region
    $region30: #{tpu_custom_call.1} parent=1 // pred_check
      _
    $region31: #{tpu_custom_call.1} parent=1 // pred_check_branch
      %70 = sbr.rel (0) target = $region33
    $region32: #{tpu_custom_call.1} parent=1 // pred_region
      %71 = dma.done [#allocation7], 16
    $region33: #{tpu_custom_call.1} parent=1 // pred_fallthru
      _
    // Predicated region
    $region34: #{tpu_custom_call.1} parent=1 // pred_check
      _
    $region35: #{tpu_custom_call.1} parent=1 // pred_check_branch
      %73 = sbr.rel (0) target = $region37
    $region36: #{tpu_custom_call.1} parent=1 // pred_region
      %74 = dma.done [#allocation3], 256
    $region37: #{tpu_custom_call.1} parent=1 // pred_fallthru
      _
    // Predicated region
    $region38: #{tpu_custom_call.1} parent=1 // pred_check
      _
    $region39: #{tpu_custom_call.1} parent=1 // pred_check_branch
      %76 = sbr.rel (0) target = $region41
    $region40: #{tpu_custom_call.1} parent=1 // pred_region
      %77 = dma.done [#allocation11], 5120
    $region41: #{tpu_custom_call.1} parent=1 // pred_fallthru
      _
    %78 = sfence
    %v80 = vld [vmem:[#allocation10] sm:$0xf]
    %v81 = vld [vmem:[#allocation10 + $0x4] sm:$0xf]
    %v82 = vld [vmem:[#allocation10 + $0x8] sm:$0xf]
    %v83 = vld [vmem:[#allocation10 + $0xc] sm:$0xf]
    %v84 = vld [vmem:[#allocation10 + $0x10] sm:$0x1]
    %v85 = vld [vmem:[#allocation10 + $0x14] sm:$0xf]
    %v86 = vld [vmem:[#allocation10 + $0x18] sm:$0xf]
    %v87 = vld [vmem:[#allocation10 + $0x1c] sm:$0xf]
    %v88 = vld [vmem:[#allocation10 + $0x20] sm:$0xf]
    %v89 = vld [vmem:[#allocation10 + $0x24] sm:$0x1]
    %v90 = vld [vmem:[#allocation10 + $0x28] sm:$0xf]
    %v91 = vld [vmem:[#allocation10 + $0x2c] sm:$0xf]
    %v92 = vld [vmem:[#allocation10 + $0x30] sm:$0xf]
    %v93 = vld [vmem:[#allocation10 + $0x34] sm:$0xf]
    %v94 = vld [vmem:[#allocation10 + $0x38] sm:$0x1]
    %v95 = vld [vmem:[#allocation10 + $0x3c] sm:$0xf]
    %v96 = vld [vmem:[#allocation10 + $0x40] sm:$0xf]
    %v97 = vld [vmem:[#allocation10 + $0x44] sm:$0xf]
    %v98 = vld [vmem:[#allocation10 + $0x48] sm:$0xf]
    %v99 = vld [vmem:[#allocation10 + $0x4c] sm:$0x1]
    %v100 = vld [vmem:[#allocation10 + $0x50] sm:$0xf]
    %v101 = vld [vmem:[#allocation10 + $0x54] sm:$0xf]
    %v102 = vld [vmem:[#allocation10 + $0x58] sm:$0xf]
    %v103 = vld [vmem:[#allocation10 + $0x5c] sm:$0xf]
    %v104 = vld [vmem:[#allocation10 + $0x60] sm:$0x1]
    %v105 = vld [vmem:[#allocation10 + $0x64] sm:$0xf]
    %v106 = vld [vmem:[#allocation10 + $0x68] sm:$0xf]
    %v107 = vld [vmem:[#allocation10 + $0x6c] sm:$0xf]
    %v108 = vld [vmem:[#allocation10 + $0x70] sm:$0xf]
    %v109 = vld [vmem:[#allocation10 + $0x74] sm:$0x1]
    %v110 = vld [vmem:[#allocation10 + $0x78] sm:$0xf]
    %v111 = vld [vmem:[#allocation10 + $0x7c] sm:$0xf]
    %v112 = vld [vmem:[#allocation10 + $0x80] sm:$0xf]
    %v113 = vld [vmem:[#allocation10 + $0x84] sm:$0xf]
    %v114 = vld [vmem:[#allocation10 + $0x88] sm:$0x1]
    %v115 = vld [vmem:[#allocation10 + $0x8c] sm:$0xf]
    %v116 = vld [vmem:[#allocation10 + $0x90] sm:$0xf]
    %v117 = vld [vmem:[#allocation10 + $0x94] sm:$0xf]
    %v118 = vld [vmem:[#allocation10 + $0x98] sm:$0xf]
    %v119 = vld [vmem:[#allocation10 + $0x9c] sm:$0x1]
    %v120 = vld [vmem:[#allocation10 + $0xa0] sm:$0xf]
    %v121 = vld [vmem:[#allocation10 + $0xa4] sm:$0xf]
    %v122 = vld [vmem:[#allocation10 + $0xa8] sm:$0xf]
    %v123 = vld [vmem:[#allocation10 + $0xac] sm:$0xf]
    %v124 = vld [vmem:[#allocation10 + $0xb0] sm:$0x1]
    %v125 = vld [vmem:[#allocation10 + $0xb4] sm:$0xf]
    %v126 = vld [vmem:[#allocation10 + $0xb8] sm:$0xf]
    %v127 = vld [vmem:[#allocation10 + $0xbc] sm:$0xf]
    %v128 = vld [vmem:[#allocation10 + $0xc0] sm:$0xf]
    %v129 = vld [vmem:[#allocation10 + $0xc4] sm:$0x1]
    %v130 = vld [vmem:[#allocation10 + $0xc8] sm:$0xf]
    %v131 = vld [vmem:[#allocation10 + $0xcc] sm:$0xf]
    %v132 = vld [vmem:[#allocation10 + $0xd0] sm:$0xf]
    %v133 = vld [vmem:[#allocation10 + $0xd4] sm:$0xf]
    %v134 = vld [vmem:[#allocation10 + $0xd8] sm:$0x1]
    %v135 = vld [vmem:[#allocation10 + $0xdc] sm:$0xf]
    %v136 = vld [vmem:[#allocation10 + $0xe0] sm:$0xf]
    %v137 = vld [vmem:[#allocation10 + $0xe4] sm:$0xf]
    %v138 = vld [vmem:[#allocation10 + $0xe8] sm:$0xf]
    %v139 = vld [vmem:[#allocation10 + $0xec] sm:$0x1]
    %v140 = vld [vmem:[#allocation10 + $0xf0] sm:$0xf]
    %v141 = vld [vmem:[#allocation10 + $0xf4] sm:$0xf]
    %v142 = vld [vmem:[#allocation10 + $0xf8] sm:$0xf]
    %v143 = vld [vmem:[#allocation10 + $0xfc] sm:$0xf]
    %v144 = vld [vmem:[#allocation10 + $0x100] sm:$0x1]
    %v145 = vld [vmem:[#allocation10 + $0x104] sm:$0xf]
    %v146 = vld [vmem:[#allocation10 + $0x108] sm:$0xf]
    %v147 = vld [vmem:[#allocation10 + $0x10c] sm:$0xf]
    %v148 = vld [vmem:[#allocation10 + $0x110] sm:$0xf]
    %v149 = vld [vmem:[#allocation10 + $0x114] sm:$0x1]
    %v150 = vld [vmem:[#allocation10 + $0x118] sm:$0xf]
    %v151 = vld [vmem:[#allocation10 + $0x11c] sm:$0xf]
    %v152 = vld [vmem:[#allocation10 + $0x120] sm:$0xf]
    %v153 = vld [vmem:[#allocation10 + $0x124] sm:$0xf]
    %v154 = vld [vmem:[#allocation10 + $0x128] sm:$0x1]
    %v155 = vld [vmem:[#allocation10 + $0x12c] sm:$0xf]
    %v156 = vld [vmem:[#allocation10 + $0x130] sm:$0xf]
    %v157 = vld [vmem:[#allocation10 + $0x134] sm:$0xf]
    %v158 = vld [vmem:[#allocation10 + $0x138] sm:$0xf]
    %v159 = vld [vmem:[#allocation10 + $0x13c] sm:$0x1]
    %v165 = vunpack.c.l.b16 %v80
    %v166 = vunpack.c.l.b16 %v81
    %v167 = vunpack.c.l.b16 %v82
    %v168 = vunpack.c.l.b16 %v83
    %v169 = vunpack.c.l.b16 %v84
    %v170 = vpack.c.b16 %v166, %v165
    %v171 = vpack.c.b16 %v168, %v167
    %v172 = vpack.c.b16 %v169, %v169
    %vm173 = vcmask 261120
    %v175 = vsel %vm173, %v170, 0
    %v178 = vsel %vm173, %v171, 0
    %v181 = vsel %vm173, %v172, 0
    %183 = vmatprep.subr.bf16.mxu0 0
    %184 = vmatpush1.bf16.xpose.msra.mxu0 %v175
    %185 = vmatprep.subr.bf16.mxu0 0
    %186 = vmatpush1.bf16.xpose.msra.mxu0 %v178
    %187 = vmatprep.subr.bf16.mxu0 0
    %188 = vmatpush1.bf16.xpose.msra.mxu0 %v181
    %189 = vmatprep.subr.bf16.mxu0 0
    %190 = vmatpush1.bf16.xpose.msra.mxu0 0
    %191 = vmatprep.subr.bf16.mxu0 0
    %192 = vmatpush1.bf16.xpose.msra.mxu0 0
    %193 = vmatprep.subr.bf16.mxu0 0
    %194 = vmatpush1.bf16.xpose.msra.mxu0 0
    %195 = vmatprep.subr.bf16.mxu0 0
    %196 = vmatpush1.bf16.xpose.msra.mxu0 0
    %197 = vmatprep.subr.bf16.mxu0 0
    %198 = vmatpush1.bf16.xpose.msra.mxu0 0
    %199 = vmatprep.subr.bf16.mxu0 0
    %200 = vmatpush1.bf16.xpose.msra.mxu0 0
    %201 = vmatprep.subr.bf16.mxu0 0
    %202 = vmatpush1.bf16.xpose.msra.mxu0 0
    %203 = vmatprep.subr.bf16.mxu0 0
    %204 = vmatpush1.bf16.xpose.msra.mxu0 0
    %205 = vmatprep.subr.bf16.mxu0 0
    %206 = vmatpush1.bf16.xpose.msra.mxu0 0
    %207 = vmatprep.subr.bf16.mxu0 0
    %208 = vmatpush1.bf16.xpose.msra.mxu0 0
    %209 = vmatprep.subr.bf16.mxu0 0
    %210 = vmatpush1.bf16.xpose.msra.mxu0 0
    %211 = vmatprep.subr.bf16.mxu0 0
    %212 = vmatpush1.bf16.xpose.msra.mxu0 0
    %213 = vmatprep.subr.bf16.mxu0 0
    %214 = vmatpush1.bf16.xpose.msra.mxu0 0
    %215 = vmatprep.mubr.bf16.mxu0 0
    %216 = vmatmul.mubr.bf16.gmra.mrb[0].mxu0 %v175
    %v217 = vpop.f32.mrb[0].mxu0
    %v218 = vadd.f32 0.0, %v217
    %v219 = vpop.f32.mrb[0].mxu0
    %v220 = vpop.f32.mrb[0].mxu0
    %v221 = vadd.f32 0.0, %v220
    %v222 = vpop.f32.mrb[0].mxu0
    %223 = vmatprep.mubr.bf16.mxu0 0
    %224 = vmatmul.mubr.bf16.gmra.mrb[0].mxu0 %v178
    %v225 = vpop.f32.mrb[0].mxu0
    %v226 = vadd.f32 0.0, %v225
    %v227 = vpop.f32.mrb[0].mxu0
    %v228 = vpop.f32.mrb[0].mxu0
    %v229 = vadd.f32 0.0, %v228
    %v230 = vpop.f32.mrb[0].mxu0
    %231 = vmatprep.mubr.bf16.mxu0 0
    %232 = vmatmul.mubr.bf16.gmra.mrb[0].mxu0 %v181
    %v233 = vpop.f32.mrb[0].mxu0
    %v234 = vadd.f32 0.0, %v233
    %v235 = vpop.f32.mrb[0].mxu0
    %v236 = vpop.f32.mrb[0].mxu0
    %v237 = vpop.f32.mrb[0].mxu0
    %238 = vdwg.mxu0
    %v244 = vunpack.c.l.b16 %v85
    %v245 = vunpack.c.l.b16 %v86
    %v246 = vunpack.c.l.b16 %v87
    %v247 = vunpack.c.l.b16 %v88
    %v248 = vunpack.c.l.b16 %v89
    %v249 = vpack.c.b16 %v245, %v244
    %v250 = vpack.c.b16 %v247, %v246
    %v251 = vpack.c.b16 %v248, %v248
    %v253 = vsel %vm173, %v249, 0
    %v256 = vsel %vm173, %v250, 0
    %v259 = vsel %vm173, %v251, 0
    %261 = vmatprep.subr.bf16.mxu0 0
    %262 = vmatpush1.bf16.xpose.msra.mxu0 %v253
    %263 = vmatprep.subr.bf16.mxu0 0
    %264 = vmatpush1.bf16.xpose.msra.mxu0 %v256
    %265 = vmatprep.subr.bf16.mxu0 0
    %266 = vmatpush1.bf16.xpose.msra.mxu0 %v259
    %267 = vmatprep.subr.bf16.mxu0 0
    %268 = vmatpush1.bf16.xpose.msra.mxu0 0
    %269 = vmatprep.subr.bf16.mxu0 0
    %270 = vmatpush1.bf16.xpose.msra.mxu0 0
    %271 = vmatprep.subr.bf16.mxu0 0
    %272 = vmatpush1.bf16.xpose.msra.mxu0 0
    %273 = vmatprep.subr.bf16.mxu0 0
    %274 = vmatpush1.bf16.xpose.msra.mxu0 0
    %275 = vmatprep.subr.bf16.mxu0 0
    %276 = vmatpush1.bf16.xpose.msra.mxu0 0
    %277 = vmatprep.subr.bf16.mxu0 0
    %278 = vmatpush1.bf16.xpose.msra.mxu0 0
    %279 = vmatprep.subr.bf16.mxu0 0
    %280 = vmatpush1.bf16.xpose.msra.mxu0 0
    %281 = vmatprep.subr.bf16.mxu0 0
    %282 = vmatpush1.bf16.xpose.msra.mxu0 0
    %283 = vmatprep.subr.bf16.mxu0 0
    %284 = vmatpush1.bf16.xpose.msra.mxu0 0
    %285 = vmatprep.subr.bf16.mxu0 0
    %286 = vmatpush1.bf16.xpose.msra.mxu0 0
    %287 = vmatprep.subr.bf16.mxu0 0
    %288 = vmatpush1.bf16.xpose.msra.mxu0 0
    %289 = vmatprep.subr.bf16.mxu0 0
    %290 = vmatpush1.bf16.xpose.msra.mxu0 0
    %291 = vmatprep.subr.bf16.mxu0 0
    %292 = vmatpush1.bf16.xpose.msra.mxu0 0
    %293 = vmatprep.mubr.bf16.mxu0 0
    %294 = vmatmul.mubr.bf16.gmra.mrb[0].mxu0 %v253
    %v295 = vpop.f32.mrb[0].mxu0
    %v296 = vadd.f32 0.0, %v295
    %v297 = vpop.f32.mrb[0].mxu0
    %v298 = vpop.f32.mrb[0].mxu0
    %v299 = vadd.f32 0.0, %v298
    %v300 = vpop.f32.mrb[0].mxu0
    %301 = vmatprep.mubr.bf16.mxu0 0
    %302 = vmatmul.mubr.bf16.gmra.mrb[0].mxu0 %v256
    %v303 = vpop.f32.mrb[0].mxu0
    %v304 = vadd.f32 0.0, %v303
    %v305 = vpop.f32.mrb[0].mxu0
    %v306 = vpop.f32.mrb[0].mxu0
    %v307 = vadd.f32 0.0, %v306
    %v308 = vpop.f32.mrb[0].mxu0
    %309 = vmatprep.mubr.bf16.mxu0 0
    %310 = vmatmul.mubr.bf16.gmra.mrb[0].mxu0 %v259
    %v311 = vpop.f32.mrb[0].mxu0
    %v312 = vadd.f32 0.0, %v311
    %v313 = vpop.f32.mrb[0].mxu0
    %v314 = vpop.f32.mrb[0].mxu0
    %v315 = vpop.f32.mrb[0].mxu0
    %316 = vdwg.mxu0
    %v322 = vunpack.c.l.b16 %v90
    %v323 = vunpack.c.l.b16 %v91
    %v324 = vunpack.c.l.b16 %v92
    %v325 = vunpack.c.l.b16 %v93
    %v326 = vunpack.c.l.b16 %v94
    %v327 = vpack.c.b16 %v323, %v322
    %v328 = vpack.c.b16 %v325, %v324
    %v329 = vpack.c.b16 %v326, %v326
    %v331 = vsel %vm173, %v327, 0
    %v334 = vsel %vm173, %v328, 0
    %v337 = vsel %vm173, %v329, 0
    %339 = vmatprep.subr.bf16.mxu0 0
    %340 = vmatpush1.bf16.xpose.msra.mxu0 %v331
    %341 = vmatprep.subr.bf16.mxu0 0
    %342 = vmatpush1.bf16.xpose.msra.mxu0 %v334
    %343 = vmatprep.subr.bf16.mxu0 0
    %344 = vmatpush1.bf16.xpose.msra.mxu0 %v337
    %345 = vmatprep.subr.bf16.mxu0 0
    %346 = vmatpush1.bf16.xpose.msra.mxu0 0
    %347 = vmatprep.subr.bf16.mxu0 0
    %348 = vmatpush1.bf16.xpose.msra.mxu0 0
    %349 = vmatprep.subr.bf16.mxu0 0
    %350 = vmatpush1.bf16.xpose.msra.mxu0 0
    %351 = vmatprep.subr.bf16.mxu0 0
    %352 = vmatpush1.bf16.xpose.msra.mxu0 0
    %353 = vmatprep.subr.bf16.mxu0 0
    %354 = vmatpush1.bf16.xpose.msra.mxu0 0
    %355 = vmatprep.subr.bf16.mxu0 0
    %356 = vmatpush1.bf16.xpose.msra.mxu0 0
    %357 = vmatprep.subr.bf16.mxu0 0
    %358 = vmatpush1.bf16.xpose.msra.mxu0 0
    %359 = vmatprep.subr.bf16.mxu0 0
    %360 = vmatpush1.bf16.xpose.msra.mxu0 0
    %361 = vmatprep.subr.bf16.mxu0 0
    %362 = vmatpush1.bf16.xpose.msra.mxu0 0
    %363 = vmatprep.subr.bf16.mxu0 0
    %364 = vmatpush1.bf16.xpose.msra.mxu0 0
    %365 = vmatprep.subr.bf16.mxu0 0
    %366 = vmatpush1.bf16.xpose.msra.mxu0 0
    %367 = vmatprep.subr.bf16.mxu0 0
    %368 = vmatpush1.bf16.xpose.msra.mxu0 0
    %369 = vmatprep.subr.bf16.mxu0 0
    %370 = vmatpush1.bf16.xpose.msra.mxu0 0
    %371 = vmatprep.mubr.bf16.mxu0 0
    %372 = vmatmul.mubr.bf16.gmra.mrb[0].mxu0 %v331
    %v373 = vpop.f32.mrb[0].mxu0
    %v374 = vadd.f32 0.0, %v373
    %v375 = vpop.f32.mrb[0].mxu0
    %v376 = vpop.f32.mrb[0].mxu0
    %v377 = vadd.f32 0.0, %v376
    %v378 = vpop.f32.mrb[0].mxu0
    %379 = vmatprep.mubr.bf16.mxu0 0
    %380 = vmatmul.mubr.bf16.gmra.mrb[0].mxu0 %v334
    %v381 = vpop.f32.mrb[0].mxu0
    %v382 = vadd.f32 0.0, %v381
    %v383 = vpop.f32.mrb[0].mxu0
    %v384 = vpop.f32.mrb[0].mxu0
    %v385 = vadd.f32 0.0, %v384
    %v386 = vpop.f32.mrb[0].mxu0
    %387 = vmatprep.mubr.bf16.mxu0 0
    %388 = vmatmul.mubr.bf16.gmra.mrb[0].mxu0 %v337
    %v389 = vpop.f32.mrb[0].mxu0
    %v390 = vadd.f32 0.0, %v389
    %v391 = vpop.f32.mrb[0].mxu0
    %v392 = vpop.f32.mrb[0].mxu0
    %v393 = vpop.f32.mrb[0].mxu0
    %394 = vdwg.mxu0
    %v400 = vunpack.c.l.b16 %v95
    %v401 = vunpack.c.l.b16 %v96
    %v402 = vunpack.c.l.b16 %v97
    %v403 = vunpack.c.l.b16 %v98
    %v404 = vunpack.c.l.b16 %v99
    %v405 = vpack.c.b16 %v401, %v400
    %v406 = vpack.c.b16 %v403, %v402
    %v407 = vpack.c.b16 %v404, %v404
    %v409 = vsel %vm173, %v405, 0
    %v412 = vsel %vm173, %v406, 0
    %v415 = vsel %vm173, %v407, 0
    %417 = vmatprep.subr.bf16.mxu0 0
    %418 = vmatpush1.bf16.xpose.msra.mxu0 %v409
    %419 = vmatprep.subr.bf16.mxu0 0
    %420 = vmatpush1.bf16.xpose.msra.mxu0 %v412
    %421 = vmatprep.subr.bf16.mxu0 0
    %422 = vmatpush1.bf16.xpose.msra.mxu0 %v415
    %423 = vmatprep.subr.bf16.mxu0 0
    %424 = vmatpush1.bf16.xpose.msra.mxu0 0
    %425 = vmatprep.subr.bf16.mxu0 0
    %426 = vmatpush1.bf16.xpose.msra.mxu0 0
    %427 = vmatprep.subr.bf16.mxu0 0
    %428 = vmatpush1.bf16.xpose.msra.mxu0 0
    %429 = vmatprep.subr.bf16.mxu0 0
    %430 = vmatpush1.bf16.xpose.msra.mxu0 0
    %431 = vmatprep.subr.bf16.mxu0 0
    %432 = vmatpush1.bf16.xpose.msra.mxu0 0
    %433 = vmatprep.subr.bf16.mxu0 0
    %434 = vmatpush1.bf16.xpose.msra.mxu0 0
    %435 = vmatprep.subr.bf16.mxu0 0
    %436 = vmatpush1.bf16.xpose.msra.mxu0 0
    %437 = vmatprep.subr.bf16.mxu0 0
    %438 = vmatpush1.bf16.xpose.msra.mxu0 0
    %439 = vmatprep.subr.bf16.mxu0 0
    %440 = vmatpush1.bf16.xpose.msra.mxu0 0
    %441 = vmatprep.subr.bf16.mxu0 0
    %442 = vmatpush1.bf16.xpose.msra.mxu0 0
    %443 = vmatprep.subr.bf16.mxu0 0
    %444 = vmatpush1.bf16.xpose.msra.mxu0 0
    %445 = vmatprep.subr.bf16.mxu0 0
    %446 = vmatpush1.bf16.xpose.msra.mxu0 0
    %447 = vmatprep.subr.bf16.mxu0 0
    %448 = vmatpush1.bf16.xpose.msra.mxu0 0
    %449 = vmatprep.mubr.bf16.mxu0 0
    %450 = vmatmul.mubr.bf16.gmra.mrb[0].mxu0 %v409
    %v451 = vpop.f32.mrb[0].mxu0
    %v452 = vadd.f32 0.0, %v451
    %v453 = vpop.f32.mrb[0].mxu0
    %v454 = vpop.f32.mrb[0].mxu0
    %v455 = vadd.f32 0.0, %v454
    %v456 = vpop.f32.mrb[0].mxu0
    %457 = vmatprep.mubr.bf16.mxu0 0
    %458 = vmatmul.mubr.bf16.gmra.mrb[0].mxu0 %v412
    %v459 = vpop.f32.mrb[0].mxu0
    %v460 = vadd.f32 0.0, %v459
    %v461 = vpop.f32.mrb[0].mxu0
    %v462 = vpop.f32.mrb[0].mxu0
    %v463 = vadd.f32 0.0, %v462
    %v464 = vpop.f32.mrb[0].mxu0
    %465 = vmatprep.mubr.bf16.mxu0 0
    %466 = vmatmul.mubr.bf16.gmra.mrb[0].mxu0 %v415
    %v467 = vpop.f32.mrb[0].mxu0
    %v468 = vadd.f32 0.0, %v467
    %v469 = vpop.f32.mrb[0].mxu0
    %v470 = vpop.f32.mrb[0].mxu0
    %v471 = vpop.f32.mrb[0].mxu0
    %472 = vdwg.mxu0
    %v478 = vunpack.c.l.b16 %v100
    %v479 = vunpack.c.l.b16 %v101
    %v480 = vunpack.c.l.b16 %v102
    %v481 = vunpack.c.l.b16 %v103
    %v482 = vunpack.c.l.b16 %v104
    %v483 = vpack.c.b16 %v479, %v478
    %v484 = vpack.c.b16 %v481, %v480
    %v485 = vpack.c.b16 %v482, %v482
    %v487 = vsel %vm173, %v483, 0
    %v490 = vsel %vm173, %v484, 0
    %v493 = vsel %vm173, %v485, 0
    %495 = vmatprep.subr.bf16.mxu0 0
    %496 = vmatpush1.bf16.xpose.msra.mxu0 %v487
    %497 = vmatprep.subr.bf16.mxu0 0
    %498 = vmatpush1.bf16.xpose.msra.mxu0 %v490
    %499 = vmatprep.subr.bf16.mxu0 0
    %500 = vmatpush1.bf16.xpose.msra.mxu0 %v493
    %501 = vmatprep.subr.bf16.mxu0 0
    %502 = vmatpush1.bf16.xpose.msra.mxu0 0
    %503 = vmatprep.subr.bf16.mxu0 0
    %504 = vmatpush1.bf16.xpose.msra.mxu0 0
    %505 = vmatprep.subr.bf16.mxu0 0
    %506 = vmatpush1.bf16.xpose.msra.mxu0 0
    %507 = vmatprep.subr.bf16.mxu0 0
    %508 = vmatpush1.bf16.xpose.msra.mxu0 0
    %509 = vmatprep.subr.bf16.mxu0 0
    %510 = vmatpush1.bf16.xpose.msra.mxu0 0
    %511 = vmatprep.subr.bf16.mxu0 0
    %512 = vmatpush1.bf16.xpose.msra.mxu0 0
    %513 = vmatprep.subr.bf16.mxu0 0
    %514 = vmatpush1.bf16.xpose.msra.mxu0 0
    %515 = vmatprep.subr.bf16.mxu0 0
    %516 = vmatpush1.bf16.xpose.msra.mxu0 0
    %517 = vmatprep.subr.bf16.mxu0 0
    %518 = vmatpush1.bf16.xpose.msra.mxu0 0
    %519 = vmatprep.subr.bf16.mxu0 0
    %520 = vmatpush1.bf16.xpose.msra.mxu0 0
    %521 = vmatprep.subr.bf16.mxu0 0
    %522 = vmatpush1.bf16.xpose.msra.mxu0 0
    %523 = vmatprep.subr.bf16.mxu0 0
    %524 = vmatpush1.bf16.xpose.msra.mxu0 0
    %525 = vmatprep.subr.bf16.mxu0 0
    %526 = vmatpush1.bf16.xpose.msra.mxu0 0
    %527 = vmatprep.mubr.bf16.mxu0 0
    %528 = vmatmul.mubr.bf16.gmra.mrb[0].mxu0 %v487
    %v529 = vpop.f32.mrb[0].mxu0
    %v530 = vadd.f32 0.0, %v529
    %v531 = vpop.f32.mrb[0].mxu0
    %v532 = vpop.f32.mrb[0].mxu0
    %v533 = vadd.f32 0.0, %v532
    %v534 = vpop.f32.mrb[0].mxu0
    %535 = vmatprep.mubr.bf16.mxu0 0
    %536 = vmatmul.mubr.bf16.gmra.mrb[0].mxu0 %v490
    %v537 = vpop.f32.mrb[0].mxu0
    %v538 = vadd.f32 0.0, %v537
    %v539 = vpop.f32.mrb[0].mxu0
    %v540 = vpop.f32.mrb[0].mxu0
    %v541 = vadd.f32 0.0, %v540
    %v542 = vpop.f32.mrb[0].mxu0
    %543 = vmatprep.mubr.bf16.mxu0 0
    %544 = vmatmul.mubr.bf16.gmra.mrb[0].mxu0 %v493
    %v545 = vpop.f32.mrb[0].mxu0
    %v546 = vadd.f32 0.0, %v545
    %v547 = vpop.f32.mrb[0].mxu0
    %v548 = vpop.f32.mrb[0].mxu0
    %v549 = vpop.f32.mrb[0].mxu0
    %550 = vdwg.mxu0
    %v556 = vunpack.c.l.b16 %v105
    %v557 = vunpack.c.l.b16 %v106
    %v558 = vunpack.c.l.b16 %v107
    %v559 = vunpack.c.l.b16 %v108
    %v560 = vunpack.c.l.b16 %v109
    %v561 = vpack.c.b16 %v557, %v556
    %v562 = vpack.c.b16 %v559, %v558
    %v563 = vpack.c.b16 %v560, %v560
    %v565 = vsel %vm173, %v561, 0
    %v568 = vsel %vm173, %v562, 0
    %v571 = vsel %vm173, %v563, 0
    %573 = vmatprep.subr.bf16.mxu0 0
    %574 = vmatpush1.bf16.xpose.msra.mxu0 %v565
    %575 = vmatprep.subr.bf16.mxu0 0
    %576 = vmatpush1.bf16.xpose.msra.mxu0 %v568
    %577 = vmatprep.subr.bf16.mxu0 0
    %578 = vmatpush1.bf16.xpose.msra.mxu0 %v571
    %579 = vmatprep.subr.bf16.mxu0 0
    %580 = vmatpush1.bf16.xpose.msra.mxu0 0
    %581 = vmatprep.subr.bf16.mxu0 0
    %582 = vmatpush1.bf16.xpose.msra.mxu0 0
    %583 = vmatprep.subr.bf16.mxu0 0
    %584 = vmatpush1.bf16.xpose.msra.mxu0 0
    %585 = vmatprep.subr.bf16.mxu0 0
    %586 = vmatpush1.bf16.xpose.msra.mxu0 0
    %587 = vmatprep.subr.bf16.mxu0 0
    %588 = vmatpush1.bf16.xpose.msra.mxu0 0
    %589 = vmatprep.subr.bf16.mxu0 0
    %590 = vmatpush1.bf16.xpose.msra.mxu0 0
    %591 = vmatprep.subr.bf16.mxu0 0
    %592 = vmatpush1.bf16.xpose.msra.mxu0 0
    %593 = vmatprep.subr.bf16.mxu0 0
    %594 = vmatpush1.bf16.xpose.msra.mxu0 0
    %595 = vmatprep.subr.bf16.mxu0 0
    %596 = vmatpush1.bf16.xpose.msra.mxu0 0
    %597 = vmatprep.subr.bf16.mxu0 0
    %598 = vmatpush1.bf16.xpose.msra.mxu0 0
    %599 = vmatprep.subr.bf16.mxu0 0
    %600 = vmatpush1.bf16.xpose.msra.mxu0 0
    %601 = vmatprep.subr.bf16.mxu0 0
    %602 = vmatpush1.bf16.xpose.msra.mxu0 0
    %603 = vmatprep.subr.bf16.mxu0 0
    %604 = vmatpush1.bf16.xpose.msra.mxu0 0
    %605 = vmatprep.mubr.bf16.mxu0 0
    %606 = vmatmul.mubr.bf16.gmra.mrb[0].mxu0 %v565
    %v607 = vpop.f32.mrb[0].mxu0
    %v608 = vadd.f32 0.0, %v607
    %v609 = vpop.f32.mrb[0].mxu0
    %v610 = vpop.f32.mrb[0].mxu0
    %v611 = vadd.f32 0.0, %v610
    %v612 = vpop.f32.mrb[0].mxu0
    %613 = vmatprep.mubr.bf16.mxu0 0
    %614 = vmatmul.mubr.bf16.gmra.mrb[0].mxu0 %v568
    %v615 = vpop.f32.mrb[0].mxu0
    %v616 = vadd.f32 0.0, %v615
    %v617 = vpop.f32.mrb[0].mxu0
    %v618 = vpop.f32.mrb[0].mxu0
    %v619 = vadd.f32 0.0, %v618
    %v620 = vpop.f32.mrb[0].mxu0
    %621 = vmatprep.mubr.bf16.mxu0 0
    %622 = vmatmul.mubr.bf16.gmra.mrb[0].mxu0 %v571
    %v623 = vpop.f32.mrb[0].mxu0
    %v624 = vadd.f32 0.0, %v623
    %v625 = vpop.f32.mrb[0].mxu0
    %v626 = vpop.f32.mrb[0].mxu0
    %v627 = vpop.f32.mrb[0].mxu0
    %628 = vdwg.mxu0
    %v634 = vunpack.c.l.b16 %v110
    %v635 = vunpack.c.l.b16 %v111
    %v636 = vunpack.c.l.b16 %v112
    %v637 = vunpack.c.l.b16 %v113
    %v638 = vunpack.c.l.b16 %v114
    %v639 = vpack.c.b16 %v635, %v634
    %v640 = vpack.c.b16 %v637, %v636
    %v641 = vpack.c.b16 %v638, %v638
    %v643 = vsel %vm173, %v639, 0
    %v646 = vsel %vm173, %v640, 0
    %v649 = vsel %vm173, %v641, 0
    %651 = vmatprep.subr.bf16.mxu0 0
    %652 = vmatpush1.bf16.xpose.msra.mxu0 %v643
    %653 = vmatprep.subr.bf16.mxu0 0
    %654 = vmatpush1.bf16.xpose.msra.mxu0 %v646
    %655 = vmatprep.subr.bf16.mxu0 0
    %656 = vmatpush1.bf16.xpose.msra.mxu0 %v649
    %657 = vmatprep.subr.bf16.mxu0 0
    %658 = vmatpush1.bf16.xpose.msra.mxu0 0
    %659 = vmatprep.subr.bf16.mxu0 0
    %660 = vmatpush1.bf16.xpose.msra.mxu0 0
    %661 = vmatprep.subr.bf16.mxu0 0
    %662 = vmatpush1.bf16.xpose.msra.mxu0 0
    %663 = vmatprep.subr.bf16.mxu0 0
    %664 = vmatpush1.bf16.xpose.msra.mxu0 0
    %665 = vmatprep.subr.bf16.mxu0 0
    %666 = vmatpush1.bf16.xpose.msra.mxu0 0
    %667 = vmatprep.subr.bf16.mxu0 0
    %668 = vmatpush1.bf16.xpose.msra.mxu0 0
    %669 = vmatprep.subr.bf16.mxu0 0
    %670 = vmatpush1.bf16.xpose.msra.mxu0 0
    %671 = vmatprep.subr.bf16.mxu0 0
    %672 = vmatpush1.bf16.xpose.msra.mxu0 0
    %673 = vmatprep.subr.bf16.mxu0 0
    %674 = vmatpush1.bf16.xpose.msra.mxu0 0
    %675 = vmatprep.subr.bf16.mxu0 0
    %676 = vmatpush1.bf16.xpose.msra.mxu0 0
    %677 = vmatprep.subr.bf16.mxu0 0
    %678 = vmatpush1.bf16.xpose.msra.mxu0 0
    %679 = vmatprep.subr.bf16.mxu0 0
    %680 = vmatpush1.bf16.xpose.msra.mxu0 0
    %681 = vmatprep.subr.bf16.mxu0 0
    %682 = vmatpush1.bf16.xpose.msra.mxu0 0
    %683 = vmatprep.mubr.bf16.mxu0 0
    %684 = vmatmul.mubr.bf16.gmra.mrb[0].mxu0 %v643
    %v685 = vpop.f32.mrb[0].mxu0
    %v686 = vadd.f32 0.0, %v685
    %v687 = vpop.f32.mrb[0].mxu0
    %v688 = vpop.f32.mrb[0].mxu0
    %v689 = vadd.f32 0.0, %v688
    %v690 = vpop.f32.mrb[0].mxu0
    %691 = vmatprep.mubr.bf16.mxu0 0
    %692 = vmatmul.mubr.bf16.gmra.mrb[0].mxu0 %v646
    %v693 = vpop.f32.mrb[0].mxu0
    %v694 = vadd.f32 0.0, %v693
    %v695 = vpop.f32.mrb[0].mxu0
    %v696 = vpop.f32.mrb[0].mxu0
    %v697 = vadd.f32 0.0, %v696
    %v698 = vpop.f32.mrb[0].mxu0
    %699 = vmatprep.mubr.bf16.mxu0 0
    %700 = vmatmul.mubr.bf16.gmra.mrb[0].mxu0 %v649
    %v701 = vpop.f32.mrb[0].mxu0
    %v702 = vadd.f32 0.0, %v701
    %v703 = vpop.f32.mrb[0].mxu0
    %v704 = vpop.f32.mrb[0].mxu0
    %v705 = vpop.f32.mrb[0].mxu0
    %706 = vdwg.mxu0
    %v712 = vunpack.c.l.b16 %v115
    %v713 = vunpack.c.l.b16 %v116
    %v714 = vunpack.c.l.b16 %v117
    %v715 = vunpack.c.l.b16 %v118
    %v716 = vunpack.c.l.b16 %v119
    %v717 = vpack.c.b16 %v713, %v712
    %v718 = vpack.c.b16 %v715, %v714
    %v719 = vpack.c.b16 %v716, %v716
    %v721 = vsel %vm173, %v717, 0
    %v724 = vsel %vm173, %v718, 0
    %v727 = vsel %vm173, %v719, 0
    %729 = vmatprep.subr.bf16.mxu0 0
    %730 = vmatpush1.bf16.xpose.msra.mxu0 %v721
    %731 = vmatprep.subr.bf16.mxu0 0
    %732 = vmatpush1.bf16.xpose.msra.mxu0 %v724
    %733 = vmatprep.subr.bf16.mxu0 0
    %734 = vmatpush1.bf16.xpose.msra.mxu0 %v727
    %735 = vmatprep.subr.bf16.mxu0 0
    %736 = vmatpush1.bf16.xpose.msra.mxu0 0
    %737 = vmatprep.subr.bf16.mxu0 0
    %738 = vmatpush1.bf16.xpose.msra.mxu0 0
    %739 = vmatprep.subr.bf16.mxu0 0
    %740 = vmatpush1.bf16.xpose.msra.mxu0 0
    %741 = vmatprep.subr.bf16.mxu0 0
    %742 = vmatpush1.bf16.xpose.msra.mxu0 0
    %743 = vmatprep.subr.bf16.mxu0 0
    %744 = vmatpush1.bf16.xpose.msra.mxu0 0
    %745 = vmatprep.subr.bf16.mxu0 0
    %746 = vmatpush1.bf16.xpose.msra.mxu0 0
    %747 = vmatprep.subr.bf16.mxu0 0
    %748 = vmatpush1.bf16.xpose.msra.mxu0 0
    %749 = vmatprep.subr.bf16.mxu0 0
    %750 = vmatpush1.bf16.xpose.msra.mxu0 0
    %751 = vmatprep.subr.bf16.mxu0 0
    %752 = vmatpush1.bf16.xpose.msra.mxu0 0
    %753 = vmatprep.subr.bf16.mxu0 0
    %754 = vmatpush1.bf16.xpose.msra.mxu0 0
    %755 = vmatprep.subr.bf16.mxu0 0
    %756 = vmatpush1.bf16.xpose.msra.mxu0 0
    %757 = vmatprep.subr.bf16.mxu0 0
    %758 = vmatpush1.bf16.xpose.msra.mxu0 0
    %759 = vmatprep.subr.bf16.mxu0 0
    %760 = vmatpush1.bf16.xpose.msra.mxu0 0
    %761 = vmatprep.mubr.bf16.mxu0 0
    %762 = vmatmul.mubr.bf16.gmra.mrb[0].mxu0 %v721
    %v763 = vpop.f32.mrb[0].mxu0
    %v764 = vadd.f32 0.0, %v763
    %v765 = vpop.f32.mrb[0].mxu0
    %v766 = vpop.f32.mrb[0].mxu0
    %v767 = vadd.f32 0.0, %v766
    %v768 = vpop.f32.mrb[0].mxu0
    %769 = vmatprep.mubr.bf16.mxu0 0
    %770 = vmatmul.mubr.bf16.gmra.mrb[0].mxu0 %v724
    %v771 = vpop.f32.mrb[0].mxu0
    %v772 = vadd.f32 0.0, %v771
    %v773 = vpop.f32.mrb[0].mxu0
    %v774 = vpop.f32.mrb[0].mxu0
    %v775 = vadd.f32 0.0, %v774
    %v776 = vpop.f32.mrb[0].mxu0
    %777 = vmatprep.mubr.bf16.mxu0 0
    %778 = vmatmul.mubr.bf16.gmra.mrb[0].mxu0 %v727
    %v779 = vpop.f32.mrb[0].mxu0
    %v780 = vadd.f32 0.0, %v779
    %v781 = vpop.f32.mrb[0].mxu0
    %v782 = vpop.f32.mrb[0].mxu0
    %v783 = vpop.f32.mrb[0].mxu0
    %784 = vdwg.mxu0
    %v790 = vunpack.c.l.b16 %v120
    %v791 = vunpack.c.l.b16 %v121
    %v792 = vunpack.c.l.b16 %v122
    %v793 = vunpack.c.l.b16 %v123
    %v794 = vunpack.c.l.b16 %v124
    %v795 = vpack.c.b16 %v791, %v790
    %v796 = vpack.c.b16 %v793, %v792
    %v797 = vpack.c.b16 %v794, %v794
    %v799 = vsel %vm173, %v795, 0
    %v802 = vsel %vm173, %v796, 0
    %v805 = vsel %vm173, %v797, 0
    %807 = vmatprep.subr.bf16.mxu0 0
    %808 = vmatpush1.bf16.xpose.msra.mxu0 %v799
    %809 = vmatprep.subr.bf16.mxu0 0
    %810 = vmatpush1.bf16.xpose.msra.mxu0 %v802
    %811 = vmatprep.subr.bf16.mxu0 0
    %812 = vmatpush1.bf16.xpose.msra.mxu0 %v805
    %813 = vmatprep.subr.bf16.mxu0 0
    %814 = vmatpush1.bf16.xpose.msra.mxu0 0
    %815 = vmatprep.subr.bf16.mxu0 0
    %816 = vmatpush1.bf16.xpose.msra.mxu0 0
    %817 = vmatprep.subr.bf16.mxu0 0
    %818 = vmatpush1.bf16.xpose.msra.mxu0 0
    %819 = vmatprep.subr.bf16.mxu0 0
    %820 = vmatpush1.bf16.xpose.msra.mxu0 0
    %821 = vmatprep.subr.bf16.mxu0 0
    %822 = vmatpush1.bf16.xpose.msra.mxu0 0
    %823 = vmatprep.subr.bf16.mxu0 0
    %824 = vmatpush1.bf16.xpose.msra.mxu0 0
    %825 = vmatprep.subr.bf16.mxu0 0
    %826 = vmatpush1.bf16.xpose.msra.mxu0 0
    %827 = vmatprep.subr.bf16.mxu0 0
    %828 = vmatpush1.bf16.xpose.msra.mxu0 0
    %829 = vmatprep.subr.bf16.mxu0 0
    %830 = vmatpush1.bf16.xpose.msra.mxu0 0
    %831 = vmatprep.subr.bf16.mxu0 0
    %832 = vmatpush1.bf16.xpose.msra.mxu0 0
    %833 = vmatprep.subr.bf16.mxu0 0
    %834 = vmatpush1.bf16.xpose.msra.mxu0 0
    %835 = vmatprep.subr.bf16.mxu0 0
    %836 = vmatpush1.bf16.xpose.msra.mxu0 0
    %837 = vmatprep.subr.bf16.mxu0 0
    %838 = vmatpush1.bf16.xpose.msra.mxu0 0
    %839 = vmatprep.mubr.bf16.mxu0 0
    %840 = vmatmul.mubr.bf16.gmra.mrb[0].mxu0 %v799
    %v841 = vpop.f32.mrb[0].mxu0
    %v842 = vadd.f32 0.0, %v841
    %v843 = vpop.f32.mrb[0].mxu0
    %v844 = vpop.f32.mrb[0].mxu0
    %v845 = vadd.f32 0.0, %v844
    %v846 = vpop.f32.mrb[0].mxu0
    %847 = vmatprep.mubr.bf16.mxu0 0
    %848 = vmatmul.mubr.bf16.gmra.mrb[0].mxu0 %v802
    %v849 = vpop.f32.mrb[0].mxu0
    %v850 = vadd.f32 0.0, %v849
    %v851 = vpop.f32.mrb[0].mxu0
    %v852 = vpop.f32.mrb[0].mxu0
    %v853 = vadd.f32 0.0, %v852
    %v854 = vpop.f32.mrb[0].mxu0
    %855 = vmatprep.mubr.bf16.mxu0 0
    %856 = vmatmul.mubr.bf16.gmra.mrb[0].mxu0 %v805
    %v857 = vpop.f32.mrb[0].mxu0
    %v858 = vadd.f32 0.0, %v857
    %v859 = vpop.f32.mrb[0].mxu0
    %v860 = vpop.f32.mrb[0].mxu0
    %v861 = vpop.f32.mrb[0].mxu0
    %862 = vdwg.mxu0
    %v868 = vunpack.c.l.b16 %v125
    %v869 = vunpack.c.l.b16 %v126
    %v870 = vunpack.c.l.b16 %v127
    %v871 = vunpack.c.l.b16 %v128
    %v872 = vunpack.c.l.b16 %v129
    %v873 = vpack.c.b16 %v869, %v868
    %v874 = vpack.c.b16 %v871, %v870
    %v875 = vpack.c.b16 %v872, %v872
    %v877 = vsel %vm173, %v873, 0
    %v880 = vsel %vm173, %v874, 0
    %v883 = vsel %vm173, %v875, 0
    %885 = vmatprep.subr.bf16.mxu0 0
    %886 = vmatpush1.bf16.xpose.msra.mxu0 %v877
    %887 = vmatprep.subr.bf16.mxu0 0
    %888 = vmatpush1.bf16.xpose.msra.mxu0 %v880
    %889 = vmatprep.subr.bf16.mxu0 0
    %890 = vmatpush1.bf16.xpose.msra.mxu0 %v883
    %891 = vmatprep.subr.bf16.mxu0 0
    %892 = vmatpush1.bf16.xpose.msra.mxu0 0
    %893 = vmatprep.subr.bf16.mxu0 0
    %894 = vmatpush1.bf16.xpose.msra.mxu0 0
    %895 = vmatprep.subr.bf16.mxu0 0
    %896 = vmatpush1.bf16.xpose.msra.mxu0 0
    %897 = vmatprep.subr.bf16.mxu0 0
    %898 = vmatpush1.bf16.xpose.msra.mxu0 0
    %899 = vmatprep.subr.bf16.mxu0 0
    %900 = vmatpush1.bf16.xpose.msra.mxu0 0
    %901 = vmatprep.subr.bf16.mxu0 0
    %902 = vmatpush1.bf16.xpose.msra.mxu0 0
    %903 = vmatprep.subr.bf16.mxu0 0
    %904 = vmatpush1.bf16.xpose.msra.mxu0 0
    %905 = vmatprep.subr.bf16.mxu0 0
    %906 = vmatpush1.bf16.xpose.msra.mxu0 0
    %907 = vmatprep.subr.bf16.mxu0 0
    %908 = vmatpush1.bf16.xpose.msra.mxu0 0
    %909 = vmatprep.subr.bf16.mxu0 0
    %910 = vmatpush1.bf16.xpose.msra.mxu0 0
    %911 = vmatprep.subr.bf16.mxu0 0
    %912 = vmatpush1.bf16.xpose.msra.mxu0 0
    %913 = vmatprep.subr.bf16.mxu0 0
    %914 = vmatpush1.bf16.xpose.msra.mxu0 0
    %915 = vmatprep.subr.bf16.mxu0 0
    %916 = vmatpush1.bf16.xpose.msra.mxu0 0
    %917 = vmatprep.mubr.bf16.mxu0 0
    %918 = vmatmul.mubr.bf16.gmra.mrb[0].mxu0 %v877
    %v919 = vpop.f32.mrb[0].mxu0
    %v920 = vadd.f32 0.0, %v919
    %v921 = vpop.f32.mrb[0].mxu0
    %v922 = vpop.f32.mrb[0].mxu0
    %v923 = vadd.f32 0.0, %v922
    %v924 = vpop.f32.mrb[0].mxu0
    %925 = vmatprep.mubr.bf16.mxu0 0
    %926 = vmatmul.mubr.bf16.gmra.mrb[0].mxu0 %v880
    %v927 = vpop.f32.mrb[0].mxu0
    %v928 = vadd.f32 0.0, %v927
    %v929 = vpop.f32.mrb[0].mxu0
    %v930 = vpop.f32.mrb[0].mxu0
    %v931 = vadd.f32 0.0, %v930
    %v932 = vpop.f32.mrb[0].mxu0
    %933 = vmatprep.mubr.bf16.mxu0 0
    %934 = vmatmul.mubr.bf16.gmra.mrb[0].mxu0 %v883
    %v935 = vpop.f32.mrb[0].mxu0
    %v936 = vadd.f32 0.0, %v935
    %v937 = vpop.f32.mrb[0].mxu0
    %v938 = vpop.f32.mrb[0].mxu0
    %v939 = vpop.f32.mrb[0].mxu0
    %940 = vdwg.mxu0
    %v946 = vunpack.c.l.b16 %v130
    %v947 = vunpack.c.l.b16 %v131
    %v948 = vunpack.c.l.b16 %v132
    %v949 = vunpack.c.l.b16 %v133
    %v950 = vunpack.c.l.b16 %v134
    %v951 = vpack.c.b16 %v947, %v946
    %v952 = vpack.c.b16 %v949, %v948
    %v953 = vpack.c.b16 %v950, %v950
    %v955 = vsel %vm173, %v951, 0
    %v958 = vsel %vm173, %v952, 0
    %v961 = vsel %vm173, %v953, 0
    %963 = vmatprep.subr.bf16.mxu0 0
    %964 = vmatpush1.bf16.xpose.msra.mxu0 %v955
    %965 = vmatprep.subr.bf16.mxu0 0
    %966 = vmatpush1.bf16.xpose.msra.mxu0 %v958
    %967 = vmatprep.subr.bf16.mxu0 0
    %968 = vmatpush1.bf16.xpose.msra.mxu0 %v961
    %969 = vmatprep.subr.bf16.mxu0 0
    %970 = vmatpush1.bf16.xpose.msra.mxu0 0
    %971 = vmatprep.subr.bf16.mxu0 0
    %972 = vmatpush1.bf16.xpose.msra.mxu0 0
    %973 = vmatprep.subr.bf16.mxu0 0
    %974 = vmatpush1.bf16.xpose.msra.mxu0 0
    %975 = vmatprep.subr.bf16.mxu0 0
    %976 = vmatpush1.bf16.xpose.msra.mxu0 0
    %977 = vmatprep.subr.bf16.mxu0 0
    %978 = vmatpush1.bf16.xpose.msra.mxu0 0
    %979 = vmatprep.subr.bf16.mxu0 0
    %980 = vmatpush1.bf16.xpose.msra.mxu0 0
    %981 = vmatprep.subr.bf16.mxu0 0
    %982 = vmatpush1.bf16.xpose.msra.mxu0 0
    %983 = vmatprep.subr.bf16.mxu0 0
    %984 = vmatpush1.bf16.xpose.msra.mxu0 0
    %985 = vmatprep.subr.bf16.mxu0 0
    %986 = vmatpush1.bf16.xpose.msra.mxu0 0
    %987 = vmatprep.subr.bf16.mxu0 0
    %988 = vmatpush1.bf16.xpose.msra.mxu0 0
    %989 = vmatprep.subr.bf16.mxu0 0
    %990 = vmatpush1.bf16.xpose.msra.mxu0 0
    %991 = vmatprep.subr.bf16.mxu0 0
    %992 = vmatpush1.bf16.xpose.msra.mxu0 0
    %993 = vmatprep.subr.bf16.mxu0 0
    %994 = vmatpush1.bf16.xpose.msra.mxu0 0
    %995 = vmatprep.mubr.bf16.mxu0 0
    %996 = vmatmul.mubr.bf16.gmra.mrb[0].mxu0 %v955
    %v997 = vpop.f32.mrb[0].mxu0
    %v998 = vadd.f32 0.0, %v997
    %v999 = vpop.f32.mrb[0].mxu0
    %v1000 = vpop.f32.mrb[0].mxu0
    %v1001 = vadd.f32 0.0, %v1000
    %v1002 = vpop.f32.mrb[0].mxu0
    %1003 = vmatprep.mubr.bf16.mxu0 0
    %1004 = vmatmul.mubr.bf16.gmra.mrb[0].mxu0 %v958
    %v1005 = vpop.f32.mrb[0].mxu0
    %v1006 = vadd.f32 0.0, %v1005
    %v1007 = vpop.f32.mrb[0].mxu0
    %v1008 = vpop.f32.mrb[0].mxu0
    %v1009 = vadd.f32 0.0, %v1008
    %v1010 = vpop.f32.mrb[0].mxu0
    %1011 = vmatprep.mubr.bf16.mxu0 0
    %1012 = vmatmul.mubr.bf16.gmra.mrb[0].mxu0 %v961
    %v1013 = vpop.f32.mrb[0].mxu0
    %v1014 = vadd.f32 0.0, %v1013
    %v1015 = vpop.f32.mrb[0].mxu0
    %v1016 = vpop.f32.mrb[0].mxu0
    %v1017 = vpop.f32.mrb[0].mxu0
    %1018 = vdwg.mxu0
    %v1024 = vunpack.c.l.b16 %v135
    %v1025 = vunpack.c.l.b16 %v136
    %v1026 = vunpack.c.l.b16 %v137
    %v1027 = vunpack.c.l.b16 %v138
    %v1028 = vunpack.c.l.b16 %v139
    %v1029 = vpack.c.b16 %v1025, %v1024
    %v1030 = vpack.c.b16 %v1027, %v1026
    %v1031 = vpack.c.b16 %v1028, %v1028
    %v1033 = vsel %vm173, %v1029, 0
    %v1036 = vsel %vm173, %v1030, 0
    %v1039 = vsel %vm173, %v1031, 0
    %1041 = vmatprep.subr.bf16.mxu0 0
    %1042 = vmatpush1.bf16.xpose.msra.mxu0 %v1033
    %1043 = vmatprep.subr.bf16.mxu0 0
    %1044 = vmatpush1.bf16.xpose.msra.mxu0 %v1036
    %1045 = vmatprep.subr.bf16.mxu0 0
    %1046 = vmatpush1.bf16.xpose.msra.mxu0 %v1039
    %1047 = vmatprep.subr.bf16.mxu0 0
    %1048 = vmatpush1.bf16.xpose.msra.mxu0 0
    %1049 = vmatprep.subr.bf16.mxu0 0
    %1050 = vmatpush1.bf16.xpose.msra.mxu0 0
    %1051 = vmatprep.subr.bf16.mxu0 0
    %1052 = vmatpush1.bf16.xpose.msra.mxu0 0
    %1053 = vmatprep.subr.bf16.mxu0 0
    %1054 = vmatpush1.bf16.xpose.msra.mxu0 0
    %1055 = vmatprep.subr.bf16.mxu0 0
    %1056 = vmatpush1.bf16.xpose.msra.mxu0 0
    %1057 = vmatprep.subr.bf16.mxu0 0
    %1058 = vmatpush1.bf16.xpose.msra.mxu0 0
    %1059 = vmatprep.subr.bf16.mxu0 0
    %1060 = vmatpush1.bf16.xpose.msra.mxu0 0
    %1061 = vmatprep.subr.bf16.mxu0 0
    %1062 = vmatpush1.bf16.xpose.msra.mxu0 0
    %1063 = vmatprep.subr.bf16.mxu0 0
    %1064 = vmatpush1.bf16.xpose.msra.mxu0 0
    %1065 = vmatprep.subr.bf16.mxu0 0
    %1066 = vmatpush1.bf16.xpose.msra.mxu0 0
    %1067 = vmatprep.subr.bf16.mxu0 0
    %1068 = vmatpush1.bf16.xpose.msra.mxu0 0
    %1069 = vmatprep.subr.bf16.mxu0 0
    %1070 = vmatpush1.bf16.xpose.msra.mxu0 0
    %1071 = vmatprep.subr.bf16.mxu0 0
    %1072 = vmatpush1.bf16.xpose.msra.mxu0 0
    %1073 = vmatprep.mubr.bf16.mxu0 0
    %1074 = vmatmul.mubr.bf16.gmra.mrb[0].mxu0 %v1033
    %v1075 = vpop.f32.mrb[0].mxu0
    %v1076 = vadd.f32 0.0, %v1075
    %v1077 = vpop.f32.mrb[0].mxu0
    %v1078 = vpop.f32.mrb[0].mxu0
    %v1079 = vadd.f32 0.0, %v1078
    %v1080 = vpop.f32.mrb[0].mxu0
    %1081 = vmatprep.mubr.bf16.mxu0 0
    %1082 = vmatmul.mubr.bf16.gmra.mrb[0].mxu0 %v1036
    %v1083 = vpop.f32.mrb[0].mxu0
    %v1084 = vadd.f32 0.0, %v1083
    %v1085 = vpop.f32.mrb[0].mxu0
    %v1086 = vpop.f32.mrb[0].mxu0
    %v1087 = vadd.f32 0.0, %v1086
    %v1088 = vpop.f32.mrb[0].mxu0
    %1089 = vmatprep.mubr.bf16.mxu0 0
    %1090 = vmatmul.mubr.bf16.gmra.mrb[0].mxu0 %v1039
    %v1091 = vpop.f32.mrb[0].mxu0
    %v1092 = vadd.f32 0.0, %v1091
    %v1093 = vpop.f32.mrb[0].mxu0
    %v1094 = vpop.f32.mrb[0].mxu0
    %v1095 = vpop.f32.mrb[0].mxu0
    %1096 = vdwg.mxu0
    %v1102 = vunpack.c.l.b16 %v140
    %v1103 = vunpack.c.l.b16 %v141
    %v1104 = vunpack.c.l.b16 %v142
    %v1105 = vunpack.c.l.b16 %v143
    %v1106 = vunpack.c.l.b16 %v144
    %v1107 = vpack.c.b16 %v1103, %v1102
    %v1108 = vpack.c.b16 %v1105, %v1104
    %v1109 = vpack.c.b16 %v1106, %v1106
    %v1111 = vsel %vm173, %v1107, 0
    %v1114 = vsel %vm173, %v1108, 0
    %v1117 = vsel %vm173, %v1109, 0
    %1119 = vmatprep.subr.bf16.mxu0 0
    %1120 = vmatpush1.bf16.xpose.msra.mxu0 %v1111
    %1121 = vmatprep.subr.bf16.mxu0 0
    %1122 = vmatpush1.bf16.xpose.msra.mxu0 %v1114
    %1123 = vmatprep.subr.bf16.mxu0 0
    %1124 = vmatpush1.bf16.xpose.msra.mxu0 %v1117
    %1125 = vmatprep.subr.bf16.mxu0 0
    %1126 = vmatpush1.bf16.xpose.msra.mxu0 0
    %1127 = vmatprep.subr.bf16.mxu0 0
    %1128 = vmatpush1.bf16.xpose.msra.mxu0 0
    %1129 = vmatprep.subr.bf16.mxu0 0
    %1130 = vmatpush1.bf16.xpose.msra.mxu0 0
    %1131 = vmatprep.subr.bf16.mxu0 0
    %1132 = vmatpush1.bf16.xpose.msra.mxu0 0
    %1133 = vmatprep.subr.bf16.mxu0 0
    %1134 = vmatpush1.bf16.xpose.msra.mxu0 0
    %1135 = vmatprep.subr.bf16.mxu0 0
    %1136 = vmatpush1.bf16.xpose.msra.mxu0 0
    %1137 = vmatprep.subr.bf16.mxu0 0
    %1138 = vmatpush1.bf16.xpose.msra.mxu0 0
    %1139 = vmatprep.subr.bf16.mxu0 0
    %1140 = vmatpush1.bf16.xpose.msra.mxu0 0
    %1141 = vmatprep.subr.bf16.mxu0 0
    %1142 = vmatpush1.bf16.xpose.msra.mxu0 0
    %1143 = vmatprep.subr.bf16.mxu0 0
    %1144 = vmatpush1.bf16.xpose.msra.mxu0 0
    %1145 = vmatprep.subr.bf16.mxu0 0
    %1146 = vmatpush1.bf16.xpose.msra.mxu0 0
    %1147 = vmatprep.subr.bf16.mxu0 0
    %1148 = vmatpush1.bf16.xpose.msra.mxu0 0
    %1149 = vmatprep.subr.bf16.mxu0 0
    %1150 = vmatpush1.bf16.xpose.msra.mxu0 0
    %1151 = vmatprep.mubr.bf16.mxu0 0
    %1152 = vmatmul.mubr.bf16.gmra.mrb[0].mxu0 %v1111
    %v1153 = vpop.f32.mrb[0].mxu0
    %v1154 = vadd.f32 0.0, %v1153
    %v1155 = vpop.f32.mrb[0].mxu0
    %v1156 = vpop.f32.mrb[0].mxu0
    %v1157 = vadd.f32 0.0, %v1156
    %v1158 = vpop.f32.mrb[0].mxu0
    %1159 = vmatprep.mubr.bf16.mxu0 0
    %1160 = vmatmul.mubr.bf16.gmra.mrb[0].mxu0 %v1114
    %v1161 = vpop.f32.mrb[0].mxu0
    %v1162 = vadd.f32 0.0, %v1161
    %v1163 = vpop.f32.mrb[0].mxu0
    %v1164 = vpop.f32.mrb[0].mxu0
    %v1165 = vadd.f32 0.0, %v1164
    %v1166 = vpop.f32.mrb[0].mxu0
    %1167 = vmatprep.mubr.bf16.mxu0 0
    %1168 = vmatmul.mubr.bf16.gmra.mrb[0].mxu0 %v1117
    %v1169 = vpop.f32.mrb[0].mxu0
    %v1170 = vadd.f32 0.0, %v1169
    %v1171 = vpop.f32.mrb[0].mxu0
    %v1172 = vpop.f32.mrb[0].mxu0
    %v1173 = vpop.f32.mrb[0].mxu0
    %1174 = vdwg.mxu0
    %v1180 = vunpack.c.l.b16 %v145
    %v1181 = vunpack.c.l.b16 %v146
    %v1182 = vunpack.c.l.b16 %v147
    %v1183 = vunpack.c.l.b16 %v148
    %v1184 = vunpack.c.l.b16 %v149
    %v1185 = vpack.c.b16 %v1181, %v1180
    %v1186 = vpack.c.b16 %v1183, %v1182
    %v1187 = vpack.c.b16 %v1184, %v1184
    %v1189 = vsel %vm173, %v1185, 0
    %v1192 = vsel %vm173, %v1186, 0
    %v1195 = vsel %vm173, %v1187, 0
    %1197 = vmatprep.subr.bf16.mxu0 0
    %1198 = vmatpush1.bf16.xpose.msra.mxu0 %v1189
    %1199 = vmatprep.subr.bf16.mxu0 0
    %1200 = vmatpush1.bf16.xpose.msra.mxu0 %v1192
    %1201 = vmatprep.subr.bf16.mxu0 0
    %1202 = vmatpush1.bf16.xpose.msra.mxu0 %v1195
    %1203 = vmatprep.subr.bf16.mxu0 0
    %1204 = vmatpush1.bf16.xpose.msra.mxu0 0
    %1205 = vmatprep.subr.bf16.mxu0 0
    %1206 = vmatpush1.bf16.xpose.msra.mxu0 0
    %1207 = vmatprep.subr.bf16.mxu0 0
    %1208 = vmatpush1.bf16.xpose.msra.mxu0 0
    %1209 = vmatprep.subr.bf16.mxu0 0
    %1210 = vmatpush1.bf16.xpose.msra.mxu0 0
    %1211 = vmatprep.subr.bf16.mxu0 0
    %1212 = vmatpush1.bf16.xpose.msra.mxu0 0
    %1213 = vmatprep.subr.bf16.mxu0 0
    %1214 = vmatpush1.bf16.xpose.msra.mxu0 0
    %1215 = vmatprep.subr.bf16.mxu0 0
    %1216 = vmatpush1.bf16.xpose.msra.mxu0 0
    %1217 = vmatprep.subr.bf16.mxu0 0
    %1218 = vmatpush1.bf16.xpose.msra.mxu0 0
    %1219 = vmatprep.subr.bf16.mxu0 0
    %1220 = vmatpush1.bf16.xpose.msra.mxu0 0
    %1221 = vmatprep.subr.bf16.mxu0 0
    %1222 = vmatpush1.bf16.xpose.msra.mxu0 0
    %1223 = vmatprep.subr.bf16.mxu0 0
    %1224 = vmatpush1.bf16.xpose.msra.mxu0 0
    %1225 = vmatprep.subr.bf16.mxu0 0
    %1226 = vmatpush1.bf16.xpose.msra.mxu0 0
    %1227 = vmatprep.subr.bf16.mxu0 0
    %1228 = vmatpush1.bf16.xpose.msra.mxu0 0
    %1229 = vmatprep.mubr.bf16.mxu0 0
    %1230 = vmatmul.mubr.bf16.gmra.mrb[0].mxu0 %v1189
    %v1231 = vpop.f32.mrb[0].mxu0
    %v1232 = vadd.f32 0.0, %v1231
    %v1233 = vpop.f32.mrb[0].mxu0
    %v1234 = vpop.f32.mrb[0].mxu0
    %v1235 = vadd.f32 0.0, %v1234
    %v1236 = vpop.f32.mrb[0].mxu0
    %1237 = vmatprep.mubr.bf16.mxu0 0
    %1238 = vmatmul.mubr.bf16.gmra.mrb[0].mxu0 %v1192
    %v1239 = vpop.f32.mrb[0].mxu0
    %v1240 = vadd.f32 0.0, %v1239
    %v1241 = vpop.f32.mrb[0].mxu0
    %v1242 = vpop.f32.mrb[0].mxu0
    %v1243 = vadd.f32 0.0, %v1242
    %v1244 = vpop.f32.mrb[0].mxu0
    %1245 = vmatprep.mubr.bf16.mxu0 0
    %1246 = vmatmul.mubr.bf16.gmra.mrb[0].mxu0 %v1195
    %v1247 = vpop.f32.mrb[0].mxu0
    %v1248 = vadd.f32 0.0, %v1247
    %v1249 = vpop.f32.mrb[0].mxu0
    %v1250 = vpop.f32.mrb[0].mxu0
    %v1251 = vpop.f32.mrb[0].mxu0
    %1252 = vdwg.mxu0
    %v1258 = vunpack.c.l.b16 %v150
    %v1259 = vunpack.c.l.b16 %v151
    %v1260 = vunpack.c.l.b16 %v152
    %v1261 = vunpack.c.l.b16 %v153
    %v1262 = vunpack.c.l.b16 %v154
    %v1263 = vpack.c.b16 %v1259, %v1258
    %v1264 = vpack.c.b16 %v1261, %v1260
    %v1265 = vpack.c.b16 %v1262, %v1262
    %v1267 = vsel %vm173, %v1263, 0
    %v1270 = vsel %vm173, %v1264, 0
    %v1273 = vsel %vm173, %v1265, 0
    %1275 = vmatprep.subr.bf16.mxu0 0
    %1276 = vmatpush1.bf16.xpose.msra.mxu0 %v1267
    %1277 = vmatprep.subr.bf16.mxu0 0
    %1278 = vmatpush1.bf16.xpose.msra.mxu0 %v1270
    %1279 = vmatprep.subr.bf16.mxu0 0
    %1280 = vmatpush1.bf16.xpose.msra.mxu0 %v1273
    %1281 = vmatprep.subr.bf16.mxu0 0
    %1282 = vmatpush1.bf16.xpose.msra.mxu0 0
    %1283 = vmatprep.subr.bf16.mxu0 0
    %1284 = vmatpush1.bf16.xpose.msra.mxu0 0
    %1285 = vmatprep.subr.bf16.mxu0 0
    %1286 = vmatpush1.bf16.xpose.msra.mxu0 0
    %1287 = vmatprep.subr.bf16.mxu0 0
    %1288 = vmatpush1.bf16.xpose.msra.mxu0 0
    %1289 = vmatprep.subr.bf16.mxu0 0
    %1290 = vmatpush1.bf16.xpose.msra.mxu0 0
    %1291 = vmatprep.subr.bf16.mxu0 0
    %1292 = vmatpush1.bf16.xpose.msra.mxu0 0
    %1293 = vmatprep.subr.bf16.mxu0 0
    %1294 = vmatpush1.bf16.xpose.msra.mxu0 0
    %1295 = vmatprep.subr.bf16.mxu0 0
    %1296 = vmatpush1.bf16.xpose.msra.mxu0 0
    %1297 = vmatprep.subr.bf16.mxu0 0
    %1298 = vmatpush1.bf16.xpose.msra.mxu0 0
    %1299 = vmatprep.subr.bf16.mxu0 0
    %1300 = vmatpush1.bf16.xpose.msra.mxu0 0
    %1301 = vmatprep.subr.bf16.mxu0 0
    %1302 = vmatpush1.bf16.xpose.msra.mxu0 0
    %1303 = vmatprep.subr.bf16.mxu0 0
    %1304 = vmatpush1.bf16.xpose.msra.mxu0 0
    %1305 = vmatprep.subr.bf16.mxu0 0
    %1306 = vmatpush1.bf16.xpose.msra.mxu0 0
    %1307 = vmatprep.mubr.bf16.mxu0 0
    %1308 = vmatmul.mubr.bf16.gmra.mrb[0].mxu0 %v1267
    %v1309 = vpop.f32.mrb[0].mxu0
    %v1310 = vadd.f32 0.0, %v1309
    %v1311 = vpop.f32.mrb[0].mxu0
    %v1312 = vpop.f32.mrb[0].mxu0
    %v1313 = vadd.f32 0.0, %v1312
    %v1314 = vpop.f32.mrb[0].mxu0
    %1315 = vmatprep.mubr.bf16.mxu0 0
    %1316 = vmatmul.mubr.bf16.gmra.mrb[0].mxu0 %v1270
    %v1317 = vpop.f32.mrb[0].mxu0
    %v1318 = vadd.f32 0.0, %v1317
    %v1319 = vpop.f32.mrb[0].mxu0
    %v1320 = vpop.f32.mrb[0].mxu0
    %v1321 = vadd.f32 0.0, %v1320
    %v1322 = vpop.f32.mrb[0].mxu0
    %1323 = vmatprep.mubr.bf16.mxu0 0
    %1324 = vmatmul.mubr.bf16.gmra.mrb[0].mxu0 %v1273
    %v1325 = vpop.f32.mrb[0].mxu0
    %v1326 = vadd.f32 0.0, %v1325
    %v1327 = vpop.f32.mrb[0].mxu0
    %v1328 = vpop.f32.mrb[0].mxu0
    %v1329 = vpop.f32.mrb[0].mxu0
    %1330 = vdwg.mxu0
    %v1336 = vunpack.c.l.b16 %v155
    %v1337 = vunpack.c.l.b16 %v156
    %v1338 = vunpack.c.l.b16 %v157
    %v1339 = vunpack.c.l.b16 %v158
    %v1340 = vunpack.c.l.b16 %v159
    %v1341 = vpack.c.b16 %v1337, %v1336
    %v1342 = vpack.c.b16 %v1339, %v1338
    %v1343 = vpack.c.b16 %v1340, %v1340
    %v1345 = vsel %vm173, %v1341, 0
    %v1348 = vsel %vm173, %v1342, 0
    %v1351 = vsel %vm173, %v1343, 0
    %1353 = vmatprep.subr.bf16.mxu0 0
    %1354 = vmatpush1.bf16.xpose.msra.mxu0 %v1345
    %1355 = vmatprep.subr.bf16.mxu0 0
    %1356 = vmatpush1.bf16.xpose.msra.mxu0 %v1348
    %1357 = vmatprep.subr.bf16.mxu0 0
    %1358 = vmatpush1.bf16.xpose.msra.mxu0 %v1351
    %1359 = vmatprep.subr.bf16.mxu0 0
    %1360 = vmatpush1.bf16.xpose.msra.mxu0 0
    %1361 = vmatprep.subr.bf16.mxu0 0
    %1362 = vmatpush1.bf16.xpose.msra.mxu0 0
    %1363 = vmatprep.subr.bf16.mxu0 0
    %1364 = vmatpush1.bf16.xpose.msra.mxu0 0
    %1365 = vmatprep.subr.bf16.mxu0 0
    %1366 = vmatpush1.bf16.xpose.msra.mxu0 0
    %1367 = vmatprep.subr.bf16.mxu0 0
    %1368 = vmatpush1.bf16.xpose.msra.mxu0 0
    %1369 = vmatprep.subr.bf16.mxu0 0
    %1370 = vmatpush1.bf16.xpose.msra.mxu0 0
    %1371 = vmatprep.subr.bf16.mxu0 0
    %1372 = vmatpush1.bf16.xpose.msra.mxu0 0
    %1373 = vmatprep.subr.bf16.mxu0 0
    %1374 = vmatpush1.bf16.xpose.msra.mxu0 0
    %1375 = vmatprep.subr.bf16.mxu0 0
    %1376 = vmatpush1.bf16.xpose.msra.mxu0 0
    %1377 = vmatprep.subr.bf16.mxu0 0
    %1378 = vmatpush1.bf16.xpose.msra.mxu0 0
    %1379 = vmatprep.subr.bf16.mxu0 0
    %1380 = vmatpush1.bf16.xpose.msra.mxu0 0
    %1381 = vmatprep.subr.bf16.mxu0 0
    %1382 = vmatpush1.bf16.xpose.msra.mxu0 0
    %1383 = vmatprep.subr.bf16.mxu0 0
    %1384 = vmatpush1.bf16.xpose.msra.mxu0 0
    %1385 = vmatprep.mubr.bf16.mxu0 0
    %1386 = vmatmul.mubr.bf16.gmra.mrb[0].mxu0 %v1345
    %v1387 = vpop.f32.mrb[0].mxu0
    %v1388 = vadd.f32 0.0, %v1387
    %v1389 = vpop.f32.mrb[0].mxu0
    %v1390 = vpop.f32.mrb[0].mxu0
    %v1391 = vadd.f32 0.0, %v1390
    %v1392 = vpop.f32.mrb[0].mxu0
    %1393 = vmatprep.mubr.bf16.mxu0 0
    %1394 = vmatmul.mubr.bf16.gmra.mrb[0].mxu0 %v1348
    %v1395 = vpop.f32.mrb[0].mxu0
    %v1396 = vadd.f32 0.0, %v1395
    %v1397 = vpop.f32.mrb[0].mxu0
    %v1398 = vpop.f32.mrb[0].mxu0
    %v1399 = vadd.f32 0.0, %v1398
    %v1400 = vpop.f32.mrb[0].mxu0
    %1401 = vmatprep.mubr.bf16.mxu0 0
    %1402 = vmatmul.mubr.bf16.gmra.mrb[0].mxu0 %v1351
    %v1403 = vpop.f32.mrb[0].mxu0
    %v1404 = vadd.f32 0.0, %v1403
    %v1405 = vpop.f32.mrb[0].mxu0
    %v1406 = vpop.f32.mrb[0].mxu0
    %v1407 = vpop.f32.mrb[0].mxu0
    %1408 = vdwg.mxu0
    %v1409 = vlaneseq
    %v1410 = vand.u32 %v1409, 127
    %vm1411 = vcmp.eq.s32.totalorder %v1410, 32
    %v1412 = vld [vmem:[#allocation9] sm:$0xff]
    %v1413 = vld [vmem:[#allocation9 + $0x8] sm:$0xff]
    %s1414 = sld [smem:[#allocation2]]
    %s1415 = smul.f32 %s1414, 2.0
    %v1418 = vcombine.high %v1412, %v1412
    %v1420 = vunpack.c.l.s4 1966171168
    %v1421 = vunpack.c.0.s8 %v1420
    %v1422 = vlaneseq
    %v1423 = vshrl.u32 %v1422, 7
    %v1424 = vsub.s32 %v1421, %v1423
    %v1425 = vrot.slane %v1412, %v1424
    %v1427 = vunpack.c.l.s4 1966171168
    %v1428 = vunpack.c.0.s8 %v1427
    %v1429 = vlaneseq
    %v1430 = vshrl.u32 %v1429, 7
    %v1431 = vsub.s32 %v1428, %v1430
    %v1432 = vrot.slane %v1418, %v1431
    %v1433 = vcombine.high %v1425, %v1425
    %v1434 = vcombine.high %v1432, %v1432
    %v1436 = vunpack.c.l.s4 1966171168
    %v1437 = vunpack.c.0.s8 %v1436
    %v1438 = vlaneseq
    %v1439 = vshrl.u32 %v1438, 7
    %v1440 = vsub.s32 %v1437, %v1439
    %v1441 = vrot.slane %v1425, %v1440
    %v1443 = vunpack.c.l.s4 1966171168
    %v1444 = vunpack.c.0.s8 %v1443
    %v1445 = vlaneseq
    %v1446 = vshrl.u32 %v1445, 7
    %v1447 = vsub.s32 %v1444, %v1446
    %v1448 = vrot.slane %v1432, %v1447
    %v1450 = vunpack.c.l.s4 1966171168
    %v1451 = vunpack.c.0.s8 %v1450
    %v1452 = vlaneseq
    %v1453 = vshrl.u32 %v1452, 7
    %v1454 = vsub.s32 %v1451, %v1453
    %v1455 = vrot.slane %v1433, %v1454
    %v1457 = vunpack.c.l.s4 1966171168
    %v1458 = vunpack.c.0.s8 %v1457
    %v1459 = vlaneseq
    %v1460 = vshrl.u32 %v1459, 7
    %v1461 = vsub.s32 %v1458, %v1460
    %v1462 = vrot.slane %v1434, %v1461
    %v1463 = vcombine.high %v1441, %v1441
    %v1464 = vcombine.high %v1448, %v1448
    %v1465 = vcombine.high %v1455, %v1455
    %v1466 = vcombine.high %v1462, %v1462
    %v1467 = vcombine.high %v1413, %v1413
    %v1469 = vunpack.c.l.s4 1966171168
    %v1470 = vunpack.c.0.s8 %v1469
    %v1471 = vlaneseq
    %v1472 = vshrl.u32 %v1471, 7
    %v1473 = vsub.s32 %v1470, %v1472
    %v1474 = vrot.slane %v1413, %v1473
    %v1476 = vunpack.c.l.s4 1966171168
    %v1477 = vunpack.c.0.s8 %v1476
    %v1478 = vlaneseq
    %v1479 = vshrl.u32 %v1478, 7
    %v1480 = vsub.s32 %v1477, %v1479
    %v1481 = vrot.slane %v1467, %v1480
    %v1482 = vcombine.high %v1474, %v1474
    %v1483 = vcombine.high %v1481, %v1481
    %v1485 = vunpack.c.l.s4 1966171168
    %v1486 = vunpack.c.0.s8 %v1485
    %v1487 = vlaneseq
    %v1488 = vshrl.u32 %v1487, 7
    %v1489 = vsub.s32 %v1486, %v1488
    %v1490 = vrot.slane %v1474, %v1489
    %v1492 = vunpack.c.l.s4 1966171168
    %v1493 = vunpack.c.0.s8 %v1492
    %v1494 = vlaneseq
    %v1495 = vshrl.u32 %v1494, 7
    %v1496 = vsub.s32 %v1493, %v1495
    %v1497 = vrot.slane %v1481, %v1496
    %v1499 = vunpack.c.l.s4 1966171168
    %v1500 = vunpack.c.0.s8 %v1499
    %v1501 = vlaneseq
    %v1502 = vshrl.u32 %v1501, 7
    %v1503 = vsub.s32 %v1500, %v1502
    %v1504 = vrot.slane %v1482, %v1503
    %v1506 = vunpack.c.l.s4 1966171168
    %v1507 = vunpack.c.0.s8 %v1506
    %v1508 = vlaneseq
    %v1509 = vshrl.u32 %v1508, 7
    %v1510 = vsub.s32 %v1507, %v1509
    %v1511 = vrot.slane %v1483, %v1510
    %v1512 = vcombine.high %v1490, %v1490
    %v1513 = vcombine.high %v1497, %v1497
    %v1514 = vcombine.high %v1504, %v1504
    %v1515 = vcombine.high %v1511, %v1511
    %v1516 = vlaneseq
    %v1517 = vshrl.u32 %v1516, 7
    %v1518 = vsub.s32 0, %v1517
    %v1519 = vrot.slane %v1441, %v1518
    %v1520 = vlaneseq
    %v1521 = vshrl.u32 %v1520, 7
    %v1522 = vsub.s32 0, %v1521
    %v1523 = vrot.slane %v1455, %v1522
    %v1524 = vlaneseq
    %v1525 = vshrl.u32 %v1524, 7
    %v1526 = vsub.s32 0, %v1525
    %v1527 = vrot.slane %v1463, %v1526
    %v1528 = vlaneseq
    %v1529 = vshrl.u32 %v1528, 7
    %v1530 = vsub.s32 0, %v1529
    %v1531 = vrot.slane %v1465, %v1530
    %v1532 = vlaneseq
    %v1533 = vshrl.u32 %v1532, 7
    %v1534 = vsub.s32 0, %v1533
    %v1535 = vrot.slane %v1448, %v1534
    %v1536 = vlaneseq
    %v1537 = vshrl.u32 %v1536, 7
    %v1538 = vsub.s32 0, %v1537
    %v1539 = vrot.slane %v1462, %v1538
    %v1540 = vlaneseq
    %v1541 = vshrl.u32 %v1540, 7
    %v1542 = vsub.s32 0, %v1541
    %v1543 = vrot.slane %v1464, %v1542
    %v1544 = vlaneseq
    %v1545 = vshrl.u32 %v1544, 7
    %v1546 = vsub.s32 0, %v1545
    %v1547 = vrot.slane %v1466, %v1546
    %v1548 = vlaneseq
    %v1549 = vshrl.u32 %v1548, 7
    %v1550 = vsub.s32 0, %v1549
    %v1551 = vrot.slane %v1490, %v1550
    %v1552 = vlaneseq
    %v1553 = vshrl.u32 %v1552, 7
    %v1554 = vsub.s32 0, %v1553
    %v1555 = vrot.slane %v1504, %v1554
    %v1556 = vlaneseq
    %v1557 = vshrl.u32 %v1556, 7
    %v1558 = vsub.s32 0, %v1557
    %v1559 = vrot.slane %v1512, %v1558
    %v1560 = vlaneseq
    %v1561 = vshrl.u32 %v1560, 7
    %v1562 = vsub.s32 0, %v1561
    %v1563 = vrot.slane %v1514, %v1562
    %v1564 = vlaneseq
    %v1565 = vshrl.u32 %v1564, 7
    %v1566 = vsub.s32 0, %v1565
    %v1567 = vrot.slane %v1497, %v1566
    %v1568 = vlaneseq
    %v1569 = vshrl.u32 %v1568, 7
    %v1570 = vsub.s32 0, %v1569
    %v1571 = vrot.slane %v1511, %v1570
    %v1572 = vlaneseq
    %v1573 = vshrl.u32 %v1572, 7
    %v1574 = vsub.s32 0, %v1573
    %v1575 = vrot.slane %v1513, %v1574
    %v1576 = vlaneseq
    %v1577 = vshrl.u32 %v1576, 7
    %v1578 = vsub.s32 0, %v1577
    %v1579 = vrot.slane %v1515, %v1578
    %v1596 = vmul.f32 %v218, %v1519
    %v1597 = vmul.f32 %v221, %v1519
    %v1598 = vmul.f32 %v226, %v1519
    %v1599 = vmul.f32 %v229, %v1519
    %v1600 = vmul.f32 %v234, %v1519
    %v1601 = vmul.f32 %v296, %v1523
    %v1602 = vmul.f32 %v299, %v1523
    %v1603 = vmul.f32 %v304, %v1523
    %v1604 = vmul.f32 %v307, %v1523
    %v1605 = vmul.f32 %v312, %v1523
    %v1606 = vmul.f32 %v374, %v1527
    %v1607 = vmul.f32 %v377, %v1527
    %v1608 = vmul.f32 %v382, %v1527
    %v1609 = vmul.f32 %v385, %v1527
    %v1610 = vmul.f32 %v390, %v1527
    %v1611 = vmul.f32 %v452, %v1531
    %v1612 = vmul.f32 %v455, %v1531
    %v1613 = vmul.f32 %v460, %v1531
    %v1614 = vmul.f32 %v463, %v1531
    %v1615 = vmul.f32 %v468, %v1531
    %v1616 = vmul.f32 %v530, %v1535
    %v1617 = vmul.f32 %v533, %v1535
    %v1618 = vmul.f32 %v538, %v1535
    %v1619 = vmul.f32 %v541, %v1535
    %v1620 = vmul.f32 %v546, %v1535
    %v1621 = vmul.f32 %v608, %v1539
    %v1622 = vmul.f32 %v611, %v1539
    %v1623 = vmul.f32 %v616, %v1539
    %v1624 = vmul.f32 %v619, %v1539
    %v1625 = vmul.f32 %v624, %v1539
    %v1626 = vmul.f32 %v686, %v1543
    %v1627 = vmul.f32 %v689, %v1543
    %v1628 = vmul.f32 %v694, %v1543
    %v1629 = vmul.f32 %v697, %v1543
    %v1630 = vmul.f32 %v702, %v1543
    %v1631 = vmul.f32 %v764, %v1547
    %v1632 = vmul.f32 %v767, %v1547
    %v1633 = vmul.f32 %v772, %v1547
    %v1634 = vmul.f32 %v775, %v1547
    %v1635 = vmul.f32 %v780, %v1547
    %v1636 = vmul.f32 %v842, %v1551
    %v1637 = vmul.f32 %v845, %v1551
    %v1638 = vmul.f32 %v850, %v1551
    %v1639 = vmul.f32 %v853, %v1551
    %v1640 = vmul.f32 %v858, %v1551
    %v1641 = vmul.f32 %v920, %v1555
    %v1642 = vmul.f32 %v923, %v1555
    %v1643 = vmul.f32 %v928, %v1555
    %v1644 = vmul.f32 %v931, %v1555
    %v1645 = vmul.f32 %v936, %v1555
    %v1646 = vmul.f32 %v998, %v1559
    %v1647 = vmul.f32 %v1001, %v1559
    %v1648 = vmul.f32 %v1006, %v1559
    %v1649 = vmul.f32 %v1009, %v1559
    %v1650 = vmul.f32 %v1014, %v1559
    %v1651 = vmul.f32 %v1076, %v1563
    %v1652 = vmul.f32 %v1079, %v1563
    %v1653 = vmul.f32 %v1084, %v1563
    %v1654 = vmul.f32 %v1087, %v1563
    %v1655 = vmul.f32 %v1092, %v1563
    %v1656 = vmul.f32 %v1154, %v1567
    %v1657 = vmul.f32 %v1157, %v1567
    %v1658 = vmul.f32 %v1162, %v1567
    %v1659 = vmul.f32 %v1165, %v1567
    %v1660 = vmul.f32 %v1170, %v1567
    %v1661 = vmul.f32 %v1232, %v1571
    %v1662 = vmul.f32 %v1235, %v1571
    %v1663 = vmul.f32 %v1240, %v1571
    %v1664 = vmul.f32 %v1243, %v1571
    %v1665 = vmul.f32 %v1248, %v1571
    %v1666 = vmul.f32 %v1310, %v1575
    %v1667 = vmul.f32 %v1313, %v1575
    %v1668 = vmul.f32 %v1318, %v1575
    %v1669 = vmul.f32 %v1321, %v1575
    %v1670 = vmul.f32 %v1326, %v1575
    %v1671 = vmul.f32 %v1388, %v1579
    %v1672 = vmul.f32 %v1391, %v1579
    %v1673 = vmul.f32 %v1396, %v1579
    %v1674 = vmul.f32 %v1399, %v1579
    %v1675 = vmul.f32 %v1404, %v1579
    %vm1676 = vcmask 269312
    %v1677 = vsel %vm1676, %v1596, 0.0
    %1678 = vadd.xlane.f32.xlu0 %v1677
    %v1679 = vpop.xlane.xlu0 %1678
    %v1680 = vsel %vm1676, %v1597, 0.0
    %1681 = vadd.xlane.f32.xlu0 %v1680
    %v1682 = vpop.xlane.xlu0 %1681
    %v1683 = vsel %vm1676, %v1598, 0.0
    %1684 = vadd.xlane.f32.xlu0 %v1683
    %v1685 = vpop.xlane.xlu0 %1684
    %v1686 = vsel %vm1676, %v1599, 0.0
    %1687 = vadd.xlane.f32.xlu0 %v1686
    %v1688 = vpop.xlane.xlu0 %1687
    %vm1689 = vcmask 262144
    %v1690 = vsel %vm1689, %v1600, 0.0
    %1691 = vadd.xlane.f32.xlu0 %v1690
    %v1692 = vpop.xlane.xlu0 %1691
    %v1693 = vsel %vm1676, %v1601, 0.0
    %1694 = vadd.xlane.f32.xlu0 %v1693
    %v1695 = vpop.xlane.xlu0 %1694
    %v1696 = vsel %vm1676, %v1602, 0.0
    %1697 = vadd.xlane.f32.xlu0 %v1696
    %v1698 = vpop.xlane.xlu0 %1697
    %v1699 = vsel %vm1676, %v1603, 0.0
    %1700 = vadd.xlane.f32.xlu0 %v1699
    %v1701 = vpop.xlane.xlu0 %1700
    %v1702 = vsel %vm1676, %v1604, 0.0
    %1703 = vadd.xlane.f32.xlu0 %v1702
    %v1704 = vpop.xlane.xlu0 %1703
    %v1705 = vsel %vm1689, %v1605, 0.0
    %1706 = vadd.xlane.f32.xlu0 %v1705
    %v1707 = vpop.xlane.xlu0 %1706
    %v1708 = vsel %vm1676, %v1606, 0.0
    %1709 = vadd.xlane.f32.xlu0 %v1708
    %v1710 = vpop.xlane.xlu0 %1709
    %v1711 = vsel %vm1676, %v1607, 0.0
    %1712 = vadd.xlane.f32.xlu0 %v1711
    %v1713 = vpop.xlane.xlu0 %1712
    %v1714 = vsel %vm1676, %v1608, 0.0
    %1715 = vadd.xlane.f32.xlu0 %v1714
    %v1716 = vpop.xlane.xlu0 %1715
    %v1717 = vsel %vm1676, %v1609, 0.0
    %1718 = vadd.xlane.f32.xlu0 %v1717
    %v1719 = vpop.xlane.xlu0 %1718
    %v1720 = vsel %vm1689, %v1610, 0.0
    %1721 = vadd.xlane.f32.xlu0 %v1720
    %v1722 = vpop.xlane.xlu0 %1721
    %v1723 = vsel %vm1676, %v1611, 0.0
    %1724 = vadd.xlane.f32.xlu0 %v1723
    %v1725 = vpop.xlane.xlu0 %1724
    %v1726 = vsel %vm1676, %v1612, 0.0
    %1727 = vadd.xlane.f32.xlu0 %v1726
    %v1728 = vpop.xlane.xlu0 %1727
    %v1729 = vsel %vm1676, %v1613, 0.0
    %1730 = vadd.xlane.f32.xlu0 %v1729
    %v1731 = vpop.xlane.xlu0 %1730
    %v1732 = vsel %vm1676, %v1614, 0.0
    %1733 = vadd.xlane.f32.xlu0 %v1732
    %v1734 = vpop.xlane.xlu0 %1733
    %v1735 = vsel %vm1689, %v1615, 0.0
    %1736 = vadd.xlane.f32.xlu0 %v1735
    %v1737 = vpop.xlane.xlu0 %1736
    %v1738 = vsel %vm1676, %v1616, 0.0
    %1739 = vadd.xlane.f32.xlu0 %v1738
    %v1740 = vpop.xlane.xlu0 %1739
    %v1741 = vsel %vm1676, %v1617, 0.0
    %1742 = vadd.xlane.f32.xlu0 %v1741
    %v1743 = vpop.xlane.xlu0 %1742
    %v1744 = vsel %vm1676, %v1618, 0.0
    %1745 = vadd.xlane.f32.xlu0 %v1744
    %v1746 = vpop.xlane.xlu0 %1745
    %v1747 = vsel %vm1676, %v1619, 0.0
    %1748 = vadd.xlane.f32.xlu0 %v1747
    %v1749 = vpop.xlane.xlu0 %1748
    %v1750 = vsel %vm1689, %v1620, 0.0
    %1751 = vadd.xlane.f32.xlu0 %v1750
    %v1752 = vpop.xlane.xlu0 %1751
    %v1753 = vsel %vm1676, %v1621, 0.0
    %1754 = vadd.xlane.f32.xlu0 %v1753
    %v1755 = vpop.xlane.xlu0 %1754
    %v1756 = vsel %vm1676, %v1622, 0.0
    %1757 = vadd.xlane.f32.xlu0 %v1756
    %v1758 = vpop.xlane.xlu0 %1757
    %v1759 = vsel %vm1676, %v1623, 0.0
    %1760 = vadd.xlane.f32.xlu0 %v1759
    %v1761 = vpop.xlane.xlu0 %1760
    %v1762 = vsel %vm1676, %v1624, 0.0
    %1763 = vadd.xlane.f32.xlu0 %v1762
    %v1764 = vpop.xlane.xlu0 %1763
    %v1765 = vsel %vm1689, %v1625, 0.0
    %1766 = vadd.xlane.f32.xlu0 %v1765
    %v1767 = vpop.xlane.xlu0 %1766
    %v1768 = vsel %vm1676, %v1626, 0.0
    %1769 = vadd.xlane.f32.xlu0 %v1768
    %v1770 = vpop.xlane.xlu0 %1769
    %v1771 = vsel %vm1676, %v1627, 0.0
    %1772 = vadd.xlane.f32.xlu0 %v1771
    %v1773 = vpop.xlane.xlu0 %1772
    %v1774 = vsel %vm1676, %v1628, 0.0
    %1775 = vadd.xlane.f32.xlu0 %v1774
    %v1776 = vpop.xlane.xlu0 %1775
    %v1777 = vsel %vm1676, %v1629, 0.0
    %1778 = vadd.xlane.f32.xlu0 %v1777
    %v1779 = vpop.xlane.xlu0 %1778
    %v1780 = vsel %vm1689, %v1630, 0.0
    %1781 = vadd.xlane.f32.xlu0 %v1780
    %v1782 = vpop.xlane.xlu0 %1781
    %v1783 = vsel %vm1676, %v1631, 0.0
    %1784 = vadd.xlane.f32.xlu0 %v1783
    %v1785 = vpop.xlane.xlu0 %1784
    %v1786 = vsel %vm1676, %v1632, 0.0
    %1787 = vadd.xlane.f32.xlu0 %v1786
    %v1788 = vpop.xlane.xlu0 %1787
    %v1789 = vsel %vm1676, %v1633, 0.0
    %1790 = vadd.xlane.f32.xlu0 %v1789
    %v1791 = vpop.xlane.xlu0 %1790
    %v1792 = vsel %vm1676, %v1634, 0.0
    %1793 = vadd.xlane.f32.xlu0 %v1792
    %v1794 = vpop.xlane.xlu0 %1793
    %v1795 = vsel %vm1689, %v1635, 0.0
    %1796 = vadd.xlane.f32.xlu0 %v1795
    %v1797 = vpop.xlane.xlu0 %1796
    %v1798 = vsel %vm1676, %v1636, 0.0
    %1799 = vadd.xlane.f32.xlu0 %v1798
    %v1800 = vpop.xlane.xlu0 %1799
    %v1801 = vsel %vm1676, %v1637, 0.0
    %1802 = vadd.xlane.f32.xlu0 %v1801
    %v1803 = vpop.xlane.xlu0 %1802
    %v1804 = vsel %vm1676, %v1638, 0.0
    %1805 = vadd.xlane.f32.xlu0 %v1804
    %v1806 = vpop.xlane.xlu0 %1805
    %v1807 = vsel %vm1676, %v1639, 0.0
    %1808 = vadd.xlane.f32.xlu0 %v1807
    %v1809 = vpop.xlane.xlu0 %1808
    %v1810 = vsel %vm1689, %v1640, 0.0
    %1811 = vadd.xlane.f32.xlu0 %v1810
    %v1812 = vpop.xlane.xlu0 %1811
    %v1813 = vsel %vm1676, %v1641, 0.0
    %1814 = vadd.xlane.f32.xlu0 %v1813
    %v1815 = vpop.xlane.xlu0 %1814
    %v1816 = vsel %vm1676, %v1642, 0.0
    %1817 = vadd.xlane.f32.xlu0 %v1816
    %v1818 = vpop.xlane.xlu0 %1817
    %v1819 = vsel %vm1676, %v1643, 0.0
    %1820 = vadd.xlane.f32.xlu0 %v1819
    %v1821 = vpop.xlane.xlu0 %1820
    %v1822 = vsel %vm1676, %v1644, 0.0
    %1823 = vadd.xlane.f32.xlu0 %v1822
    %v1824 = vpop.xlane.xlu0 %1823
    %v1825 = vsel %vm1689, %v1645, 0.0
    %1826 = vadd.xlane.f32.xlu0 %v1825
    %v1827 = vpop.xlane.xlu0 %1826
    %v1828 = vsel %vm1676, %v1646, 0.0
    %1829 = vadd.xlane.f32.xlu0 %v1828
    %v1830 = vpop.xlane.xlu0 %1829
    %v1831 = vsel %vm1676, %v1647, 0.0
    %1832 = vadd.xlane.f32.xlu0 %v1831
    %v1833 = vpop.xlane.xlu0 %1832
    %v1834 = vsel %vm1676, %v1648, 0.0
    %1835 = vadd.xlane.f32.xlu0 %v1834
    %v1836 = vpop.xlane.xlu0 %1835
    %v1837 = vsel %vm1676, %v1649, 0.0
    %1838 = vadd.xlane.f32.xlu0 %v1837
    %v1839 = vpop.xlane.xlu0 %1838
    %v1840 = vsel %vm1689, %v1650, 0.0
    %1841 = vadd.xlane.f32.xlu0 %v1840
    %v1842 = vpop.xlane.xlu0 %1841
    %v1843 = vsel %vm1676, %v1651, 0.0
    %1844 = vadd.xlane.f32.xlu0 %v1843
    %v1845 = vpop.xlane.xlu0 %1844
    %v1846 = vsel %vm1676, %v1652, 0.0
    %1847 = vadd.xlane.f32.xlu0 %v1846
    %v1848 = vpop.xlane.xlu0 %1847
    %v1849 = vsel %vm1676, %v1653, 0.0
    %1850 = vadd.xlane.f32.xlu0 %v1849
    %v1851 = vpop.xlane.xlu0 %1850
    %v1852 = vsel %vm1676, %v1654, 0.0
    %1853 = vadd.xlane.f32.xlu0 %v1852
    %v1854 = vpop.xlane.xlu0 %1853
    %v1855 = vsel %vm1689, %v1655, 0.0
    %1856 = vadd.xlane.f32.xlu0 %v1855
    %v1857 = vpop.xlane.xlu0 %1856
    %v1858 = vsel %vm1676, %v1656, 0.0
    %1859 = vadd.xlane.f32.xlu0 %v1858
    %v1860 = vpop.xlane.xlu0 %1859
    %v1861 = vsel %vm1676, %v1657, 0.0
    %1862 = vadd.xlane.f32.xlu0 %v1861
    %v1863 = vpop.xlane.xlu0 %1862
    %v1864 = vsel %vm1676, %v1658, 0.0
    %1865 = vadd.xlane.f32.xlu0 %v1864
    %v1866 = vpop.xlane.xlu0 %1865
    %v1867 = vsel %vm1676, %v1659, 0.0
    %1868 = vadd.xlane.f32.xlu0 %v1867
    %v1869 = vpop.xlane.xlu0 %1868
    %v1870 = vsel %vm1689, %v1660, 0.0
    %1871 = vadd.xlane.f32.xlu0 %v1870
    %v1872 = vpop.xlane.xlu0 %1871
    %v1873 = vsel %vm1676, %v1661, 0.0
    %1874 = vadd.xlane.f32.xlu0 %v1873
    %v1875 = vpop.xlane.xlu0 %1874
    %v1876 = vsel %vm1676, %v1662, 0.0
    %1877 = vadd.xlane.f32.xlu0 %v1876
    %v1878 = vpop.xlane.xlu0 %1877
    %v1879 = vsel %vm1676, %v1663, 0.0
    %1880 = vadd.xlane.f32.xlu0 %v1879
    %v1881 = vpop.xlane.xlu0 %1880
    %v1882 = vsel %vm1676, %v1664, 0.0
    %1883 = vadd.xlane.f32.xlu0 %v1882
    %v1884 = vpop.xlane.xlu0 %1883
    %v1885 = vsel %vm1689, %v1665, 0.0
    %1886 = vadd.xlane.f32.xlu0 %v1885
    %v1887 = vpop.xlane.xlu0 %1886
    %v1888 = vsel %vm1676, %v1666, 0.0
    %1889 = vadd.xlane.f32.xlu0 %v1888
    %v1890 = vpop.xlane.xlu0 %1889
    %v1891 = vsel %vm1676, %v1667, 0.0
    %1892 = vadd.xlane.f32.xlu0 %v1891
    %v1893 = vpop.xlane.xlu0 %1892
    %v1894 = vsel %vm1676, %v1668, 0.0
    %1895 = vadd.xlane.f32.xlu0 %v1894
    %v1896 = vpop.xlane.xlu0 %1895
    %v1897 = vsel %vm1676, %v1669, 0.0
    %1898 = vadd.xlane.f32.xlu0 %v1897
    %v1899 = vpop.xlane.xlu0 %1898
    %v1900 = vsel %vm1689, %v1670, 0.0
    %1901 = vadd.xlane.f32.xlu0 %v1900
    %v1902 = vpop.xlane.xlu0 %1901
    %v1903 = vsel %vm1676, %v1671, 0.0
    %1904 = vadd.xlane.f32.xlu0 %v1903
    %v1905 = vpop.xlane.xlu0 %1904
    %v1906 = vsel %vm1676, %v1672, 0.0
    %1907 = vadd.xlane.f32.xlu0 %v1906
    %v1908 = vpop.xlane.xlu0 %1907
    %v1909 = vsel %vm1676, %v1673, 0.0
    %1910 = vadd.xlane.f32.xlu0 %v1909
    %v1911 = vpop.xlane.xlu0 %1910
    %v1912 = vsel %vm1676, %v1674, 0.0
    %1913 = vadd.xlane.f32.xlu0 %v1912
    %v1914 = vpop.xlane.xlu0 %1913
    %v1915 = vsel %vm1689, %v1675, 0.0
    %1916 = vadd.xlane.f32.xlu0 %v1915
    %v1917 = vpop.xlane.xlu0 %1916
    %v1918 = vstv %s1415
    %v1919 = vmul.f32 %v1918, %v1679
    %v1920 = vmul.f32 %v1918, %v1682
    %v1921 = vmul.f32 %v1918, %v1685
    %v1922 = vmul.f32 %v1918, %v1688
    %v1923 = vmul.f32 %v1918, %v1692
    %v1924 = vmul.f32 %v1918, %v1695
    %v1925 = vmul.f32 %v1918, %v1698
    %v1926 = vmul.f32 %v1918, %v1701
    %v1927 = vmul.f32 %v1918, %v1704
    %v1928 = vmul.f32 %v1918, %v1707
    %v1929 = vmul.f32 %v1918, %v1710
    %v1930 = vmul.f32 %v1918, %v1713
    %v1931 = vmul.f32 %v1918, %v1716
    %v1932 = vmul.f32 %v1918, %v1719
    %v1933 = vmul.f32 %v1918, %v1722
    %v1934 = vmul.f32 %v1918, %v1725
    %v1935 = vmul.f32 %v1918, %v1728
    %v1936 = vmul.f32 %v1918, %v1731
    %v1937 = vmul.f32 %v1918, %v1734
    %v1938 = vmul.f32 %v1918, %v1737
    %v1939 = vmul.f32 %v1918, %v1740
    %v1940 = vmul.f32 %v1918, %v1743
    %v1941 = vmul.f32 %v1918, %v1746
    %v1942 = vmul.f32 %v1918, %v1749
    %v1943 = vmul.f32 %v1918, %v1752
    %v1944 = vmul.f32 %v1918, %v1755
    %v1945 = vmul.f32 %v1918, %v1758
    %v1946 = vmul.f32 %v1918, %v1761
    %v1947 = vmul.f32 %v1918, %v1764
    %v1948 = vmul.f32 %v1918, %v1767
    %v1949 = vmul.f32 %v1918, %v1770
    %v1950 = vmul.f32 %v1918, %v1773
    %v1951 = vmul.f32 %v1918, %v1776
    %v1952 = vmul.f32 %v1918, %v1779
    %v1953 = vmul.f32 %v1918, %v1782
    %v1954 = vmul.f32 %v1918, %v1785
    %v1955 = vmul.f32 %v1918, %v1788
    %v1956 = vmul.f32 %v1918, %v1791
    %v1957 = vmul.f32 %v1918, %v1794
    %v1958 = vmul.f32 %v1918, %v1797
    %v1959 = vmul.f32 %v1918, %v1800
    %v1960 = vmul.f32 %v1918, %v1803
    %v1961 = vmul.f32 %v1918, %v1806
    %v1962 = vmul.f32 %v1918, %v1809
    %v1963 = vmul.f32 %v1918, %v1812
    %v1964 = vmul.f32 %v1918, %v1815
    %v1965 = vmul.f32 %v1918, %v1818
    %v1966 = vmul.f32 %v1918, %v1821
    %v1967 = vmul.f32 %v1918, %v1824
    %v1968 = vmul.f32 %v1918, %v1827
    %v1969 = vmul.f32 %v1918, %v1830
    %v1970 = vmul.f32 %v1918, %v1833
    %v1971 = vmul.f32 %v1918, %v1836
    %v1972 = vmul.f32 %v1918, %v1839
    %v1973 = vmul.f32 %v1918, %v1842
    %v1974 = vmul.f32 %v1918, %v1845
    %v1975 = vmul.f32 %v1918, %v1848
    %v1976 = vmul.f32 %v1918, %v1851
    %v1977 = vmul.f32 %v1918, %v1854
    %v1978 = vmul.f32 %v1918, %v1857
    %v1979 = vmul.f32 %v1918, %v1860
    %v1980 = vmul.f32 %v1918, %v1863
    %v1981 = vmul.f32 %v1918, %v1866
    %v1982 = vmul.f32 %v1918, %v1869
    %v1983 = vmul.f32 %v1918, %v1872
    %v1984 = vmul.f32 %v1918, %v1875
    %v1985 = vmul.f32 %v1918, %v1878
    %v1986 = vmul.f32 %v1918, %v1881
    %v1987 = vmul.f32 %v1918, %v1884
    %v1988 = vmul.f32 %v1918, %v1887
    %v1989 = vmul.f32 %v1918, %v1890
    %v1990 = vmul.f32 %v1918, %v1893
    %v1991 = vmul.f32 %v1918, %v1896
    %v1992 = vmul.f32 %v1918, %v1899
    %v1993 = vmul.f32 %v1918, %v1902
    %v1994 = vmul.f32 %v1918, %v1905
    %v1995 = vmul.f32 %v1918, %v1908
    %v1996 = vmul.f32 %v1918, %v1911
    %v1997 = vmul.f32 %v1918, %v1914
    %v1998 = vmul.f32 %v1918, %v1917
    %v2079 = vlaneseq
    %v2080 = vshrl.u32 %v2079, 7
    %v2081 = vsub.s32 %v1410, %v2080
    %v2082 = vrot.slane %v1919, %v2081
    %v2083 = vadd.s32 %v1410, 4294967288
    %v2084 = vlaneseq
    %v2085 = vshrl.u32 %v2084, 7
    %v2086 = vsub.s32 %v2083, %v2085
    %v2087 = vrot.slane %v1920, %v2086
    %vm2088 = vcmask 130112
    %v2089 = vsel %vm2088, %v2087, %v2082
    %v2090 = vadd.s32 %v1410, 4294967280
    %v2091 = vlaneseq
    %v2092 = vshrl.u32 %v2091, 7
    %v2093 = vsub.s32 %v2090, %v2092
    %v2094 = vrot.slane %v1921, %v2093
    %vm2095 = vcmask 195712
    %v2096 = vsel %vm2095, %v2094, %v2089
    %v2097 = vadd.s32 %v1410, 4294967272
    %v2098 = vlaneseq
    %v2099 = vshrl.u32 %v2098, 7
    %v2100 = vsub.s32 %v2097, %v2099
    %v2101 = vrot.slane %v1922, %v2100
    %vm2102 = vcmask 261312
    %v2103 = vsel %vm2102, %v2101, %v2096
    %v2104 = vadd.s32 %v1410, 4294967264
    %v2105 = vlaneseq
    %v2106 = vshrl.u32 %v2105, 7
    %v2107 = vsub.s32 %v2104, %v2106
    %v2108 = vrot.slane %v1923, %v2107
    %vm2109 = vcmask 326912
    %v2110 = vsel %vm2109, %v2108, %v2103
    %v2111 = vlaneseq
    %v2112 = vshrl.u32 %v2111, 7
    %v2113 = vsub.s32 %v1410, %v2112
    %v2114 = vrot.slane %v1924, %v2113
    %v2115 = vlaneseq
    %v2116 = vshrl.u32 %v2115, 7
    %v2117 = vsub.s32 %v2083, %v2116
    %v2118 = vrot.slane %v1925, %v2117
    %v2119 = vsel %vm2088, %v2118, %v2114
    %v2120 = vlaneseq
    %v2121 = vshrl.u32 %v2120, 7
    %v2122 = vsub.s32 %v2090, %v2121
    %v2123 = vrot.slane %v1926, %v2122
    %v2124 = vsel %vm2095, %v2123, %v2119
    %v2125 = vlaneseq
    %v2126 = vshrl.u32 %v2125, 7
    %v2127 = vsub.s32 %v2097, %v2126
    %v2128 = vrot.slane %v1927, %v2127
    %v2129 = vsel %vm2102, %v2128, %v2124
    %v2130 = vlaneseq
    %v2131 = vshrl.u32 %v2130, 7
    %v2132 = vsub.s32 %v2104, %v2131
    %v2133 = vrot.slane %v1928, %v2132
    %v2134 = vsel %vm2109, %v2133, %v2129
    %v2135 = vlaneseq
    %v2136 = vshrl.u32 %v2135, 7
    %v2137 = vsub.s32 %v1410, %v2136
    %v2138 = vrot.slane %v1929, %v2137
    %v2139 = vlaneseq
    %v2140 = vshrl.u32 %v2139, 7
    %v2141 = vsub.s32 %v2083, %v2140
    %v2142 = vrot.slane %v1930, %v2141
    %v2143 = vsel %vm2088, %v2142, %v2138
    %v2144 = vlaneseq
    %v2145 = vshrl.u32 %v2144, 7
    %v2146 = vsub.s32 %v2090, %v2145
    %v2147 = vrot.slane %v1931, %v2146
    %v2148 = vsel %vm2095, %v2147, %v2143
    %v2149 = vlaneseq
    %v2150 = vshrl.u32 %v2149, 7
    %v2151 = vsub.s32 %v2097, %v2150
    %v2152 = vrot.slane %v1932, %v2151
    %v2153 = vsel %vm2102, %v2152, %v2148
    %v2154 = vlaneseq
    %v2155 = vshrl.u32 %v2154, 7
    %v2156 = vsub.s32 %v2104, %v2155
    %v2157 = vrot.slane %v1933, %v2156
    %v2158 = vsel %vm2109, %v2157, %v2153
    %v2159 = vlaneseq
    %v2160 = vshrl.u32 %v2159, 7
    %v2161 = vsub.s32 %v1410, %v2160
    %v2162 = vrot.slane %v1934, %v2161
    %v2163 = vlaneseq
    %v2164 = vshrl.u32 %v2163, 7
    %v2165 = vsub.s32 %v2083, %v2164
    %v2166 = vrot.slane %v1935, %v2165
    %v2167 = vsel %vm2088, %v2166, %v2162
    %v2168 = vlaneseq
    %v2169 = vshrl.u32 %v2168, 7
    %v2170 = vsub.s32 %v2090, %v2169
    %v2171 = vrot.slane %v1936, %v2170
    %v2172 = vsel %vm2095, %v2171, %v2167
    %v2173 = vlaneseq
    %v2174 = vshrl.u32 %v2173, 7
    %v2175 = vsub.s32 %v2097, %v2174
    %v2176 = vrot.slane %v1937, %v2175
    %v2177 = vsel %vm2102, %v2176, %v2172
    %v2178 = vlaneseq
    %v2179 = vshrl.u32 %v2178, 7
    %v2180 = vsub.s32 %v2104, %v2179
    %v2181 = vrot.slane %v1938, %v2180
    %v2182 = vsel %vm2109, %v2181, %v2177
    %v2183 = vlaneseq
    %v2184 = vshrl.u32 %v2183, 7
    %v2185 = vsub.s32 %v1410, %v2184
    %v2186 = vrot.slane %v1939, %v2185
    %v2187 = vlaneseq
    %v2188 = vshrl.u32 %v2187, 7
    %v2189 = vsub.s32 %v2083, %v2188
    %v2190 = vrot.slane %v1940, %v2189
    %v2191 = vsel %vm2088, %v2190, %v2186
    %v2192 = vlaneseq
    %v2193 = vshrl.u32 %v2192, 7
    %v2194 = vsub.s32 %v2090, %v2193
    %v2195 = vrot.slane %v1941, %v2194
    %v2196 = vsel %vm2095, %v2195, %v2191
    %v2197 = vlaneseq
    %v2198 = vshrl.u32 %v2197, 7
    %v2199 = vsub.s32 %v2097, %v2198
    %v2200 = vrot.slane %v1942, %v2199
    %v2201 = vsel %vm2102, %v2200, %v2196
    %v2202 = vlaneseq
    %v2203 = vshrl.u32 %v2202, 7
    %v2204 = vsub.s32 %v2104, %v2203
    %v2205 = vrot.slane %v1943, %v2204
    %v2206 = vsel %vm2109, %v2205, %v2201
    %v2207 = vlaneseq
    %v2208 = vshrl.u32 %v2207, 7
    %v2209 = vsub.s32 %v1410, %v2208
    %v2210 = vrot.slane %v1944, %v2209
    %v2211 = vlaneseq
    %v2212 = vshrl.u32 %v2211, 7
    %v2213 = vsub.s32 %v2083, %v2212
    %v2214 = vrot.slane %v1945, %v2213
    %v2215 = vsel %vm2088, %v2214, %v2210
    %v2216 = vlaneseq
    %v2217 = vshrl.u32 %v2216, 7
    %v2218 = vsub.s32 %v2090, %v2217
    %v2219 = vrot.slane %v1946, %v2218
    %v2220 = vsel %vm2095, %v2219, %v2215
    %v2221 = vlaneseq
    %v2222 = vshrl.u32 %v2221, 7
    %v2223 = vsub.s32 %v2097, %v2222
    %v2224 = vrot.slane %v1947, %v2223
    %v2225 = vsel %vm2102, %v2224, %v2220
    %v2226 = vlaneseq
    %v2227 = vshrl.u32 %v2226, 7
    %v2228 = vsub.s32 %v2104, %v2227
    %v2229 = vrot.slane %v1948, %v2228
    %v2230 = vsel %vm2109, %v2229, %v2225
    %v2231 = vlaneseq
    %v2232 = vshrl.u32 %v2231, 7
    %v2233 = vsub.s32 %v1410, %v2232
    %v2234 = vrot.slane %v1949, %v2233
    %v2235 = vlaneseq
    %v2236 = vshrl.u32 %v2235, 7
    %v2237 = vsub.s32 %v2083, %v2236
    %v2238 = vrot.slane %v1950, %v2237
    %v2239 = vsel %vm2088, %v2238, %v2234
    %v2240 = vlaneseq
    %v2241 = vshrl.u32 %v2240, 7
    %v2242 = vsub.s32 %v2090, %v2241
    %v2243 = vrot.slane %v1951, %v2242
    %v2244 = vsel %vm2095, %v2243, %v2239
    %v2245 = vlaneseq
    %v2246 = vshrl.u32 %v2245, 7
    %v2247 = vsub.s32 %v2097, %v2246
    %v2248 = vrot.slane %v1952, %v2247
    %v2249 = vsel %vm2102, %v2248, %v2244
    %v2250 = vlaneseq
    %v2251 = vshrl.u32 %v2250, 7
    %v2252 = vsub.s32 %v2104, %v2251
    %v2253 = vrot.slane %v1953, %v2252
    %v2254 = vsel %vm2109, %v2253, %v2249
    %v2255 = vlaneseq
    %v2256 = vshrl.u32 %v2255, 7
    %v2257 = vsub.s32 %v1410, %v2256
    %v2258 = vrot.slane %v1954, %v2257
    %v2259 = vlaneseq
    %v2260 = vshrl.u32 %v2259, 7
    %v2261 = vsub.s32 %v2083, %v2260
    %v2262 = vrot.slane %v1955, %v2261
    %v2263 = vsel %vm2088, %v2262, %v2258
    %v2264 = vlaneseq
    %v2265 = vshrl.u32 %v2264, 7
    %v2266 = vsub.s32 %v2090, %v2265
    %v2267 = vrot.slane %v1956, %v2266
    %v2268 = vsel %vm2095, %v2267, %v2263
    %v2269 = vlaneseq
    %v2270 = vshrl.u32 %v2269, 7
    %v2271 = vsub.s32 %v2097, %v2270
    %v2272 = vrot.slane %v1957, %v2271
    %v2273 = vsel %vm2102, %v2272, %v2268
    %v2274 = vlaneseq
    %v2275 = vshrl.u32 %v2274, 7
    %v2276 = vsub.s32 %v2104, %v2275
    %v2277 = vrot.slane %v1958, %v2276
    %v2278 = vsel %vm2109, %v2277, %v2273
    %v2279 = vlaneseq
    %v2280 = vshrl.u32 %v2279, 7
    %v2281 = vsub.s32 %v1410, %v2280
    %v2282 = vrot.slane %v1959, %v2281
    %v2283 = vlaneseq
    %v2284 = vshrl.u32 %v2283, 7
    %v2285 = vsub.s32 %v2083, %v2284
    %v2286 = vrot.slane %v1960, %v2285
    %v2287 = vsel %vm2088, %v2286, %v2282
    %v2288 = vlaneseq
    %v2289 = vshrl.u32 %v2288, 7
    %v2290 = vsub.s32 %v2090, %v2289
    %v2291 = vrot.slane %v1961, %v2290
    %v2292 = vsel %vm2095, %v2291, %v2287
    %v2293 = vlaneseq
    %v2294 = vshrl.u32 %v2293, 7
    %v2295 = vsub.s32 %v2097, %v2294
    %v2296 = vrot.slane %v1962, %v2295
    %v2297 = vsel %vm2102, %v2296, %v2292
    %v2298 = vlaneseq
    %v2299 = vshrl.u32 %v2298, 7
    %v2300 = vsub.s32 %v2104, %v2299
    %v2301 = vrot.slane %v1963, %v2300
    %v2302 = vsel %vm2109, %v2301, %v2297
    %v2303 = vlaneseq
    %v2304 = vshrl.u32 %v2303, 7
    %v2305 = vsub.s32 %v1410, %v2304
    %v2306 = vrot.slane %v1964, %v2305
    %v2307 = vlaneseq
    %v2308 = vshrl.u32 %v2307, 7
    %v2309 = vsub.s32 %v2083, %v2308
    %v2310 = vrot.slane %v1965, %v2309
    %v2311 = vsel %vm2088, %v2310, %v2306
    %v2312 = vlaneseq
    %v2313 = vshrl.u32 %v2312, 7
    %v2314 = vsub.s32 %v2090, %v2313
    %v2315 = vrot.slane %v1966, %v2314
    %v2316 = vsel %vm2095, %v2315, %v2311
    %v2317 = vlaneseq
    %v2318 = vshrl.u32 %v2317, 7
    %v2319 = vsub.s32 %v2097, %v2318
    %v2320 = vrot.slane %v1967, %v2319
    %v2321 = vsel %vm2102, %v2320, %v2316
    %v2322 = vlaneseq
    %v2323 = vshrl.u32 %v2322, 7
    %v2324 = vsub.s32 %v2104, %v2323
    %v2325 = vrot.slane %v1968, %v2324
    %v2326 = vsel %vm2109, %v2325, %v2321
    %v2327 = vlaneseq
    %v2328 = vshrl.u32 %v2327, 7
    %v2329 = vsub.s32 %v1410, %v2328
    %v2330 = vrot.slane %v1969, %v2329
    %v2331 = vlaneseq
    %v2332 = vshrl.u32 %v2331, 7
    %v2333 = vsub.s32 %v2083, %v2332
    %v2334 = vrot.slane %v1970, %v2333
    %v2335 = vsel %vm2088, %v2334, %v2330
    %v2336 = vlaneseq
    %v2337 = vshrl.u32 %v2336, 7
    %v2338 = vsub.s32 %v2090, %v2337
    %v2339 = vrot.slane %v1971, %v2338
    %v2340 = vsel %vm2095, %v2339, %v2335
    %v2341 = vlaneseq
    %v2342 = vshrl.u32 %v2341, 7
    %v2343 = vsub.s32 %v2097, %v2342
    %v2344 = vrot.slane %v1972, %v2343
    %v2345 = vsel %vm2102, %v2344, %v2340
    %v2346 = vlaneseq
    %v2347 = vshrl.u32 %v2346, 7
    %v2348 = vsub.s32 %v2104, %v2347
    %v2349 = vrot.slane %v1973, %v2348
    %v2350 = vsel %vm2109, %v2349, %v2345
    %v2351 = vlaneseq
    %v2352 = vshrl.u32 %v2351, 7
    %v2353 = vsub.s32 %v1410, %v2352
    %v2354 = vrot.slane %v1974, %v2353
    %v2355 = vlaneseq
    %v2356 = vshrl.u32 %v2355, 7
    %v2357 = vsub.s32 %v2083, %v2356
    %v2358 = vrot.slane %v1975, %v2357
    %v2359 = vsel %vm2088, %v2358, %v2354
    %v2360 = vlaneseq
    %v2361 = vshrl.u32 %v2360, 7
    %v2362 = vsub.s32 %v2090, %v2361
    %v2363 = vrot.slane %v1976, %v2362
    %v2364 = vsel %vm2095, %v2363, %v2359
    %v2365 = vlaneseq
    %v2366 = vshrl.u32 %v2365, 7
    %v2367 = vsub.s32 %v2097, %v2366
    %v2368 = vrot.slane %v1977, %v2367
    %v2369 = vsel %vm2102, %v2368, %v2364
    %v2370 = vlaneseq
    %v2371 = vshrl.u32 %v2370, 7
    %v2372 = vsub.s32 %v2104, %v2371
    %v2373 = vrot.slane %v1978, %v2372
    %v2374 = vsel %vm2109, %v2373, %v2369
    %v2375 = vlaneseq
    %v2376 = vshrl.u32 %v2375, 7
    %v2377 = vsub.s32 %v1410, %v2376
    %v2378 = vrot.slane %v1979, %v2377
    %v2379 = vlaneseq
    %v2380 = vshrl.u32 %v2379, 7
    %v2381 = vsub.s32 %v2083, %v2380
    %v2382 = vrot.slane %v1980, %v2381
    %v2383 = vsel %vm2088, %v2382, %v2378
    %v2384 = vlaneseq
    %v2385 = vshrl.u32 %v2384, 7
    %v2386 = vsub.s32 %v2090, %v2385
    %v2387 = vrot.slane %v1981, %v2386
    %v2388 = vsel %vm2095, %v2387, %v2383
    %v2389 = vlaneseq
    %v2390 = vshrl.u32 %v2389, 7
    %v2391 = vsub.s32 %v2097, %v2390
    %v2392 = vrot.slane %v1982, %v2391
    %v2393 = vsel %vm2102, %v2392, %v2388
    %v2394 = vlaneseq
    %v2395 = vshrl.u32 %v2394, 7
    %v2396 = vsub.s32 %v2104, %v2395
    %v2397 = vrot.slane %v1983, %v2396
    %v2398 = vsel %vm2109, %v2397, %v2393
    %v2399 = vlaneseq
    %v2400 = vshrl.u32 %v2399, 7
    %v2401 = vsub.s32 %v1410, %v2400
    %v2402 = vrot.slane %v1984, %v2401
    %v2403 = vlaneseq
    %v2404 = vshrl.u32 %v2403, 7
    %v2405 = vsub.s32 %v2083, %v2404
    %v2406 = vrot.slane %v1985, %v2405
    %v2407 = vsel %vm2088, %v2406, %v2402
    %v2408 = vlaneseq
    %v2409 = vshrl.u32 %v2408, 7
    %v2410 = vsub.s32 %v2090, %v2409
    %v2411 = vrot.slane %v1986, %v2410
    %v2412 = vsel %vm2095, %v2411, %v2407
    %v2413 = vlaneseq
    %v2414 = vshrl.u32 %v2413, 7
    %v2415 = vsub.s32 %v2097, %v2414
    %v2416 = vrot.slane %v1987, %v2415
    %v2417 = vsel %vm2102, %v2416, %v2412
    %v2418 = vlaneseq
    %v2419 = vshrl.u32 %v2418, 7
    %v2420 = vsub.s32 %v2104, %v2419
    %v2421 = vrot.slane %v1988, %v2420
    %v2422 = vsel %vm2109, %v2421, %v2417
    %v2423 = vlaneseq
    %v2424 = vshrl.u32 %v2423, 7
    %v2425 = vsub.s32 %v1410, %v2424
    %v2426 = vrot.slane %v1989, %v2425
    %v2427 = vlaneseq
    %v2428 = vshrl.u32 %v2427, 7
    %v2429 = vsub.s32 %v2083, %v2428
    %v2430 = vrot.slane %v1990, %v2429
    %v2431 = vsel %vm2088, %v2430, %v2426
    %v2432 = vlaneseq
    %v2433 = vshrl.u32 %v2432, 7
    %v2434 = vsub.s32 %v2090, %v2433
    %v2435 = vrot.slane %v1991, %v2434
    %v2436 = vsel %vm2095, %v2435, %v2431
    %v2437 = vlaneseq
    %v2438 = vshrl.u32 %v2437, 7
    %v2439 = vsub.s32 %v2097, %v2438
    %v2440 = vrot.slane %v1992, %v2439
    %v2441 = vsel %vm2102, %v2440, %v2436
    %v2442 = vlaneseq
    %v2443 = vshrl.u32 %v2442, 7
    %v2444 = vsub.s32 %v2104, %v2443
    %v2445 = vrot.slane %v1993, %v2444
    %v2446 = vsel %vm2109, %v2445, %v2441
    %v2447 = vlaneseq
    %v2448 = vshrl.u32 %v2447, 7
    %v2449 = vsub.s32 %v1410, %v2448
    %v2450 = vrot.slane %v1994, %v2449
    %v2451 = vlaneseq
    %v2452 = vshrl.u32 %v2451, 7
    %v2453 = vsub.s32 %v2083, %v2452
    %v2454 = vrot.slane %v1995, %v2453
    %v2455 = vsel %vm2088, %v2454, %v2450
    %v2456 = vlaneseq
    %v2457 = vshrl.u32 %v2456, 7
    %v2458 = vsub.s32 %v2090, %v2457
    %v2459 = vrot.slane %v1996, %v2458
    %v2460 = vsel %vm2095, %v2459, %v2455
    %v2461 = vlaneseq
    %v2462 = vshrl.u32 %v2461, 7
    %v2463 = vsub.s32 %v2097, %v2462
    %v2464 = vrot.slane %v1997, %v2463
    %v2465 = vsel %vm2102, %v2464, %v2460
    %v2466 = vlaneseq
    %v2467 = vshrl.u32 %v2466, 7
    %v2468 = vsub.s32 %v2104, %v2467
    %v2469 = vrot.slane %v1998, %v2468
    %v2470 = vsel %vm2109, %v2469, %v2465
    %vm2471 = vcmask 1041409
    %v2472 = vsel %vm2471, %v2134, %v2110
    %vm2473 = vcmask 1042434
    %v2474 = vsel %vm2473, %v2158, %v2472
    %vm2475 = vcmask 1043459
    %v2476 = vsel %vm2475, %v2182, %v2474
    %vm2477 = vcmask 1044484
    %v2478 = vsel %vm2477, %v2206, %v2476
    %vm2479 = vcmask 1045509
    %v2480 = vsel %vm2479, %v2230, %v2478
    %vm2481 = vcmask 1046534
    %v2482 = vsel %vm2481, %v2254, %v2480
    %vm2483 = vcmask 1047559
    %v2484 = vsel %vm2483, %v2278, %v2482
    %v2485 = vsel %vm2471, %v2326, %v2302
    %v2486 = vsel %vm2473, %v2350, %v2485
    %v2487 = vsel %vm2475, %v2374, %v2486
    %v2488 = vsel %vm2477, %v2398, %v2487
    %v2489 = vsel %vm2479, %v2422, %v2488
    %v2490 = vsel %vm2481, %v2446, %v2489
    %v2491 = vsel %vm2483, %v2470, %v2490
    %v2494 = vsub.f32 %v1412, %v2484
    %v2495 = vsub.f32 %v1413, %v2491
    %s2496 = sld [smem:[#allocation8]]
    %v2497 = vstv %s2496
    %v2498 = vmul.f32 %v2497, %v2494
    %v2499 = vmul.f32 %v2497, %v2495
    %v2500 = vtanh.pop %v2498
    %v2501 = vtanh.pop %v2499
    %s2502 = sld [smem:[#allocation6]]
    %v2503 = vsub.f32 %v2500, %v1412
    %v2504 = vsub.f32 %v2501, %v1413
    %v2505 = vstv %s2502
    %v2506 = vmul.f32 %v2505, %v2503
    %v2507 = vmul.f32 %v2505, %v2504
    %v2508 = vadd.f32 %v1412, %v2506
    %v2509 = vadd.f32 %v1413, %v2507
    %v2510 = vsel %vm1411, -1.0, %v2508
    %v2511 = vsel %vm1411, -1.0, %v2509
    %s2512 = sld [smem:[#allocation2 + $0x1]]
    %s2513 = smul.f32 %s2512, 2.0
    %v2516 = vcombine.high %v2510, %v2510
    %v2518 = vunpack.c.l.s4 1966171168
    %v2519 = vunpack.c.0.s8 %v2518
    %v2520 = vlaneseq
    %v2521 = vshrl.u32 %v2520, 7
    %v2522 = vsub.s32 %v2519, %v2521
    %v2523 = vrot.slane %v2510, %v2522
    %v2525 = vunpack.c.l.s4 1966171168
    %v2526 = vunpack.c.0.s8 %v2525
    %v2527 = vlaneseq
    %v2528 = vshrl.u32 %v2527, 7
    %v2529 = vsub.s32 %v2526, %v2528
    %v2530 = vrot.slane %v2516, %v2529
    %v2531 = vcombine.high %v2523, %v2523
    %v2532 = vcombine.high %v2530, %v2530
    %v2534 = vunpack.c.l.s4 1966171168
    %v2535 = vunpack.c.0.s8 %v2534
    %v2536 = vlaneseq
    %v2537 = vshrl.u32 %v2536, 7
    %v2538 = vsub.s32 %v2535, %v2537
    %v2539 = vrot.slane %v2523, %v2538
    %v2541 = vunpack.c.l.s4 1966171168
    %v2542 = vunpack.c.0.s8 %v2541
    %v2543 = vlaneseq
    %v2544 = vshrl.u32 %v2543, 7
    %v2545 = vsub.s32 %v2542, %v2544
    %v2546 = vrot.slane %v2530, %v2545
    %v2548 = vunpack.c.l.s4 1966171168
    %v2549 = vunpack.c.0.s8 %v2548
    %v2550 = vlaneseq
    %v2551 = vshrl.u32 %v2550, 7
    %v2552 = vsub.s32 %v2549, %v2551
    %v2553 = vrot.slane %v2531, %v2552
    %v2555 = vunpack.c.l.s4 1966171168
    %v2556 = vunpack.c.0.s8 %v2555
    %v2557 = vlaneseq
    %v2558 = vshrl.u32 %v2557, 7
    %v2559 = vsub.s32 %v2556, %v2558
    %v2560 = vrot.slane %v2532, %v2559
    %v2561 = vcombine.high %v2539, %v2539
    %v2562 = vcombine.high %v2546, %v2546
    %v2563 = vcombine.high %v2553, %v2553
    %v2564 = vcombine.high %v2560, %v2560
    %v2565 = vcombine.high %v2511, %v2511
    %v2567 = vunpack.c.l.s4 1966171168
    %v2568 = vunpack.c.0.s8 %v2567
    %v2569 = vlaneseq
    %v2570 = vshrl.u32 %v2569, 7
    %v2571 = vsub.s32 %v2568, %v2570
    %v2572 = vrot.slane %v2511, %v2571
    %v2574 = vunpack.c.l.s4 1966171168
    %v2575 = vunpack.c.0.s8 %v2574
    %v2576 = vlaneseq
    %v2577 = vshrl.u32 %v2576, 7
    %v2578 = vsub.s32 %v2575, %v2577
    %v2579 = vrot.slane %v2565, %v2578
    %v2580 = vcombine.high %v2572, %v2572
    %v2581 = vcombine.high %v2579, %v2579
    %v2583 = vunpack.c.l.s4 1966171168
    %v2584 = vunpack.c.0.s8 %v2583
    %v2585 = vlaneseq
    %v2586 = vshrl.u32 %v2585, 7
    %v2587 = vsub.s32 %v2584, %v2586
    %v2588 = vrot.slane %v2572, %v2587
    %v2590 = vunpack.c.l.s4 1966171168
    %v2591 = vunpack.c.0.s8 %v2590
    %v2592 = vlaneseq
    %v2593 = vshrl.u32 %v2592, 7
    %v2594 = vsub.s32 %v2591, %v2593
    %v2595 = vrot.slane %v2579, %v2594
    %v2597 = vunpack.c.l.s4 1966171168
    %v2598 = vunpack.c.0.s8 %v2597
    %v2599 = vlaneseq
    %v2600 = vshrl.u32 %v2599, 7
    %v2601 = vsub.s32 %v2598, %v2600
    %v2602 = vrot.slane %v2580, %v2601
    %v2604 = vunpack.c.l.s4 1966171168
    %v2605 = vunpack.c.0.s8 %v2604
    %v2606 = vlaneseq
    %v2607 = vshrl.u32 %v2606, 7
    %v2608 = vsub.s32 %v2605, %v2607
    %v2609 = vrot.slane %v2581, %v2608
    %v2610 = vcombine.high %v2588, %v2588
    %v2611 = vcombine.high %v2595, %v2595
    %v2612 = vcombine.high %v2602, %v2602
    %v2613 = vcombine.high %v2609, %v2609
    %v2614 = vlaneseq
    %v2615 = vshrl.u32 %v2614, 7
    %v2616 = vsub.s32 0, %v2615
    %v2617 = vrot.slane %v2539, %v2616
    %v2618 = vlaneseq
    %v2619 = vshrl.u32 %v2618, 7
    %v2620 = vsub.s32 0, %v2619
    %v2621 = vrot.slane %v2553, %v2620
    %v2622 = vlaneseq
    %v2623 = vshrl.u32 %v2622, 7
    %v2624 = vsub.s32 0, %v2623
    %v2625 = vrot.slane %v2561, %v2624
    %v2626 = vlaneseq
    %v2627 = vshrl.u32 %v2626, 7
    %v2628 = vsub.s32 0, %v2627
    %v2629 = vrot.slane %v2563, %v2628
    %v2630 = vlaneseq
    %v2631 = vshrl.u32 %v2630, 7
    %v2632 = vsub.s32 0, %v2631
    %v2633 = vrot.slane %v2546, %v2632
    %v2634 = vlaneseq
    %v2635 = vshrl.u32 %v2634, 7
    %v2636 = vsub.s32 0, %v2635
    %v2637 = vrot.slane %v2560, %v2636
    %v2638 = vlaneseq
    %v2639 = vshrl.u32 %v2638, 7
    %v2640 = vsub.s32 0, %v2639
    %v2641 = vrot.slane %v2562, %v2640
    %v2642 = vlaneseq
    %v2643 = vshrl.u32 %v2642, 7
    %v2644 = vsub.s32 0, %v2643
    %v2645 = vrot.slane %v2564, %v2644
    %v2646 = vlaneseq
    %v2647 = vshrl.u32 %v2646, 7
    %v2648 = vsub.s32 0, %v2647
    %v2649 = vrot.slane %v2588, %v2648
    %v2650 = vlaneseq
    %v2651 = vshrl.u32 %v2650, 7
    %v2652 = vsub.s32 0, %v2651
    %v2653 = vrot.slane %v2602, %v2652
    %v2654 = vlaneseq
    %v2655 = vshrl.u32 %v2654, 7
    %v2656 = vsub.s32 0, %v2655
    %v2657 = vrot.slane %v2610, %v2656
    %v2658 = vlaneseq
    %v2659 = vshrl.u32 %v2658, 7
    %v2660 = vsub.s32 0, %v2659
    %v2661 = vrot.slane %v2612, %v2660
    %v2662 = vlaneseq
    %v2663 = vshrl.u32 %v2662, 7
    %v2664 = vsub.s32 0, %v2663
    %v2665 = vrot.slane %v2595, %v2664
    %v2666 = vlaneseq
    %v2667 = vshrl.u32 %v2666, 7
    %v2668 = vsub.s32 0, %v2667
    %v2669 = vrot.slane %v2609, %v2668
    %v2670 = vlaneseq
    %v2671 = vshrl.u32 %v2670, 7
    %v2672 = vsub.s32 0, %v2671
    %v2673 = vrot.slane %v2611, %v2672
    %v2674 = vlaneseq
    %v2675 = vshrl.u32 %v2674, 7
    %v2676 = vsub.s32 0, %v2675
    %v2677 = vrot.slane %v2613, %v2676
    %v2694 = vmul.f32 %v218, %v2617
    %v2695 = vmul.f32 %v221, %v2617
    %v2696 = vmul.f32 %v226, %v2617
    %v2697 = vmul.f32 %v229, %v2617
    %v2698 = vmul.f32 %v234, %v2617
    %v2699 = vmul.f32 %v296, %v2621
    %v2700 = vmul.f32 %v299, %v2621
    %v2701 = vmul.f32 %v304, %v2621
    %v2702 = vmul.f32 %v307, %v2621
    %v2703 = vmul.f32 %v312, %v2621
    %v2704 = vmul.f32 %v374, %v2625
    %v2705 = vmul.f32 %v377, %v2625
    %v2706 = vmul.f32 %v382, %v2625
    %v2707 = vmul.f32 %v385, %v2625
    %v2708 = vmul.f32 %v390, %v2625
    %v2709 = vmul.f32 %v452, %v2629
    %v2710 = vmul.f32 %v455, %v2629
    %v2711 = vmul.f32 %v460, %v2629
    %v2712 = vmul.f32 %v463, %v2629
    %v2713 = vmul.f32 %v468, %v2629
    %v2714 = vmul.f32 %v530, %v2633
    %v2715 = vmul.f32 %v533, %v2633
    %v2716 = vmul.f32 %v538, %v2633
    %v2717 = vmul.f32 %v541, %v2633
    %v2718 = vmul.f32 %v546, %v2633
    %v2719 = vmul.f32 %v608, %v2637
    %v2720 = vmul.f32 %v611, %v2637
    %v2721 = vmul.f32 %v616, %v2637
    %v2722 = vmul.f32 %v619, %v2637
    %v2723 = vmul.f32 %v624, %v2637
    %v2724 = vmul.f32 %v686, %v2641
    %v2725 = vmul.f32 %v689, %v2641
    %v2726 = vmul.f32 %v694, %v2641
    %v2727 = vmul.f32 %v697, %v2641
    %v2728 = vmul.f32 %v702, %v2641
    %v2729 = vmul.f32 %v764, %v2645
    %v2730 = vmul.f32 %v767, %v2645
    %v2731 = vmul.f32 %v772, %v2645
    %v2732 = vmul.f32 %v775, %v2645
    %v2733 = vmul.f32 %v780, %v2645
    %v2734 = vmul.f32 %v842, %v2649
    %v2735 = vmul.f32 %v845, %v2649
    %v2736 = vmul.f32 %v850, %v2649
    %v2737 = vmul.f32 %v853, %v2649
    %v2738 = vmul.f32 %v858, %v2649
    %v2739 = vmul.f32 %v920, %v2653
    %v2740 = vmul.f32 %v923, %v2653
    %v2741 = vmul.f32 %v928, %v2653
    %v2742 = vmul.f32 %v931, %v2653
    %v2743 = vmul.f32 %v936, %v2653
    %v2744 = vmul.f32 %v998, %v2657
    %v2745 = vmul.f32 %v1001, %v2657
    %v2746 = vmul.f32 %v1006, %v2657
    %v2747 = vmul.f32 %v1009, %v2657
    %v2748 = vmul.f32 %v1014, %v2657
    %v2749 = vmul.f32 %v1076, %v2661
    %v2750 = vmul.f32 %v1079, %v2661
    %v2751 = vmul.f32 %v1084, %v2661
    %v2752 = vmul.f32 %v1087, %v2661
    %v2753 = vmul.f32 %v1092, %v2661
    %v2754 = vmul.f32 %v1154, %v2665
    %v2755 = vmul.f32 %v1157, %v2665
    %v2756 = vmul.f32 %v1162, %v2665
    %v2757 = vmul.f32 %v1165, %v2665
    %v2758 = vmul.f32 %v1170, %v2665
    %v2759 = vmul.f32 %v1232, %v2669
    %v2760 = vmul.f32 %v1235, %v2669
    %v2761 = vmul.f32 %v1240, %v2669
    %v2762 = vmul.f32 %v1243, %v2669
    %v2763 = vmul.f32 %v1248, %v2669
    %v2764 = vmul.f32 %v1310, %v2673
    %v2765 = vmul.f32 %v1313, %v2673
    %v2766 = vmul.f32 %v1318, %v2673
    %v2767 = vmul.f32 %v1321, %v2673
    %v2768 = vmul.f32 %v1326, %v2673
    %v2769 = vmul.f32 %v1388, %v2677
    %v2770 = vmul.f32 %v1391, %v2677
    %v2771 = vmul.f32 %v1396, %v2677
    %v2772 = vmul.f32 %v1399, %v2677
    %v2773 = vmul.f32 %v1404, %v2677
    %v2774 = vsel %vm1676, %v2694, 0.0
    %2775 = vadd.xlane.f32.xlu0 %v2774
    %v2776 = vpop.xlane.xlu0 %2775
    %v2777 = vsel %vm1676, %v2695, 0.0
    %2778 = vadd.xlane.f32.xlu0 %v2777
    %v2779 = vpop.xlane.xlu0 %2778
    %v2780 = vsel %vm1676, %v2696, 0.0
    %2781 = vadd.xlane.f32.xlu0 %v2780
    %v2782 = vpop.xlane.xlu0 %2781
    %v2783 = vsel %vm1676, %v2697, 0.0
    %2784 = vadd.xlane.f32.xlu0 %v2783
    %v2785 = vpop.xlane.xlu0 %2784
    %v2786 = vsel %vm1689, %v2698, 0.0
    %2787 = vadd.xlane.f32.xlu0 %v2786
    %v2788 = vpop.xlane.xlu0 %2787
    %v2789 = vsel %vm1676, %v2699, 0.0
    %2790 = vadd.xlane.f32.xlu0 %v2789
    %v2791 = vpop.xlane.xlu0 %2790
    %v2792 = vsel %vm1676, %v2700, 0.0
    %2793 = vadd.xlane.f32.xlu0 %v2792
    %v2794 = vpop.xlane.xlu0 %2793
    %v2795 = vsel %vm1676, %v2701, 0.0
    %2796 = vadd.xlane.f32.xlu0 %v2795
    %v2797 = vpop.xlane.xlu0 %2796
    %v2798 = vsel %vm1676, %v2702, 0.0
    %2799 = vadd.xlane.f32.xlu0 %v2798
    %v2800 = vpop.xlane.xlu0 %2799
    %v2801 = vsel %vm1689, %v2703, 0.0
    %2802 = vadd.xlane.f32.xlu0 %v2801
    %v2803 = vpop.xlane.xlu0 %2802
    %v2804 = vsel %vm1676, %v2704, 0.0
    %2805 = vadd.xlane.f32.xlu0 %v2804
    %v2806 = vpop.xlane.xlu0 %2805
    %v2807 = vsel %vm1676, %v2705, 0.0
    %2808 = vadd.xlane.f32.xlu0 %v2807
    %v2809 = vpop.xlane.xlu0 %2808
    %v2810 = vsel %vm1676, %v2706, 0.0
    %2811 = vadd.xlane.f32.xlu0 %v2810
    %v2812 = vpop.xlane.xlu0 %2811
    %v2813 = vsel %vm1676, %v2707, 0.0
    %2814 = vadd.xlane.f32.xlu0 %v2813
    %v2815 = vpop.xlane.xlu0 %2814
    %v2816 = vsel %vm1689, %v2708, 0.0
    %2817 = vadd.xlane.f32.xlu0 %v2816
    %v2818 = vpop.xlane.xlu0 %2817
    %v2819 = vsel %vm1676, %v2709, 0.0
    %2820 = vadd.xlane.f32.xlu0 %v2819
    %v2821 = vpop.xlane.xlu0 %2820
    %v2822 = vsel %vm1676, %v2710, 0.0
    %2823 = vadd.xlane.f32.xlu0 %v2822
    %v2824 = vpop.xlane.xlu0 %2823
    %v2825 = vsel %vm1676, %v2711, 0.0
    %2826 = vadd.xlane.f32.xlu0 %v2825
    %v2827 = vpop.xlane.xlu0 %2826
    %v2828 = vsel %vm1676, %v2712, 0.0
    %2829 = vadd.xlane.f32.xlu0 %v2828
    %v2830 = vpop.xlane.xlu0 %2829
    %v2831 = vsel %vm1689, %v2713, 0.0
    %2832 = vadd.xlane.f32.xlu0 %v2831
    %v2833 = vpop.xlane.xlu0 %2832
    %v2834 = vsel %vm1676, %v2714, 0.0
    %2835 = vadd.xlane.f32.xlu0 %v2834
    %v2836 = vpop.xlane.xlu0 %2835
    %v2837 = vsel %vm1676, %v2715, 0.0
    %2838 = vadd.xlane.f32.xlu0 %v2837
    %v2839 = vpop.xlane.xlu0 %2838
    %v2840 = vsel %vm1676, %v2716, 0.0
    %2841 = vadd.xlane.f32.xlu0 %v2840
    %v2842 = vpop.xlane.xlu0 %2841
    %v2843 = vsel %vm1676, %v2717, 0.0
    %2844 = vadd.xlane.f32.xlu0 %v2843
    %v2845 = vpop.xlane.xlu0 %2844
    %v2846 = vsel %vm1689, %v2718, 0.0
    %2847 = vadd.xlane.f32.xlu0 %v2846
    %v2848 = vpop.xlane.xlu0 %2847
    %v2849 = vsel %vm1676, %v2719, 0.0
    %2850 = vadd.xlane.f32.xlu0 %v2849
    %v2851 = vpop.xlane.xlu0 %2850
    %v2852 = vsel %vm1676, %v2720, 0.0
    %2853 = vadd.xlane.f32.xlu0 %v2852
    %v2854 = vpop.xlane.xlu0 %2853
    %v2855 = vsel %vm1676, %v2721, 0.0
    %2856 = vadd.xlane.f32.xlu0 %v2855
    %v2857 = vpop.xlane.xlu0 %2856
    %v2858 = vsel %vm1676, %v2722, 0.0
    %2859 = vadd.xlane.f32.xlu0 %v2858
    %v2860 = vpop.xlane.xlu0 %2859
    %v2861 = vsel %vm1689, %v2723, 0.0
    %2862 = vadd.xlane.f32.xlu0 %v2861
    %v2863 = vpop.xlane.xlu0 %2862
    %v2864 = vsel %vm1676, %v2724, 0.0
    %2865 = vadd.xlane.f32.xlu0 %v2864
    %v2866 = vpop.xlane.xlu0 %2865
    %v2867 = vsel %vm1676, %v2725, 0.0
    %2868 = vadd.xlane.f32.xlu0 %v2867
    %v2869 = vpop.xlane.xlu0 %2868
    %v2870 = vsel %vm1676, %v2726, 0.0
    %2871 = vadd.xlane.f32.xlu0 %v2870
    %v2872 = vpop.xlane.xlu0 %2871
    %v2873 = vsel %vm1676, %v2727, 0.0
    %2874 = vadd.xlane.f32.xlu0 %v2873
    %v2875 = vpop.xlane.xlu0 %2874
    %v2876 = vsel %vm1689, %v2728, 0.0
    %2877 = vadd.xlane.f32.xlu0 %v2876
    %v2878 = vpop.xlane.xlu0 %2877
    %v2879 = vsel %vm1676, %v2729, 0.0
    %2880 = vadd.xlane.f32.xlu0 %v2879
    %v2881 = vpop.xlane.xlu0 %2880
    %v2882 = vsel %vm1676, %v2730, 0.0
    %2883 = vadd.xlane.f32.xlu0 %v2882
    %v2884 = vpop.xlane.xlu0 %2883
    %v2885 = vsel %vm1676, %v2731, 0.0
    %2886 = vadd.xlane.f32.xlu0 %v2885
    %v2887 = vpop.xlane.xlu0 %2886
    %v2888 = vsel %vm1676, %v2732, 0.0
    %2889 = vadd.xlane.f32.xlu0 %v2888
    %v2890 = vpop.xlane.xlu0 %2889
    %v2891 = vsel %vm1689, %v2733, 0.0
    %2892 = vadd.xlane.f32.xlu0 %v2891
    %v2893 = vpop.xlane.xlu0 %2892
    %v2894 = vsel %vm1676, %v2734, 0.0
    %2895 = vadd.xlane.f32.xlu0 %v2894
    %v2896 = vpop.xlane.xlu0 %2895
    %v2897 = vsel %vm1676, %v2735, 0.0
    %2898 = vadd.xlane.f32.xlu0 %v2897
    %v2899 = vpop.xlane.xlu0 %2898
    %v2900 = vsel %vm1676, %v2736, 0.0
    %2901 = vadd.xlane.f32.xlu0 %v2900
    %v2902 = vpop.xlane.xlu0 %2901
    %v2903 = vsel %vm1676, %v2737, 0.0
    %2904 = vadd.xlane.f32.xlu0 %v2903
    %v2905 = vpop.xlane.xlu0 %2904
    %v2906 = vsel %vm1689, %v2738, 0.0
    %2907 = vadd.xlane.f32.xlu0 %v2906
    %v2908 = vpop.xlane.xlu0 %2907
    %v2909 = vsel %vm1676, %v2739, 0.0
    %2910 = vadd.xlane.f32.xlu0 %v2909
    %v2911 = vpop.xlane.xlu0 %2910
    %v2912 = vsel %vm1676, %v2740, 0.0
    %2913 = vadd.xlane.f32.xlu0 %v2912
    %v2914 = vpop.xlane.xlu0 %2913
    %v2915 = vsel %vm1676, %v2741, 0.0
    %2916 = vadd.xlane.f32.xlu0 %v2915
    %v2917 = vpop.xlane.xlu0 %2916
    %v2918 = vsel %vm1676, %v2742, 0.0
    %2919 = vadd.xlane.f32.xlu0 %v2918
    %v2920 = vpop.xlane.xlu0 %2919
    %v2921 = vsel %vm1689, %v2743, 0.0
    %2922 = vadd.xlane.f32.xlu0 %v2921
    %v2923 = vpop.xlane.xlu0 %2922
    %v2924 = vsel %vm1676, %v2744, 0.0
    %2925 = vadd.xlane.f32.xlu0 %v2924
    %v2926 = vpop.xlane.xlu0 %2925
    %v2927 = vsel %vm1676, %v2745, 0.0
    %2928 = vadd.xlane.f32.xlu0 %v2927
    %v2929 = vpop.xlane.xlu0 %2928
    %v2930 = vsel %vm1676, %v2746, 0.0
    %2931 = vadd.xlane.f32.xlu0 %v2930
    %v2932 = vpop.xlane.xlu0 %2931
    %v2933 = vsel %vm1676, %v2747, 0.0
    %2934 = vadd.xlane.f32.xlu0 %v2933
    %v2935 = vpop.xlane.xlu0 %2934
    %v2936 = vsel %vm1689, %v2748, 0.0
    %2937 = vadd.xlane.f32.xlu0 %v2936
    %v2938 = vpop.xlane.xlu0 %2937
    %v2939 = vsel %vm1676, %v2749, 0.0
    %2940 = vadd.xlane.f32.xlu0 %v2939
    %v2941 = vpop.xlane.xlu0 %2940
    %v2942 = vsel %vm1676, %v2750, 0.0
    %2943 = vadd.xlane.f32.xlu0 %v2942
    %v2944 = vpop.xlane.xlu0 %2943
    %v2945 = vsel %vm1676, %v2751, 0.0
    %2946 = vadd.xlane.f32.xlu0 %v2945
    %v2947 = vpop.xlane.xlu0 %2946
    %v2948 = vsel %vm1676, %v2752, 0.0
    %2949 = vadd.xlane.f32.xlu0 %v2948
    %v2950 = vpop.xlane.xlu0 %2949
    %v2951 = vsel %vm1689, %v2753, 0.0
    %2952 = vadd.xlane.f32.xlu0 %v2951
    %v2953 = vpop.xlane.xlu0 %2952
    %v2954 = vsel %vm1676, %v2754, 0.0
    %2955 = vadd.xlane.f32.xlu0 %v2954
    %v2956 = vpop.xlane.xlu0 %2955
    %v2957 = vsel %vm1676, %v2755, 0.0
    %2958 = vadd.xlane.f32.xlu0 %v2957
    %v2959 = vpop.xlane.xlu0 %2958
    %v2960 = vsel %vm1676, %v2756, 0.0
    %2961 = vadd.xlane.f32.xlu0 %v2960
    %v2962 = vpop.xlane.xlu0 %2961
    %v2963 = vsel %vm1676, %v2757, 0.0
    %2964 = vadd.xlane.f32.xlu0 %v2963
    %v2965 = vpop.xlane.xlu0 %2964
    %v2966 = vsel %vm1689, %v2758, 0.0
    %2967 = vadd.xlane.f32.xlu0 %v2966
    %v2968 = vpop.xlane.xlu0 %2967
    %v2969 = vsel %vm1676, %v2759, 0.0
    %2970 = vadd.xlane.f32.xlu0 %v2969
    %v2971 = vpop.xlane.xlu0 %2970
    %v2972 = vsel %vm1676, %v2760, 0.0
    %2973 = vadd.xlane.f32.xlu0 %v2972
    %v2974 = vpop.xlane.xlu0 %2973
    %v2975 = vsel %vm1676, %v2761, 0.0
    %2976 = vadd.xlane.f32.xlu0 %v2975
    %v2977 = vpop.xlane.xlu0 %2976
    %v2978 = vsel %vm1676, %v2762, 0.0
    %2979 = vadd.xlane.f32.xlu0 %v2978
    %v2980 = vpop.xlane.xlu0 %2979
    %v2981 = vsel %vm1689, %v2763, 0.0
    %2982 = vadd.xlane.f32.xlu0 %v2981
    %v2983 = vpop.xlane.xlu0 %2982
    %v2984 = vsel %vm1676, %v2764, 0.0
    %2985 = vadd.xlane.f32.xlu0 %v2984
    %v2986 = vpop.xlane.xlu0 %2985
    %v2987 = vsel %vm1676, %v2765, 0.0
    %2988 = vadd.xlane.f32.xlu0 %v2987
    %v2989 = vpop.xlane.xlu0 %2988
    %v2990 = vsel %vm1676, %v2766, 0.0
    %2991 = vadd.xlane.f32.xlu0 %v2990
    %v2992 = vpop.xlane.xlu0 %2991
    %v2993 = vsel %vm1676, %v2767, 0.0
    %2994 = vadd.xlane.f32.xlu0 %v2993
    %v2995 = vpop.xlane.xlu0 %2994
    %v2996 = vsel %vm1689, %v2768, 0.0
    %2997 = vadd.xlane.f32.xlu0 %v2996
    %v2998 = vpop.xlane.xlu0 %2997
    %v2999 = vsel %vm1676, %v2769, 0.0
    %3000 = vadd.xlane.f32.xlu0 %v2999
    %v3001 = vpop.xlane.xlu0 %3000
    %v3002 = vsel %vm1676, %v2770, 0.0
    %3003 = vadd.xlane.f32.xlu0 %v3002
    %v3004 = vpop.xlane.xlu0 %3003
    %v3005 = vsel %vm1676, %v2771, 0.0
    %3006 = vadd.xlane.f32.xlu0 %v3005
    %v3007 = vpop.xlane.xlu0 %3006
    %v3008 = vsel %vm1676, %v2772, 0.0
    %3009 = vadd.xlane.f32.xlu0 %v3008
    %v3010 = vpop.xlane.xlu0 %3009
    %v3011 = vsel %vm1689, %v2773, 0.0
    %3012 = vadd.xlane.f32.xlu0 %v3011
    %v3013 = vpop.xlane.xlu0 %3012
    %v3014 = vstv %s2513
    %v3015 = vmul.f32 %v3014, %v2776
    %v3016 = vmul.f32 %v3014, %v2779
    %v3017 = vmul.f32 %v3014, %v2782
    %v3018 = vmul.f32 %v3014, %v2785
    %v3019 = vmul.f32 %v3014, %v2788
    %v3020 = vmul.f32 %v3014, %v2791
    %v3021 = vmul.f32 %v3014, %v2794
    %v3022 = vmul.f32 %v3014, %v2797
    %v3023 = vmul.f32 %v3014, %v2800
    %v3024 = vmul.f32 %v3014, %v2803
    %v3025 = vmul.f32 %v3014, %v2806
    %v3026 = vmul.f32 %v3014, %v2809
    %v3027 = vmul.f32 %v3014, %v2812
    %v3028 = vmul.f32 %v3014, %v2815
    %v3029 = vmul.f32 %v3014, %v2818
    %v3030 = vmul.f32 %v3014, %v2821
    %v3031 = vmul.f32 %v3014, %v2824
    %v3032 = vmul.f32 %v3014, %v2827
    %v3033 = vmul.f32 %v3014, %v2830
    %v3034 = vmul.f32 %v3014, %v2833
    %v3035 = vmul.f32 %v3014, %v2836
    %v3036 = vmul.f32 %v3014, %v2839
    %v3037 = vmul.f32 %v3014, %v2842
    %v3038 = vmul.f32 %v3014, %v2845
    %v3039 = vmul.f32 %v3014, %v2848
    %v3040 = vmul.f32 %v3014, %v2851
    %v3041 = vmul.f32 %v3014, %v2854
    %v3042 = vmul.f32 %v3014, %v2857
    %v3043 = vmul.f32 %v3014, %v2860
    %v3044 = vmul.f32 %v3014, %v2863
    %v3045 = vmul.f32 %v3014, %v2866
    %v3046 = vmul.f32 %v3014, %v2869
    %v3047 = vmul.f32 %v3014, %v2872
    %v3048 = vmul.f32 %v3014, %v2875
    %v3049 = vmul.f32 %v3014, %v2878
    %v3050 = vmul.f32 %v3014, %v2881
    %v3051 = vmul.f32 %v3014, %v2884
    %v3052 = vmul.f32 %v3014, %v2887
    %v3053 = vmul.f32 %v3014, %v2890
    %v3054 = vmul.f32 %v3014, %v2893
    %v3055 = vmul.f32 %v3014, %v2896
    %v3056 = vmul.f32 %v3014, %v2899
    %v3057 = vmul.f32 %v3014, %v2902
    %v3058 = vmul.f32 %v3014, %v2905
    %v3059 = vmul.f32 %v3014, %v2908
    %v3060 = vmul.f32 %v3014, %v2911
    %v3061 = vmul.f32 %v3014, %v2914
    %v3062 = vmul.f32 %v3014, %v2917
    %v3063 = vmul.f32 %v3014, %v2920
    %v3064 = vmul.f32 %v3014, %v2923
    %v3065 = vmul.f32 %v3014, %v2926
    %v3066 = vmul.f32 %v3014, %v2929
    %v3067 = vmul.f32 %v3014, %v2932
    %v3068 = vmul.f32 %v3014, %v2935
    %v3069 = vmul.f32 %v3014, %v2938
    %v3070 = vmul.f32 %v3014, %v2941
    %v3071 = vmul.f32 %v3014, %v2944
    %v3072 = vmul.f32 %v3014, %v2947
    %v3073 = vmul.f32 %v3014, %v2950
    %v3074 = vmul.f32 %v3014, %v2953
    %v3075 = vmul.f32 %v3014, %v2956
    %v3076 = vmul.f32 %v3014, %v2959
    %v3077 = vmul.f32 %v3014, %v2962
    %v3078 = vmul.f32 %v3014, %v2965
    %v3079 = vmul.f32 %v3014, %v2968
    %v3080 = vmul.f32 %v3014, %v2971
    %v3081 = vmul.f32 %v3014, %v2974
    %v3082 = vmul.f32 %v3014, %v2977
    %v3083 = vmul.f32 %v3014, %v2980
    %v3084 = vmul.f32 %v3014, %v2983
    %v3085 = vmul.f32 %v3014, %v2986
    %v3086 = vmul.f32 %v3014, %v2989
    %v3087 = vmul.f32 %v3014, %v2992
    %v3088 = vmul.f32 %v3014, %v2995
    %v3089 = vmul.f32 %v3014, %v2998
    %v3090 = vmul.f32 %v3014, %v3001
    %v3091 = vmul.f32 %v3014, %v3004
    %v3092 = vmul.f32 %v3014, %v3007
    %v3093 = vmul.f32 %v3014, %v3010
    %v3094 = vmul.f32 %v3014, %v3013
    %v3175 = vlaneseq
    %v3176 = vshrl.u32 %v3175, 7
    %v3177 = vsub.s32 %v1410, %v3176
    %v3178 = vrot.slane %v3015, %v3177
    %v3179 = vlaneseq
    %v3180 = vshrl.u32 %v3179, 7
    %v3181 = vsub.s32 %v2083, %v3180
    %v3182 = vrot.slane %v3016, %v3181
    %v3183 = vsel %vm2088, %v3182, %v3178
    %v3184 = vlaneseq
    %v3185 = vshrl.u32 %v3184, 7
    %v3186 = vsub.s32 %v2090, %v3185
    %v3187 = vrot.slane %v3017, %v3186
    %v3188 = vsel %vm2095, %v3187, %v3183
    %v3189 = vlaneseq
    %v3190 = vshrl.u32 %v3189, 7
    %v3191 = vsub.s32 %v2097, %v3190
    %v3192 = vrot.slane %v3018, %v3191
    %v3193 = vsel %vm2102, %v3192, %v3188
    %v3194 = vlaneseq
    %v3195 = vshrl.u32 %v3194, 7
    %v3196 = vsub.s32 %v2104, %v3195
    %v3197 = vrot.slane %v3019, %v3196
    %v3198 = vsel %vm2109, %v3197, %v3193
    %v3199 = vlaneseq
    %v3200 = vshrl.u32 %v3199, 7
    %v3201 = vsub.s32 %v1410, %v3200
    %v3202 = vrot.slane %v3020, %v3201
    %v3203 = vlaneseq
    %v3204 = vshrl.u32 %v3203, 7
    %v3205 = vsub.s32 %v2083, %v3204
    %v3206 = vrot.slane %v3021, %v3205
    %v3207 = vsel %vm2088, %v3206, %v3202
    %v3208 = vlaneseq
    %v3209 = vshrl.u32 %v3208, 7
    %v3210 = vsub.s32 %v2090, %v3209
    %v3211 = vrot.slane %v3022, %v3210
    %v3212 = vsel %vm2095, %v3211, %v3207
    %v3213 = vlaneseq
    %v3214 = vshrl.u32 %v3213, 7
    %v3215 = vsub.s32 %v2097, %v3214
    %v3216 = vrot.slane %v3023, %v3215
    %v3217 = vsel %vm2102, %v3216, %v3212
    %v3218 = vlaneseq
    %v3219 = vshrl.u32 %v3218, 7
    %v3220 = vsub.s32 %v2104, %v3219
    %v3221 = vrot.slane %v3024, %v3220
    %v3222 = vsel %vm2109, %v3221, %v3217
    %v3223 = vlaneseq
    %v3224 = vshrl.u32 %v3223, 7
    %v3225 = vsub.s32 %v1410, %v3224
    %v3226 = vrot.slane %v3025, %v3225
    %v3227 = vlaneseq
    %v3228 = vshrl.u32 %v3227, 7
    %v3229 = vsub.s32 %v2083, %v3228
    %v3230 = vrot.slane %v3026, %v3229
    %v3231 = vsel %vm2088, %v3230, %v3226
    %v3232 = vlaneseq
    %v3233 = vshrl.u32 %v3232, 7
    %v3234 = vsub.s32 %v2090, %v3233
    %v3235 = vrot.slane %v3027, %v3234
    %v3236 = vsel %vm2095, %v3235, %v3231
    %v3237 = vlaneseq
    %v3238 = vshrl.u32 %v3237, 7
    %v3239 = vsub.s32 %v2097, %v3238
    %v3240 = vrot.slane %v3028, %v3239
    %v3241 = vsel %vm2102, %v3240, %v3236
    %v3242 = vlaneseq
    %v3243 = vshrl.u32 %v3242, 7
    %v3244 = vsub.s32 %v2104, %v3243
    %v3245 = vrot.slane %v3029, %v3244
    %v3246 = vsel %vm2109, %v3245, %v3241
    %v3247 = vlaneseq
    %v3248 = vshrl.u32 %v3247, 7
    %v3249 = vsub.s32 %v1410, %v3248
    %v3250 = vrot.slane %v3030, %v3249
    %v3251 = vlaneseq
    %v3252 = vshrl.u32 %v3251, 7
    %v3253 = vsub.s32 %v2083, %v3252
    %v3254 = vrot.slane %v3031, %v3253
    %v3255 = vsel %vm2088, %v3254, %v3250
    %v3256 = vlaneseq
    %v3257 = vshrl.u32 %v3256, 7
    %v3258 = vsub.s32 %v2090, %v3257
    %v3259 = vrot.slane %v3032, %v3258
    %v3260 = vsel %vm2095, %v3259, %v3255
    %v3261 = vlaneseq
    %v3262 = vshrl.u32 %v3261, 7
    %v3263 = vsub.s32 %v2097, %v3262
    %v3264 = vrot.slane %v3033, %v3263
    %v3265 = vsel %vm2102, %v3264, %v3260
    %v3266 = vlaneseq
    %v3267 = vshrl.u32 %v3266, 7
    %v3268 = vsub.s32 %v2104, %v3267
    %v3269 = vrot.slane %v3034, %v3268
    %v3270 = vsel %vm2109, %v3269, %v3265
    %v3271 = vlaneseq
    %v3272 = vshrl.u32 %v3271, 7
    %v3273 = vsub.s32 %v1410, %v3272
    %v3274 = vrot.slane %v3035, %v3273
    %v3275 = vlaneseq
    %v3276 = vshrl.u32 %v3275, 7
    %v3277 = vsub.s32 %v2083, %v3276
    %v3278 = vrot.slane %v3036, %v3277
    %v3279 = vsel %vm2088, %v3278, %v3274
    %v3280 = vlaneseq
    %v3281 = vshrl.u32 %v3280, 7
    %v3282 = vsub.s32 %v2090, %v3281
    %v3283 = vrot.slane %v3037, %v3282
    %v3284 = vsel %vm2095, %v3283, %v3279
    %v3285 = vlaneseq
    %v3286 = vshrl.u32 %v3285, 7
    %v3287 = vsub.s32 %v2097, %v3286
    %v3288 = vrot.slane %v3038, %v3287
    %v3289 = vsel %vm2102, %v3288, %v3284
    %v3290 = vlaneseq
    %v3291 = vshrl.u32 %v3290, 7
    %v3292 = vsub.s32 %v2104, %v3291
    %v3293 = vrot.slane %v3039, %v3292
    %v3294 = vsel %vm2109, %v3293, %v3289
    %v3295 = vlaneseq
    %v3296 = vshrl.u32 %v3295, 7
    %v3297 = vsub.s32 %v1410, %v3296
    %v3298 = vrot.slane %v3040, %v3297
    %v3299 = vlaneseq
    %v3300 = vshrl.u32 %v3299, 7
    %v3301 = vsub.s32 %v2083, %v3300
    %v3302 = vrot.slane %v3041, %v3301
    %v3303 = vsel %vm2088, %v3302, %v3298
    %v3304 = vlaneseq
    %v3305 = vshrl.u32 %v3304, 7
    %v3306 = vsub.s32 %v2090, %v3305
    %v3307 = vrot.slane %v3042, %v3306
    %v3308 = vsel %vm2095, %v3307, %v3303
    %v3309 = vlaneseq
    %v3310 = vshrl.u32 %v3309, 7
    %v3311 = vsub.s32 %v2097, %v3310
    %v3312 = vrot.slane %v3043, %v3311
    %v3313 = vsel %vm2102, %v3312, %v3308
    %v3314 = vlaneseq
    %v3315 = vshrl.u32 %v3314, 7
    %v3316 = vsub.s32 %v2104, %v3315
    %v3317 = vrot.slane %v3044, %v3316
    %v3318 = vsel %vm2109, %v3317, %v3313
    %v3319 = vlaneseq
    %v3320 = vshrl.u32 %v3319, 7
    %v3321 = vsub.s32 %v1410, %v3320
    %v3322 = vrot.slane %v3045, %v3321
    %v3323 = vlaneseq
    %v3324 = vshrl.u32 %v3323, 7
    %v3325 = vsub.s32 %v2083, %v3324
    %v3326 = vrot.slane %v3046, %v3325
    %v3327 = vsel %vm2088, %v3326, %v3322
    %v3328 = vlaneseq
    %v3329 = vshrl.u32 %v3328, 7
    %v3330 = vsub.s32 %v2090, %v3329
    %v3331 = vrot.slane %v3047, %v3330
    %v3332 = vsel %vm2095, %v3331, %v3327
    %v3333 = vlaneseq
    %v3334 = vshrl.u32 %v3333, 7
    %v3335 = vsub.s32 %v2097, %v3334
    %v3336 = vrot.slane %v3048, %v3335
    %v3337 = vsel %vm2102, %v3336, %v3332
    %v3338 = vlaneseq
    %v3339 = vshrl.u32 %v3338, 7
    %v3340 = vsub.s32 %v2104, %v3339
    %v3341 = vrot.slane %v3049, %v3340
    %v3342 = vsel %vm2109, %v3341, %v3337
    %v3343 = vlaneseq
    %v3344 = vshrl.u32 %v3343, 7
    %v3345 = vsub.s32 %v1410, %v3344
    %v3346 = vrot.slane %v3050, %v3345
    %v3347 = vlaneseq
    %v3348 = vshrl.u32 %v3347, 7
    %v3349 = vsub.s32 %v2083, %v3348
    %v3350 = vrot.slane %v3051, %v3349
    %v3351 = vsel %vm2088, %v3350, %v3346
    %v3352 = vlaneseq
    %v3353 = vshrl.u32 %v3352, 7
    %v3354 = vsub.s32 %v2090, %v3353
    %v3355 = vrot.slane %v3052, %v3354
    %v3356 = vsel %vm2095, %v3355, %v3351
    %v3357 = vlaneseq
    %v3358 = vshrl.u32 %v3357, 7
    %v3359 = vsub.s32 %v2097, %v3358
    %v3360 = vrot.slane %v3053, %v3359
    %v3361 = vsel %vm2102, %v3360, %v3356
    %v3362 = vlaneseq
    %v3363 = vshrl.u32 %v3362, 7
    %v3364 = vsub.s32 %v2104, %v3363
    %v3365 = vrot.slane %v3054, %v3364
    %v3366 = vsel %vm2109, %v3365, %v3361
    %v3367 = vlaneseq
    %v3368 = vshrl.u32 %v3367, 7
    %v3369 = vsub.s32 %v1410, %v3368
    %v3370 = vrot.slane %v3055, %v3369
    %v3371 = vlaneseq
    %v3372 = vshrl.u32 %v3371, 7
    %v3373 = vsub.s32 %v2083, %v3372
    %v3374 = vrot.slane %v3056, %v3373
    %v3375 = vsel %vm2088, %v3374, %v3370
    %v3376 = vlaneseq
    %v3377 = vshrl.u32 %v3376, 7
    %v3378 = vsub.s32 %v2090, %v3377
    %v3379 = vrot.slane %v3057, %v3378
    %v3380 = vsel %vm2095, %v3379, %v3375
    %v3381 = vlaneseq
    %v3382 = vshrl.u32 %v3381, 7
    %v3383 = vsub.s32 %v2097, %v3382
    %v3384 = vrot.slane %v3058, %v3383
    %v3385 = vsel %vm2102, %v3384, %v3380
    %v3386 = vlaneseq
    %v3387 = vshrl.u32 %v3386, 7
    %v3388 = vsub.s32 %v2104, %v3387
    %v3389 = vrot.slane %v3059, %v3388
    %v3390 = vsel %vm2109, %v3389, %v3385
    %v3391 = vlaneseq
    %v3392 = vshrl.u32 %v3391, 7
    %v3393 = vsub.s32 %v1410, %v3392
    %v3394 = vrot.slane %v3060, %v3393
    %v3395 = vlaneseq
    %v3396 = vshrl.u32 %v3395, 7
    %v3397 = vsub.s32 %v2083, %v3396
    %v3398 = vrot.slane %v3061, %v3397
    %v3399 = vsel %vm2088, %v3398, %v3394
    %v3400 = vlaneseq
    %v3401 = vshrl.u32 %v3400, 7
    %v3402 = vsub.s32 %v2090, %v3401
    %v3403 = vrot.slane %v3062, %v3402
    %v3404 = vsel %vm2095, %v3403, %v3399
    %v3405 = vlaneseq
    %v3406 = vshrl.u32 %v3405, 7
    %v3407 = vsub.s32 %v2097, %v3406
    %v3408 = vrot.slane %v3063, %v3407
    %v3409 = vsel %vm2102, %v3408, %v3404
    %v3410 = vlaneseq
    %v3411 = vshrl.u32 %v3410, 7
    %v3412 = vsub.s32 %v2104, %v3411
    %v3413 = vrot.slane %v3064, %v3412
    %v3414 = vsel %vm2109, %v3413, %v3409
    %v3415 = vlaneseq
    %v3416 = vshrl.u32 %v3415, 7
    %v3417 = vsub.s32 %v1410, %v3416
    %v3418 = vrot.slane %v3065, %v3417
    %v3419 = vlaneseq
    %v3420 = vshrl.u32 %v3419, 7
    %v3421 = vsub.s32 %v2083, %v3420
    %v3422 = vrot.slane %v3066, %v3421
    %v3423 = vsel %vm2088, %v3422, %v3418
    %v3424 = vlaneseq
    %v3425 = vshrl.u32 %v3424, 7
    %v3426 = vsub.s32 %v2090, %v3425
    %v3427 = vrot.slane %v3067, %v3426
    %v3428 = vsel %vm2095, %v3427, %v3423
    %v3429 = vlaneseq
    %v3430 = vshrl.u32 %v3429, 7
    %v3431 = vsub.s32 %v2097, %v3430
    %v3432 = vrot.slane %v3068, %v3431
    %v3433 = vsel %vm2102, %v3432, %v3428
    %v3434 = vlaneseq
    %v3435 = vshrl.u32 %v3434, 7
    %v3436 = vsub.s32 %v2104, %v3435
    %v3437 = vrot.slane %v3069, %v3436
    %v3438 = vsel %vm2109, %v3437, %v3433
    %v3439 = vlaneseq
    %v3440 = vshrl.u32 %v3439, 7
    %v3441 = vsub.s32 %v1410, %v3440
    %v3442 = vrot.slane %v3070, %v3441
    %v3443 = vlaneseq
    %v3444 = vshrl.u32 %v3443, 7
    %v3445 = vsub.s32 %v2083, %v3444
    %v3446 = vrot.slane %v3071, %v3445
    %v3447 = vsel %vm2088, %v3446, %v3442
    %v3448 = vlaneseq
    %v3449 = vshrl.u32 %v3448, 7
    %v3450 = vsub.s32 %v2090, %v3449
    %v3451 = vrot.slane %v3072, %v3450
    %v3452 = vsel %vm2095, %v3451, %v3447
    %v3453 = vlaneseq
    %v3454 = vshrl.u32 %v3453, 7
    %v3455 = vsub.s32 %v2097, %v3454
    %v3456 = vrot.slane %v3073, %v3455
    %v3457 = vsel %vm2102, %v3456, %v3452
    %v3458 = vlaneseq
    %v3459 = vshrl.u32 %v3458, 7
    %v3460 = vsub.s32 %v2104, %v3459
    %v3461 = vrot.slane %v3074, %v3460
    %v3462 = vsel %vm2109, %v3461, %v3457
    %v3463 = vlaneseq
    %v3464 = vshrl.u32 %v3463, 7
    %v3465 = vsub.s32 %v1410, %v3464
    %v3466 = vrot.slane %v3075, %v3465
    %v3467 = vlaneseq
    %v3468 = vshrl.u32 %v3467, 7
    %v3469 = vsub.s32 %v2083, %v3468
    %v3470 = vrot.slane %v3076, %v3469
    %v3471 = vsel %vm2088, %v3470, %v3466
    %v3472 = vlaneseq
    %v3473 = vshrl.u32 %v3472, 7
    %v3474 = vsub.s32 %v2090, %v3473
    %v3475 = vrot.slane %v3077, %v3474
    %v3476 = vsel %vm2095, %v3475, %v3471
    %v3477 = vlaneseq
    %v3478 = vshrl.u32 %v3477, 7
    %v3479 = vsub.s32 %v2097, %v3478
    %v3480 = vrot.slane %v3078, %v3479
    %v3481 = vsel %vm2102, %v3480, %v3476
    %v3482 = vlaneseq
    %v3483 = vshrl.u32 %v3482, 7
    %v3484 = vsub.s32 %v2104, %v3483
    %v3485 = vrot.slane %v3079, %v3484
    %v3486 = vsel %vm2109, %v3485, %v3481
    %v3487 = vlaneseq
    %v3488 = vshrl.u32 %v3487, 7
    %v3489 = vsub.s32 %v1410, %v3488
    %v3490 = vrot.slane %v3080, %v3489
    %v3491 = vlaneseq
    %v3492 = vshrl.u32 %v3491, 7
    %v3493 = vsub.s32 %v2083, %v3492
    %v3494 = vrot.slane %v3081, %v3493
    %v3495 = vsel %vm2088, %v3494, %v3490
    %v3496 = vlaneseq
    %v3497 = vshrl.u32 %v3496, 7
    %v3498 = vsub.s32 %v2090, %v3497
    %v3499 = vrot.slane %v3082, %v3498
    %v3500 = vsel %vm2095, %v3499, %v3495
    %v3501 = vlaneseq
    %v3502 = vshrl.u32 %v3501, 7
    %v3503 = vsub.s32 %v2097, %v3502
    %v3504 = vrot.slane %v3083, %v3503
    %v3505 = vsel %vm2102, %v3504, %v3500
    %v3506 = vlaneseq
    %v3507 = vshrl.u32 %v3506, 7
    %v3508 = vsub.s32 %v2104, %v3507
    %v3509 = vrot.slane %v3084, %v3508
    %v3510 = vsel %vm2109, %v3509, %v3505
    %v3511 = vlaneseq
    %v3512 = vshrl.u32 %v3511, 7
    %v3513 = vsub.s32 %v1410, %v3512
    %v3514 = vrot.slane %v3085, %v3513
    %v3515 = vlaneseq
    %v3516 = vshrl.u32 %v3515, 7
    %v3517 = vsub.s32 %v2083, %v3516
    %v3518 = vrot.slane %v3086, %v3517
    %v3519 = vsel %vm2088, %v3518, %v3514
    %v3520 = vlaneseq
    %v3521 = vshrl.u32 %v3520, 7
    %v3522 = vsub.s32 %v2090, %v3521
    %v3523 = vrot.slane %v3087, %v3522
    %v3524 = vsel %vm2095, %v3523, %v3519
    %v3525 = vlaneseq
    %v3526 = vshrl.u32 %v3525, 7
    %v3527 = vsub.s32 %v2097, %v3526
    %v3528 = vrot.slane %v3088, %v3527
    %v3529 = vsel %vm2102, %v3528, %v3524
    %v3530 = vlaneseq
    %v3531 = vshrl.u32 %v3530, 7
    %v3532 = vsub.s32 %v2104, %v3531
    %v3533 = vrot.slane %v3089, %v3532
    %v3534 = vsel %vm2109, %v3533, %v3529
    %v3535 = vlaneseq
    %v3536 = vshrl.u32 %v3535, 7
    %v3537 = vsub.s32 %v1410, %v3536
    %v3538 = vrot.slane %v3090, %v3537
    %v3539 = vlaneseq
    %v3540 = vshrl.u32 %v3539, 7
    %v3541 = vsub.s32 %v2083, %v3540
    %v3542 = vrot.slane %v3091, %v3541
    %v3543 = vsel %vm2088, %v3542, %v3538
    %v3544 = vlaneseq
    %v3545 = vshrl.u32 %v3544, 7
    %v3546 = vsub.s32 %v2090, %v3545
    %v3547 = vrot.slane %v3092, %v3546
    %v3548 = vsel %vm2095, %v3547, %v3543
    %v3549 = vlaneseq
    %v3550 = vshrl.u32 %v3549, 7
    %v3551 = vsub.s32 %v2097, %v3550
    %v3552 = vrot.slane %v3093, %v3551
    %v3553 = vsel %vm2102, %v3552, %v3548
    %v3554 = vlaneseq
    %v3555 = vshrl.u32 %v3554, 7
    %v3556 = vsub.s32 %v2104, %v3555
    %v3557 = vrot.slane %v3094, %v3556
    %v3558 = vsel %vm2109, %v3557, %v3553
    %v3559 = vsel %vm2471, %v3222, %v3198
    %v3560 = vsel %vm2473, %v3246, %v3559
    %v3561 = vsel %vm2475, %v3270, %v3560
    %v3562 = vsel %vm2477, %v3294, %v3561
    %v3563 = vsel %vm2479, %v3318, %v3562
    %v3564 = vsel %vm2481, %v3342, %v3563
    %v3565 = vsel %vm2483, %v3366, %v3564
    %v3566 = vsel %vm2471, %v3414, %v3390
    %v3567 = vsel %vm2473, %v3438, %v3566
    %v3568 = vsel %vm2475, %v3462, %v3567
    %v3569 = vsel %vm2477, %v3486, %v3568
    %v3570 = vsel %vm2479, %v3510, %v3569
    %v3571 = vsel %vm2481, %v3534, %v3570
    %v3572 = vsel %vm2483, %v3558, %v3571
    %v3575 = vsub.f32 %v2510, %v3565
    %v3576 = vsub.f32 %v2511, %v3572
    %s3577 = sld [smem:[#allocation8 + $0x1]]
    %v3578 = vstv %s3577
    %v3579 = vmul.f32 %v3578, %v3575
    %v3580 = vmul.f32 %v3578, %v3576
    %v3581 = vtanh.pop %v3579
    %v3582 = vtanh.pop %v3580
    %s3583 = sld [smem:[#allocation6 + $0x1]]
    %v3584 = vsub.f32 %v3581, %v2510
    %v3585 = vsub.f32 %v3582, %v2511
    %v3586 = vstv %s3583
    %v3587 = vmul.f32 %v3586, %v3584
    %v3588 = vmul.f32 %v3586, %v3585
    %v3589 = vadd.f32 %v2510, %v3587
    %v3590 = vadd.f32 %v2511, %v3588
    %v3591 = vsel %vm1411, -1.0, %v3589
    %v3592 = vsel %vm1411, -1.0, %v3590
    %s3593 = sld [smem:[#allocation2 + $0x2]]
    %s3594 = smul.f32 %s3593, 2.0
    %v3597 = vcombine.high %v3591, %v3591
    %v3599 = vunpack.c.l.s4 1966171168
    %v3600 = vunpack.c.0.s8 %v3599
    %v3601 = vlaneseq
    %v3602 = vshrl.u32 %v3601, 7
    %v3603 = vsub.s32 %v3600, %v3602
    %v3604 = vrot.slane %v3591, %v3603
    %v3606 = vunpack.c.l.s4 1966171168
    %v3607 = vunpack.c.0.s8 %v3606
    %v3608 = vlaneseq
    %v3609 = vshrl.u32 %v3608, 7
    %v3610 = vsub.s32 %v3607, %v3609
    %v3611 = vrot.slane %v3597, %v3610
    %v3612 = vcombine.high %v3604, %v3604
    %v3613 = vcombine.high %v3611, %v3611
    %v3615 = vunpack.c.l.s4 1966171168
    %v3616 = vunpack.c.0.s8 %v3615
    %v3617 = vlaneseq
    %v3618 = vshrl.u32 %v3617, 7
    %v3619 = vsub.s32 %v3616, %v3618
    %v3620 = vrot.slane %v3604, %v3619
    %v3622 = vunpack.c.l.s4 1966171168
    %v3623 = vunpack.c.0.s8 %v3622
    %v3624 = vlaneseq
    %v3625 = vshrl.u32 %v3624, 7
    %v3626 = vsub.s32 %v3623, %v3625
    %v3627 = vrot.slane %v3611, %v3626
    %v3629 = vunpack.c.l.s4 1966171168
    %v3630 = vunpack.c.0.s8 %v3629
    %v3631 = vlaneseq
    %v3632 = vshrl.u32 %v3631, 7
    %v3633 = vsub.s32 %v3630, %v3632
    %v3634 = vrot.slane %v3612, %v3633
    %v3636 = vunpack.c.l.s4 1966171168
    %v3637 = vunpack.c.0.s8 %v3636
    %v3638 = vlaneseq
    %v3639 = vshrl.u32 %v3638, 7
    %v3640 = vsub.s32 %v3637, %v3639
    %v3641 = vrot.slane %v3613, %v3640
    %v3642 = vcombine.high %v3620, %v3620
    %v3643 = vcombine.high %v3627, %v3627
    %v3644 = vcombine.high %v3634, %v3634
    %v3645 = vcombine.high %v3641, %v3641
    %v3646 = vcombine.high %v3592, %v3592
    %v3648 = vunpack.c.l.s4 1966171168
    %v3649 = vunpack.c.0.s8 %v3648
    %v3650 = vlaneseq
    %v3651 = vshrl.u32 %v3650, 7
    %v3652 = vsub.s32 %v3649, %v3651
    %v3653 = vrot.slane %v3592, %v3652
    %v3655 = vunpack.c.l.s4 1966171168
    %v3656 = vunpack.c.0.s8 %v3655
    %v3657 = vlaneseq
    %v3658 = vshrl.u32 %v3657, 7
    %v3659 = vsub.s32 %v3656, %v3658
    %v3660 = vrot.slane %v3646, %v3659
    %v3661 = vcombine.high %v3653, %v3653
    %v3662 = vcombine.high %v3660, %v3660
    %v3664 = vunpack.c.l.s4 1966171168
    %v3665 = vunpack.c.0.s8 %v3664
    %v3666 = vlaneseq
    %v3667 = vshrl.u32 %v3666, 7
    %v3668 = vsub.s32 %v3665, %v3667
    %v3669 = vrot.slane %v3653, %v3668
    %v3671 = vunpack.c.l.s4 1966171168
    %v3672 = vunpack.c.0.s8 %v3671
    %v3673 = vlaneseq
    %v3674 = vshrl.u32 %v3673, 7
    %v3675 = vsub.s32 %v3672, %v3674
    %v3676 = vrot.slane %v3660, %v3675
    %v3678 = vunpack.c.l.s4 1966171168
    %v3679 = vunpack.c.0.s8 %v3678
    %v3680 = vlaneseq
    %v3681 = vshrl.u32 %v3680, 7
    %v3682 = vsub.s32 %v3679, %v3681
    %v3683 = vrot.slane %v3661, %v3682
    %v3685 = vunpack.c.l.s4 1966171168
    %v3686 = vunpack.c.0.s8 %v3685
    %v3687 = vlaneseq
    %v3688 = vshrl.u32 %v3687, 7
    %v3689 = vsub.s32 %v3686, %v3688
    %v3690 = vrot.slane %v3662, %v3689
    %v3691 = vcombine.high %v3669, %v3669
    %v3692 = vcombine.high %v3676, %v3676
    %v3693 = vcombine.high %v3683, %v3683
    %v3694 = vcombine.high %v3690, %v3690
    %v3695 = vlaneseq
    %v3696 = vshrl.u32 %v3695, 7
    %v3697 = vsub.s32 0, %v3696
    %v3698 = vrot.slane %v3620, %v3697
    %v3699 = vlaneseq
    %v3700 = vshrl.u32 %v3699, 7
    %v3701 = vsub.s32 0, %v3700
    %v3702 = vrot.slane %v3634, %v3701
    %v3703 = vlaneseq
    %v3704 = vshrl.u32 %v3703, 7
    %v3705 = vsub.s32 0, %v3704
    %v3706 = vrot.slane %v3642, %v3705
    %v3707 = vlaneseq
    %v3708 = vshrl.u32 %v3707, 7
    %v3709 = vsub.s32 0, %v3708
    %v3710 = vrot.slane %v3644, %v3709
    %v3711 = vlaneseq
    %v3712 = vshrl.u32 %v3711, 7
    %v3713 = vsub.s32 0, %v3712
    %v3714 = vrot.slane %v3627, %v3713
    %v3715 = vlaneseq
    %v3716 = vshrl.u32 %v3715, 7
    %v3717 = vsub.s32 0, %v3716
    %v3718 = vrot.slane %v3641, %v3717
    %v3719 = vlaneseq
    %v3720 = vshrl.u32 %v3719, 7
    %v3721 = vsub.s32 0, %v3720
    %v3722 = vrot.slane %v3643, %v3721
    %v3723 = vlaneseq
    %v3724 = vshrl.u32 %v3723, 7
    %v3725 = vsub.s32 0, %v3724
    %v3726 = vrot.slane %v3645, %v3725
    %v3727 = vlaneseq
    %v3728 = vshrl.u32 %v3727, 7
    %v3729 = vsub.s32 0, %v3728
    %v3730 = vrot.slane %v3669, %v3729
    %v3731 = vlaneseq
    %v3732 = vshrl.u32 %v3731, 7
    %v3733 = vsub.s32 0, %v3732
    %v3734 = vrot.slane %v3683, %v3733
    %v3735 = vlaneseq
    %v3736 = vshrl.u32 %v3735, 7
    %v3737 = vsub.s32 0, %v3736
    %v3738 = vrot.slane %v3691, %v3737
    %v3739 = vlaneseq
    %v3740 = vshrl.u32 %v3739, 7
    %v3741 = vsub.s32 0, %v3740
    %v3742 = vrot.slane %v3693, %v3741
    %v3743 = vlaneseq
    %v3744 = vshrl.u32 %v3743, 7
    %v3745 = vsub.s32 0, %v3744
    %v3746 = vrot.slane %v3676, %v3745
    %v3747 = vlaneseq
    %v3748 = vshrl.u32 %v3747, 7
    %v3749 = vsub.s32 0, %v3748
    %v3750 = vrot.slane %v3690, %v3749
    %v3751 = vlaneseq
    %v3752 = vshrl.u32 %v3751, 7
    %v3753 = vsub.s32 0, %v3752
    %v3754 = vrot.slane %v3692, %v3753
    %v3755 = vlaneseq
    %v3756 = vshrl.u32 %v3755, 7
    %v3757 = vsub.s32 0, %v3756
    %v3758 = vrot.slane %v3694, %v3757
    %v3775 = vmul.f32 %v218, %v3698
    %v3776 = vmul.f32 %v221, %v3698
    %v3777 = vmul.f32 %v226, %v3698
    %v3778 = vmul.f32 %v229, %v3698
    %v3779 = vmul.f32 %v234, %v3698
    %v3780 = vmul.f32 %v296, %v3702
    %v3781 = vmul.f32 %v299, %v3702
    %v3782 = vmul.f32 %v304, %v3702
    %v3783 = vmul.f32 %v307, %v3702
    %v3784 = vmul.f32 %v312, %v3702
    %v3785 = vmul.f32 %v374, %v3706
    %v3786 = vmul.f32 %v377, %v3706
    %v3787 = vmul.f32 %v382, %v3706
    %v3788 = vmul.f32 %v385, %v3706
    %v3789 = vmul.f32 %v390, %v3706
    %v3790 = vmul.f32 %v452, %v3710
    %v3791 = vmul.f32 %v455, %v3710
    %v3792 = vmul.f32 %v460, %v3710
    %v3793 = vmul.f32 %v463, %v3710
    %v3794 = vmul.f32 %v468, %v3710
    %v3795 = vmul.f32 %v530, %v3714
    %v3796 = vmul.f32 %v533, %v3714
    %v3797 = vmul.f32 %v538, %v3714
    %v3798 = vmul.f32 %v541, %v3714
    %v3799 = vmul.f32 %v546, %v3714
    %v3800 = vmul.f32 %v608, %v3718
    %v3801 = vmul.f32 %v611, %v3718
    %v3802 = vmul.f32 %v616, %v3718
    %v3803 = vmul.f32 %v619, %v3718
    %v3804 = vmul.f32 %v624, %v3718
    %v3805 = vmul.f32 %v686, %v3722
    %v3806 = vmul.f32 %v689, %v3722
    %v3807 = vmul.f32 %v694, %v3722
    %v3808 = vmul.f32 %v697, %v3722
    %v3809 = vmul.f32 %v702, %v3722
    %v3810 = vmul.f32 %v764, %v3726
    %v3811 = vmul.f32 %v767, %v3726
    %v3812 = vmul.f32 %v772, %v3726
    %v3813 = vmul.f32 %v775, %v3726
    %v3814 = vmul.f32 %v780, %v3726
    %v3815 = vmul.f32 %v842, %v3730
    %v3816 = vmul.f32 %v845, %v3730
    %v3817 = vmul.f32 %v850, %v3730
    %v3818 = vmul.f32 %v853, %v3730
    %v3819 = vmul.f32 %v858, %v3730
    %v3820 = vmul.f32 %v920, %v3734
    %v3821 = vmul.f32 %v923, %v3734
    %v3822 = vmul.f32 %v928, %v3734
    %v3823 = vmul.f32 %v931, %v3734
    %v3824 = vmul.f32 %v936, %v3734
    %v3825 = vmul.f32 %v998, %v3738
    %v3826 = vmul.f32 %v1001, %v3738
    %v3827 = vmul.f32 %v1006, %v3738
    %v3828 = vmul.f32 %v1009, %v3738
    %v3829 = vmul.f32 %v1014, %v3738
    %v3830 = vmul.f32 %v1076, %v3742
    %v3831 = vmul.f32 %v1079, %v3742
    %v3832 = vmul.f32 %v1084, %v3742
    %v3833 = vmul.f32 %v1087, %v3742
    %v3834 = vmul.f32 %v1092, %v3742
    %v3835 = vmul.f32 %v1154, %v3746
    %v3836 = vmul.f32 %v1157, %v3746
    %v3837 = vmul.f32 %v1162, %v3746
    %v3838 = vmul.f32 %v1165, %v3746
    %v3839 = vmul.f32 %v1170, %v3746
    %v3840 = vmul.f32 %v1232, %v3750
    %v3841 = vmul.f32 %v1235, %v3750
    %v3842 = vmul.f32 %v1240, %v3750
    %v3843 = vmul.f32 %v1243, %v3750
    %v3844 = vmul.f32 %v1248, %v3750
    %v3845 = vmul.f32 %v1310, %v3754
    %v3846 = vmul.f32 %v1313, %v3754
    %v3847 = vmul.f32 %v1318, %v3754
    %v3848 = vmul.f32 %v1321, %v3754
    %v3849 = vmul.f32 %v1326, %v3754
    %v3850 = vmul.f32 %v1388, %v3758
    %v3851 = vmul.f32 %v1391, %v3758
    %v3852 = vmul.f32 %v1396, %v3758
    %v3853 = vmul.f32 %v1399, %v3758
    %v3854 = vmul.f32 %v1404, %v3758
    %v3855 = vsel %vm1676, %v3775, 0.0
    %3856 = vadd.xlane.f32.xlu0 %v3855
    %v3857 = vpop.xlane.xlu0 %3856
    %v3858 = vsel %vm1676, %v3776, 0.0
    %3859 = vadd.xlane.f32.xlu0 %v3858
    %v3860 = vpop.xlane.xlu0 %3859
    %v3861 = vsel %vm1676, %v3777, 0.0
    %3862 = vadd.xlane.f32.xlu0 %v3861
    %v3863 = vpop.xlane.xlu0 %3862
    %v3864 = vsel %vm1676, %v3778, 0.0
    %3865 = vadd.xlane.f32.xlu0 %v3864
    %v3866 = vpop.xlane.xlu0 %3865
    %v3867 = vsel %vm1689, %v3779, 0.0
    %3868 = vadd.xlane.f32.xlu0 %v3867
    %v3869 = vpop.xlane.xlu0 %3868
    %v3870 = vsel %vm1676, %v3780, 0.0
    %3871 = vadd.xlane.f32.xlu0 %v3870
    %v3872 = vpop.xlane.xlu0 %3871
    %v3873 = vsel %vm1676, %v3781, 0.0
    %3874 = vadd.xlane.f32.xlu0 %v3873
    %v3875 = vpop.xlane.xlu0 %3874
    %v3876 = vsel %vm1676, %v3782, 0.0
    %3877 = vadd.xlane.f32.xlu0 %v3876
    %v3878 = vpop.xlane.xlu0 %3877
    %v3879 = vsel %vm1676, %v3783, 0.0
    %3880 = vadd.xlane.f32.xlu0 %v3879
    %v3881 = vpop.xlane.xlu0 %3880
    %v3882 = vsel %vm1689, %v3784, 0.0
    %3883 = vadd.xlane.f32.xlu0 %v3882
    %v3884 = vpop.xlane.xlu0 %3883
    %v3885 = vsel %vm1676, %v3785, 0.0
    %3886 = vadd.xlane.f32.xlu0 %v3885
    %v3887 = vpop.xlane.xlu0 %3886
    %v3888 = vsel %vm1676, %v3786, 0.0
    %3889 = vadd.xlane.f32.xlu0 %v3888
    %v3890 = vpop.xlane.xlu0 %3889
    %v3891 = vsel %vm1676, %v3787, 0.0
    %3892 = vadd.xlane.f32.xlu0 %v3891
    %v3893 = vpop.xlane.xlu0 %3892
    %v3894 = vsel %vm1676, %v3788, 0.0
    %3895 = vadd.xlane.f32.xlu0 %v3894
    %v3896 = vpop.xlane.xlu0 %3895
    %v3897 = vsel %vm1689, %v3789, 0.0
    %3898 = vadd.xlane.f32.xlu0 %v3897
    %v3899 = vpop.xlane.xlu0 %3898
    %v3900 = vsel %vm1676, %v3790, 0.0
    %3901 = vadd.xlane.f32.xlu0 %v3900
    %v3902 = vpop.xlane.xlu0 %3901
    %v3903 = vsel %vm1676, %v3791, 0.0
    %3904 = vadd.xlane.f32.xlu0 %v3903
    %v3905 = vpop.xlane.xlu0 %3904
    %v3906 = vsel %vm1676, %v3792, 0.0
    %3907 = vadd.xlane.f32.xlu0 %v3906
    %v3908 = vpop.xlane.xlu0 %3907
    %v3909 = vsel %vm1676, %v3793, 0.0
    %3910 = vadd.xlane.f32.xlu0 %v3909
    %v3911 = vpop.xlane.xlu0 %3910
    %v3912 = vsel %vm1689, %v3794, 0.0
    %3913 = vadd.xlane.f32.xlu0 %v3912
    %v3914 = vpop.xlane.xlu0 %3913
    %v3915 = vsel %vm1676, %v3795, 0.0
    %3916 = vadd.xlane.f32.xlu0 %v3915
    %v3917 = vpop.xlane.xlu0 %3916
    %v3918 = vsel %vm1676, %v3796, 0.0
    %3919 = vadd.xlane.f32.xlu0 %v3918
    %v3920 = vpop.xlane.xlu0 %3919
    %v3921 = vsel %vm1676, %v3797, 0.0
    %3922 = vadd.xlane.f32.xlu0 %v3921
    %v3923 = vpop.xlane.xlu0 %3922
    %v3924 = vsel %vm1676, %v3798, 0.0
    %3925 = vadd.xlane.f32.xlu0 %v3924
    %v3926 = vpop.xlane.xlu0 %3925
    %v3927 = vsel %vm1689, %v3799, 0.0
    %3928 = vadd.xlane.f32.xlu0 %v3927
    %v3929 = vpop.xlane.xlu0 %3928
    %v3930 = vsel %vm1676, %v3800, 0.0
    %3931 = vadd.xlane.f32.xlu0 %v3930
    %v3932 = vpop.xlane.xlu0 %3931
    %v3933 = vsel %vm1676, %v3801, 0.0
    %3934 = vadd.xlane.f32.xlu0 %v3933
    %v3935 = vpop.xlane.xlu0 %3934
    %v3936 = vsel %vm1676, %v3802, 0.0
    %3937 = vadd.xlane.f32.xlu0 %v3936
    %v3938 = vpop.xlane.xlu0 %3937
    %v3939 = vsel %vm1676, %v3803, 0.0
    %3940 = vadd.xlane.f32.xlu0 %v3939
    %v3941 = vpop.xlane.xlu0 %3940
    %v3942 = vsel %vm1689, %v3804, 0.0
    %3943 = vadd.xlane.f32.xlu0 %v3942
    %v3944 = vpop.xlane.xlu0 %3943
    %v3945 = vsel %vm1676, %v3805, 0.0
    %3946 = vadd.xlane.f32.xlu0 %v3945
    %v3947 = vpop.xlane.xlu0 %3946
    %v3948 = vsel %vm1676, %v3806, 0.0
    %3949 = vadd.xlane.f32.xlu0 %v3948
    %v3950 = vpop.xlane.xlu0 %3949
    %v3951 = vsel %vm1676, %v3807, 0.0
    %3952 = vadd.xlane.f32.xlu0 %v3951
    %v3953 = vpop.xlane.xlu0 %3952
    %v3954 = vsel %vm1676, %v3808, 0.0
    %3955 = vadd.xlane.f32.xlu0 %v3954
    %v3956 = vpop.xlane.xlu0 %3955
    %v3957 = vsel %vm1689, %v3809, 0.0
    %3958 = vadd.xlane.f32.xlu0 %v3957
    %v3959 = vpop.xlane.xlu0 %3958
    %v3960 = vsel %vm1676, %v3810, 0.0
    %3961 = vadd.xlane.f32.xlu0 %v3960
    %v3962 = vpop.xlane.xlu0 %3961
    %v3963 = vsel %vm1676, %v3811, 0.0
    %3964 = vadd.xlane.f32.xlu0 %v3963
    %v3965 = vpop.xlane.xlu0 %3964
    %v3966 = vsel %vm1676, %v3812, 0.0
    %3967 = vadd.xlane.f32.xlu0 %v3966
    %v3968 = vpop.xlane.xlu0 %3967
    %v3969 = vsel %vm1676, %v3813, 0.0
    %3970 = vadd.xlane.f32.xlu0 %v3969
    %v3971 = vpop.xlane.xlu0 %3970
    %v3972 = vsel %vm1689, %v3814, 0.0
    %3973 = vadd.xlane.f32.xlu0 %v3972
    %v3974 = vpop.xlane.xlu0 %3973
    %v3975 = vsel %vm1676, %v3815, 0.0
    %3976 = vadd.xlane.f32.xlu0 %v3975
    %v3977 = vpop.xlane.xlu0 %3976
    %v3978 = vsel %vm1676, %v3816, 0.0
    %3979 = vadd.xlane.f32.xlu0 %v3978
    %v3980 = vpop.xlane.xlu0 %3979
    %v3981 = vsel %vm1676, %v3817, 0.0
    %3982 = vadd.xlane.f32.xlu0 %v3981
    %v3983 = vpop.xlane.xlu0 %3982
    %v3984 = vsel %vm1676, %v3818, 0.0
    %3985 = vadd.xlane.f32.xlu0 %v3984
    %v3986 = vpop.xlane.xlu0 %3985
    %v3987 = vsel %vm1689, %v3819, 0.0
    %3988 = vadd.xlane.f32.xlu0 %v3987
    %v3989 = vpop.xlane.xlu0 %3988
    %v3990 = vsel %vm1676, %v3820, 0.0
    %3991 = vadd.xlane.f32.xlu0 %v3990
    %v3992 = vpop.xlane.xlu0 %3991
    %v3993 = vsel %vm1676, %v3821, 0.0
    %3994 = vadd.xlane.f32.xlu0 %v3993
    %v3995 = vpop.xlane.xlu0 %3994
    %v3996 = vsel %vm1676, %v3822, 0.0
    %3997 = vadd.xlane.f32.xlu0 %v3996
    %v3998 = vpop.xlane.xlu0 %3997
    %v3999 = vsel %vm1676, %v3823, 0.0
    %4000 = vadd.xlane.f32.xlu0 %v3999
    %v4001 = vpop.xlane.xlu0 %4000
    %v4002 = vsel %vm1689, %v3824, 0.0
    %4003 = vadd.xlane.f32.xlu0 %v4002
    %v4004 = vpop.xlane.xlu0 %4003
    %v4005 = vsel %vm1676, %v3825, 0.0
    %4006 = vadd.xlane.f32.xlu0 %v4005
    %v4007 = vpop.xlane.xlu0 %4006
    %v4008 = vsel %vm1676, %v3826, 0.0
    %4009 = vadd.xlane.f32.xlu0 %v4008
    %v4010 = vpop.xlane.xlu0 %4009
    %v4011 = vsel %vm1676, %v3827, 0.0
    %4012 = vadd.xlane.f32.xlu0 %v4011
    %v4013 = vpop.xlane.xlu0 %4012
    %v4014 = vsel %vm1676, %v3828, 0.0
    %4015 = vadd.xlane.f32.xlu0 %v4014
    %v4016 = vpop.xlane.xlu0 %4015
    %v4017 = vsel %vm1689, %v3829, 0.0
    %4018 = vadd.xlane.f32.xlu0 %v4017
    %v4019 = vpop.xlane.xlu0 %4018
    %v4020 = vsel %vm1676, %v3830, 0.0
    %4021 = vadd.xlane.f32.xlu0 %v4020
    %v4022 = vpop.xlane.xlu0 %4021
    %v4023 = vsel %vm1676, %v3831, 0.0
    %4024 = vadd.xlane.f32.xlu0 %v4023
    %v4025 = vpop.xlane.xlu0 %4024
    %v4026 = vsel %vm1676, %v3832, 0.0
    %4027 = vadd.xlane.f32.xlu0 %v4026
    %v4028 = vpop.xlane.xlu0 %4027
    %v4029 = vsel %vm1676, %v3833, 0.0
    %4030 = vadd.xlane.f32.xlu0 %v4029
    %v4031 = vpop.xlane.xlu0 %4030
    %v4032 = vsel %vm1689, %v3834, 0.0
    %4033 = vadd.xlane.f32.xlu0 %v4032
    %v4034 = vpop.xlane.xlu0 %4033
    %v4035 = vsel %vm1676, %v3835, 0.0
    %4036 = vadd.xlane.f32.xlu0 %v4035
    %v4037 = vpop.xlane.xlu0 %4036
    %v4038 = vsel %vm1676, %v3836, 0.0
    %4039 = vadd.xlane.f32.xlu0 %v4038
    %v4040 = vpop.xlane.xlu0 %4039
    %v4041 = vsel %vm1676, %v3837, 0.0
    %4042 = vadd.xlane.f32.xlu0 %v4041
    %v4043 = vpop.xlane.xlu0 %4042
    %v4044 = vsel %vm1676, %v3838, 0.0
    %4045 = vadd.xlane.f32.xlu0 %v4044
    %v4046 = vpop.xlane.xlu0 %4045
    %v4047 = vsel %vm1689, %v3839, 0.0
    %4048 = vadd.xlane.f32.xlu0 %v4047
    %v4049 = vpop.xlane.xlu0 %4048
    %v4050 = vsel %vm1676, %v3840, 0.0
    %4051 = vadd.xlane.f32.xlu0 %v4050
    %v4052 = vpop.xlane.xlu0 %4051
    %v4053 = vsel %vm1676, %v3841, 0.0
    %4054 = vadd.xlane.f32.xlu0 %v4053
    %v4055 = vpop.xlane.xlu0 %4054
    %v4056 = vsel %vm1676, %v3842, 0.0
    %4057 = vadd.xlane.f32.xlu0 %v4056
    %v4058 = vpop.xlane.xlu0 %4057
    %v4059 = vsel %vm1676, %v3843, 0.0
    %4060 = vadd.xlane.f32.xlu0 %v4059
    %v4061 = vpop.xlane.xlu0 %4060
    %v4062 = vsel %vm1689, %v3844, 0.0
    %4063 = vadd.xlane.f32.xlu0 %v4062
    %v4064 = vpop.xlane.xlu0 %4063
    %v4065 = vsel %vm1676, %v3845, 0.0
    %4066 = vadd.xlane.f32.xlu0 %v4065
    %v4067 = vpop.xlane.xlu0 %4066
    %v4068 = vsel %vm1676, %v3846, 0.0
    %4069 = vadd.xlane.f32.xlu0 %v4068
    %v4070 = vpop.xlane.xlu0 %4069
    %v4071 = vsel %vm1676, %v3847, 0.0
    %4072 = vadd.xlane.f32.xlu0 %v4071
    %v4073 = vpop.xlane.xlu0 %4072
    %v4074 = vsel %vm1676, %v3848, 0.0
    %4075 = vadd.xlane.f32.xlu0 %v4074
    %v4076 = vpop.xlane.xlu0 %4075
    %v4077 = vsel %vm1689, %v3849, 0.0
    %4078 = vadd.xlane.f32.xlu0 %v4077
    %v4079 = vpop.xlane.xlu0 %4078
    %v4080 = vsel %vm1676, %v3850, 0.0
    %4081 = vadd.xlane.f32.xlu0 %v4080
    %v4082 = vpop.xlane.xlu0 %4081
    %v4083 = vsel %vm1676, %v3851, 0.0
    %4084 = vadd.xlane.f32.xlu0 %v4083
    %v4085 = vpop.xlane.xlu0 %4084
    %v4086 = vsel %vm1676, %v3852, 0.0
    %4087 = vadd.xlane.f32.xlu0 %v4086
    %v4088 = vpop.xlane.xlu0 %4087
    %v4089 = vsel %vm1676, %v3853, 0.0
    %4090 = vadd.xlane.f32.xlu0 %v4089
    %v4091 = vpop.xlane.xlu0 %4090
    %v4092 = vsel %vm1689, %v3854, 0.0
    %4093 = vadd.xlane.f32.xlu0 %v4092
    %v4094 = vpop.xlane.xlu0 %4093
    %v4095 = vstv %s3594
    %v4096 = vmul.f32 %v4095, %v3857
    %v4097 = vmul.f32 %v4095, %v3860
    %v4098 = vmul.f32 %v4095, %v3863
    %v4099 = vmul.f32 %v4095, %v3866
    %v4100 = vmul.f32 %v4095, %v3869
    %v4101 = vmul.f32 %v4095, %v3872
    %v4102 = vmul.f32 %v4095, %v3875
    %v4103 = vmul.f32 %v4095, %v3878
    %v4104 = vmul.f32 %v4095, %v3881
    %v4105 = vmul.f32 %v4095, %v3884
    %v4106 = vmul.f32 %v4095, %v3887
    %v4107 = vmul.f32 %v4095, %v3890
    %v4108 = vmul.f32 %v4095, %v3893
    %v4109 = vmul.f32 %v4095, %v3896
    %v4110 = vmul.f32 %v4095, %v3899
    %v4111 = vmul.f32 %v4095, %v3902
    %v4112 = vmul.f32 %v4095, %v3905
    %v4113 = vmul.f32 %v4095, %v3908
    %v4114 = vmul.f32 %v4095, %v3911
    %v4115 = vmul.f32 %v4095, %v3914
    %v4116 = vmul.f32 %v4095, %v3917
    %v4117 = vmul.f32 %v4095, %v3920
    %v4118 = vmul.f32 %v4095, %v3923
    %v4119 = vmul.f32 %v4095, %v3926
    %v4120 = vmul.f32 %v4095, %v3929
    %v4121 = vmul.f32 %v4095, %v3932
    %v4122 = vmul.f32 %v4095, %v3935
    %v4123 = vmul.f32 %v4095, %v3938
    %v4124 = vmul.f32 %v4095, %v3941
    %v4125 = vmul.f32 %v4095, %v3944
    %v4126 = vmul.f32 %v4095, %v3947
    %v4127 = vmul.f32 %v4095, %v3950
    %v4128 = vmul.f32 %v4095, %v3953
    %v4129 = vmul.f32 %v4095, %v3956
    %v4130 = vmul.f32 %v4095, %v3959
    %v4131 = vmul.f32 %v4095, %v3962
    %v4132 = vmul.f32 %v4095, %v3965
    %v4133 = vmul.f32 %v4095, %v3968
    %v4134 = vmul.f32 %v4095, %v3971
    %v4135 = vmul.f32 %v4095, %v3974
    %v4136 = vmul.f32 %v4095, %v3977
    %v4137 = vmul.f32 %v4095, %v3980
    %v4138 = vmul.f32 %v4095, %v3983
    %v4139 = vmul.f32 %v4095, %v3986
    %v4140 = vmul.f32 %v4095, %v3989
    %v4141 = vmul.f32 %v4095, %v3992
    %v4142 = vmul.f32 %v4095, %v3995
    %v4143 = vmul.f32 %v4095, %v3998
    %v4144 = vmul.f32 %v4095, %v4001
    %v4145 = vmul.f32 %v4095, %v4004
    %v4146 = vmul.f32 %v4095, %v4007
    %v4147 = vmul.f32 %v4095, %v4010
    %v4148 = vmul.f32 %v4095, %v4013
    %v4149 = vmul.f32 %v4095, %v4016
    %v4150 = vmul.f32 %v4095, %v4019
    %v4151 = vmul.f32 %v4095, %v4022
    %v4152 = vmul.f32 %v4095, %v4025
    %v4153 = vmul.f32 %v4095, %v4028
    %v4154 = vmul.f32 %v4095, %v4031
    %v4155 = vmul.f32 %v4095, %v4034
    %v4156 = vmul.f32 %v4095, %v4037
    %v4157 = vmul.f32 %v4095, %v4040
    %v4158 = vmul.f32 %v4095, %v4043
    %v4159 = vmul.f32 %v4095, %v4046
    %v4160 = vmul.f32 %v4095, %v4049
    %v4161 = vmul.f32 %v4095, %v4052
    %v4162 = vmul.f32 %v4095, %v4055
    %v4163 = vmul.f32 %v4095, %v4058
    %v4164 = vmul.f32 %v4095, %v4061
    %v4165 = vmul.f32 %v4095, %v4064
    %v4166 = vmul.f32 %v4095, %v4067
    %v4167 = vmul.f32 %v4095, %v4070
    %v4168 = vmul.f32 %v4095, %v4073
    %v4169 = vmul.f32 %v4095, %v4076
    %v4170 = vmul.f32 %v4095, %v4079
    %v4171 = vmul.f32 %v4095, %v4082
    %v4172 = vmul.f32 %v4095, %v4085
    %v4173 = vmul.f32 %v4095, %v4088
    %v4174 = vmul.f32 %v4095, %v4091
    %v4175 = vmul.f32 %v4095, %v4094
    %v4256 = vlaneseq
    %v4257 = vshrl.u32 %v4256, 7
    %v4258 = vsub.s32 %v1410, %v4257
    %v4259 = vrot.slane %v4096, %v4258
    %v4260 = vlaneseq
    %v4261 = vshrl.u32 %v4260, 7
    %v4262 = vsub.s32 %v2083, %v4261
    %v4263 = vrot.slane %v4097, %v4262
    %v4264 = vsel %vm2088, %v4263, %v4259
    %v4265 = vlaneseq
    %v4266 = vshrl.u32 %v4265, 7
    %v4267 = vsub.s32 %v2090, %v4266
    %v4268 = vrot.slane %v4098, %v4267
    %v4269 = vsel %vm2095, %v4268, %v4264
    %v4270 = vlaneseq
    %v4271 = vshrl.u32 %v4270, 7
    %v4272 = vsub.s32 %v2097, %v4271
    %v4273 = vrot.slane %v4099, %v4272
    %v4274 = vsel %vm2102, %v4273, %v4269
    %v4275 = vlaneseq
    %v4276 = vshrl.u32 %v4275, 7
    %v4277 = vsub.s32 %v2104, %v4276
    %v4278 = vrot.slane %v4100, %v4277
    %v4279 = vsel %vm2109, %v4278, %v4274
    %v4280 = vlaneseq
    %v4281 = vshrl.u32 %v4280, 7
    %v4282 = vsub.s32 %v1410, %v4281
    %v4283 = vrot.slane %v4101, %v4282
    %v4284 = vlaneseq
    %v4285 = vshrl.u32 %v4284, 7
    %v4286 = vsub.s32 %v2083, %v4285
    %v4287 = vrot.slane %v4102, %v4286
    %v4288 = vsel %vm2088, %v4287, %v4283
    %v4289 = vlaneseq
    %v4290 = vshrl.u32 %v4289, 7
    %v4291 = vsub.s32 %v2090, %v4290
    %v4292 = vrot.slane %v4103, %v4291
    %v4293 = vsel %vm2095, %v4292, %v4288
    %v4294 = vlaneseq
    %v4295 = vshrl.u32 %v4294, 7
    %v4296 = vsub.s32 %v2097, %v4295
    %v4297 = vrot.slane %v4104, %v4296
    %v4298 = vsel %vm2102, %v4297, %v4293
    %v4299 = vlaneseq
    %v4300 = vshrl.u32 %v4299, 7
    %v4301 = vsub.s32 %v2104, %v4300
    %v4302 = vrot.slane %v4105, %v4301
    %v4303 = vsel %vm2109, %v4302, %v4298
    %v4304 = vlaneseq
    %v4305 = vshrl.u32 %v4304, 7
    %v4306 = vsub.s32 %v1410, %v4305
    %v4307 = vrot.slane %v4106, %v4306
    %v4308 = vlaneseq
    %v4309 = vshrl.u32 %v4308, 7
    %v4310 = vsub.s32 %v2083, %v4309
    %v4311 = vrot.slane %v4107, %v4310
    %v4312 = vsel %vm2088, %v4311, %v4307
    %v4313 = vlaneseq
    %v4314 = vshrl.u32 %v4313, 7
    %v4315 = vsub.s32 %v2090, %v4314
    %v4316 = vrot.slane %v4108, %v4315
    %v4317 = vsel %vm2095, %v4316, %v4312
    %v4318 = vlaneseq
    %v4319 = vshrl.u32 %v4318, 7
    %v4320 = vsub.s32 %v2097, %v4319
    %v4321 = vrot.slane %v4109, %v4320
    %v4322 = vsel %vm2102, %v4321, %v4317
    %v4323 = vlaneseq
    %v4324 = vshrl.u32 %v4323, 7
    %v4325 = vsub.s32 %v2104, %v4324
    %v4326 = vrot.slane %v4110, %v4325
    %v4327 = vsel %vm2109, %v4326, %v4322
    %v4328 = vlaneseq
    %v4329 = vshrl.u32 %v4328, 7
    %v4330 = vsub.s32 %v1410, %v4329
    %v4331 = vrot.slane %v4111, %v4330
    %v4332 = vlaneseq
    %v4333 = vshrl.u32 %v4332, 7
    %v4334 = vsub.s32 %v2083, %v4333
    %v4335 = vrot.slane %v4112, %v4334
    %v4336 = vsel %vm2088, %v4335, %v4331
    %v4337 = vlaneseq
    %v4338 = vshrl.u32 %v4337, 7
    %v4339 = vsub.s32 %v2090, %v4338
    %v4340 = vrot.slane %v4113, %v4339
    %v4341 = vsel %vm2095, %v4340, %v4336
    %v4342 = vlaneseq
    %v4343 = vshrl.u32 %v4342, 7
    %v4344 = vsub.s32 %v2097, %v4343
    %v4345 = vrot.slane %v4114, %v4344
    %v4346 = vsel %vm2102, %v4345, %v4341
    %v4347 = vlaneseq
    %v4348 = vshrl.u32 %v4347, 7
    %v4349 = vsub.s32 %v2104, %v4348
    %v4350 = vrot.slane %v4115, %v4349
    %v4351 = vsel %vm2109, %v4350, %v4346
    %v4352 = vlaneseq
    %v4353 = vshrl.u32 %v4352, 7
    %v4354 = vsub.s32 %v1410, %v4353
    %v4355 = vrot.slane %v4116, %v4354
    %v4356 = vlaneseq
    %v4357 = vshrl.u32 %v4356, 7
    %v4358 = vsub.s32 %v2083, %v4357
    %v4359 = vrot.slane %v4117, %v4358
    %v4360 = vsel %vm2088, %v4359, %v4355
    %v4361 = vlaneseq
    %v4362 = vshrl.u32 %v4361, 7
    %v4363 = vsub.s32 %v2090, %v4362
    %v4364 = vrot.slane %v4118, %v4363
    %v4365 = vsel %vm2095, %v4364, %v4360
    %v4366 = vlaneseq
    %v4367 = vshrl.u32 %v4366, 7
    %v4368 = vsub.s32 %v2097, %v4367
    %v4369 = vrot.slane %v4119, %v4368
    %v4370 = vsel %vm2102, %v4369, %v4365
    %v4371 = vlaneseq
    %v4372 = vshrl.u32 %v4371, 7
    %v4373 = vsub.s32 %v2104, %v4372
    %v4374 = vrot.slane %v4120, %v4373
    %v4375 = vsel %vm2109, %v4374, %v4370
    %v4376 = vlaneseq
    %v4377 = vshrl.u32 %v4376, 7
    %v4378 = vsub.s32 %v1410, %v4377
    %v4379 = vrot.slane %v4121, %v4378
    %v4380 = vlaneseq
    %v4381 = vshrl.u32 %v4380, 7
    %v4382 = vsub.s32 %v2083, %v4381
    %v4383 = vrot.slane %v4122, %v4382
    %v4384 = vsel %vm2088, %v4383, %v4379
    %v4385 = vlaneseq
    %v4386 = vshrl.u32 %v4385, 7
    %v4387 = vsub.s32 %v2090, %v4386
    %v4388 = vrot.slane %v4123, %v4387
    %v4389 = vsel %vm2095, %v4388, %v4384
    %v4390 = vlaneseq
    %v4391 = vshrl.u32 %v4390, 7
    %v4392 = vsub.s32 %v2097, %v4391
    %v4393 = vrot.slane %v4124, %v4392
    %v4394 = vsel %vm2102, %v4393, %v4389
    %v4395 = vlaneseq
    %v4396 = vshrl.u32 %v4395, 7
    %v4397 = vsub.s32 %v2104, %v4396
    %v4398 = vrot.slane %v4125, %v4397
    %v4399 = vsel %vm2109, %v4398, %v4394
    %v4400 = vlaneseq
    %v4401 = vshrl.u32 %v4400, 7
    %v4402 = vsub.s32 %v1410, %v4401
    %v4403 = vrot.slane %v4126, %v4402
    %v4404 = vlaneseq
    %v4405 = vshrl.u32 %v4404, 7
    %v4406 = vsub.s32 %v2083, %v4405
    %v4407 = vrot.slane %v4127, %v4406
    %v4408 = vsel %vm2088, %v4407, %v4403
    %v4409 = vlaneseq
    %v4410 = vshrl.u32 %v4409, 7
    %v4411 = vsub.s32 %v2090, %v4410
    %v4412 = vrot.slane %v4128, %v4411
    %v4413 = vsel %vm2095, %v4412, %v4408
    %v4414 = vlaneseq
    %v4415 = vshrl.u32 %v4414, 7
    %v4416 = vsub.s32 %v2097, %v4415
    %v4417 = vrot.slane %v4129, %v4416
    %v4418 = vsel %vm2102, %v4417, %v4413
    %v4419 = vlaneseq
    %v4420 = vshrl.u32 %v4419, 7
    %v4421 = vsub.s32 %v2104, %v4420
    %v4422 = vrot.slane %v4130, %v4421
    %v4423 = vsel %vm2109, %v4422, %v4418
    %v4424 = vlaneseq
    %v4425 = vshrl.u32 %v4424, 7
    %v4426 = vsub.s32 %v1410, %v4425
    %v4427 = vrot.slane %v4131, %v4426
    %v4428 = vlaneseq
    %v4429 = vshrl.u32 %v4428, 7
    %v4430 = vsub.s32 %v2083, %v4429
    %v4431 = vrot.slane %v4132, %v4430
    %v4432 = vsel %vm2088, %v4431, %v4427
    %v4433 = vlaneseq
    %v4434 = vshrl.u32 %v4433, 7
    %v4435 = vsub.s32 %v2090, %v4434
    %v4436 = vrot.slane %v4133, %v4435
    %v4437 = vsel %vm2095, %v4436, %v4432
    %v4438 = vlaneseq
    %v4439 = vshrl.u32 %v4438, 7
    %v4440 = vsub.s32 %v2097, %v4439
    %v4441 = vrot.slane %v4134, %v4440
    %v4442 = vsel %vm2102, %v4441, %v4437
    %v4443 = vlaneseq
    %v4444 = vshrl.u32 %v4443, 7
    %v4445 = vsub.s32 %v2104, %v4444
    %v4446 = vrot.slane %v4135, %v4445
    %v4447 = vsel %vm2109, %v4446, %v4442
    %v4448 = vlaneseq
    %v4449 = vshrl.u32 %v4448, 7
    %v4450 = vsub.s32 %v1410, %v4449
    %v4451 = vrot.slane %v4136, %v4450
    %v4452 = vlaneseq
    %v4453 = vshrl.u32 %v4452, 7
    %v4454 = vsub.s32 %v2083, %v4453
    %v4455 = vrot.slane %v4137, %v4454
    %v4456 = vsel %vm2088, %v4455, %v4451
    %v4457 = vlaneseq
    %v4458 = vshrl.u32 %v4457, 7
    %v4459 = vsub.s32 %v2090, %v4458
    %v4460 = vrot.slane %v4138, %v4459
    %v4461 = vsel %vm2095, %v4460, %v4456
    %v4462 = vlaneseq
    %v4463 = vshrl.u32 %v4462, 7
    %v4464 = vsub.s32 %v2097, %v4463
    %v4465 = vrot.slane %v4139, %v4464
    %v4466 = vsel %vm2102, %v4465, %v4461
    %v4467 = vlaneseq
    %v4468 = vshrl.u32 %v4467, 7
    %v4469 = vsub.s32 %v2104, %v4468
    %v4470 = vrot.slane %v4140, %v4469
    %v4471 = vsel %vm2109, %v4470, %v4466
    %v4472 = vlaneseq
    %v4473 = vshrl.u32 %v4472, 7
    %v4474 = vsub.s32 %v1410, %v4473
    %v4475 = vrot.slane %v4141, %v4474
    %v4476 = vlaneseq
    %v4477 = vshrl.u32 %v4476, 7
    %v4478 = vsub.s32 %v2083, %v4477
    %v4479 = vrot.slane %v4142, %v4478
    %v4480 = vsel %vm2088, %v4479, %v4475
    %v4481 = vlaneseq
    %v4482 = vshrl.u32 %v4481, 7
    %v4483 = vsub.s32 %v2090, %v4482
    %v4484 = vrot.slane %v4143, %v4483
    %v4485 = vsel %vm2095, %v4484, %v4480
    %v4486 = vlaneseq
    %v4487 = vshrl.u32 %v4486, 7
    %v4488 = vsub.s32 %v2097, %v4487
    %v4489 = vrot.slane %v4144, %v4488
    %v4490 = vsel %vm2102, %v4489, %v4485
    %v4491 = vlaneseq
    %v4492 = vshrl.u32 %v4491, 7
    %v4493 = vsub.s32 %v2104, %v4492
    %v4494 = vrot.slane %v4145, %v4493
    %v4495 = vsel %vm2109, %v4494, %v4490
    %v4496 = vlaneseq
    %v4497 = vshrl.u32 %v4496, 7
    %v4498 = vsub.s32 %v1410, %v4497
    %v4499 = vrot.slane %v4146, %v4498
    %v4500 = vlaneseq
    %v4501 = vshrl.u32 %v4500, 7
    %v4502 = vsub.s32 %v2083, %v4501
    %v4503 = vrot.slane %v4147, %v4502
    %v4504 = vsel %vm2088, %v4503, %v4499
    %v4505 = vlaneseq
    %v4506 = vshrl.u32 %v4505, 7
    %v4507 = vsub.s32 %v2090, %v4506
    %v4508 = vrot.slane %v4148, %v4507
    %v4509 = vsel %vm2095, %v4508, %v4504
    %v4510 = vlaneseq
    %v4511 = vshrl.u32 %v4510, 7
    %v4512 = vsub.s32 %v2097, %v4511
    %v4513 = vrot.slane %v4149, %v4512
    %v4514 = vsel %vm2102, %v4513, %v4509
    %v4515 = vlaneseq
    %v4516 = vshrl.u32 %v4515, 7
    %v4517 = vsub.s32 %v2104, %v4516
    %v4518 = vrot.slane %v4150, %v4517
    %v4519 = vsel %vm2109, %v4518, %v4514
    %v4520 = vlaneseq
    %v4521 = vshrl.u32 %v4520, 7
    %v4522 = vsub.s32 %v1410, %v4521
    %v4523 = vrot.slane %v4151, %v4522
    %v4524 = vlaneseq
    %v4525 = vshrl.u32 %v4524, 7
    %v4526 = vsub.s32 %v2083, %v4525
    %v4527 = vrot.slane %v4152, %v4526
    %v4528 = vsel %vm2088, %v4527, %v4523
    %v4529 = vlaneseq
    %v4530 = vshrl.u32 %v4529, 7
    %v4531 = vsub.s32 %v2090, %v4530
    %v4532 = vrot.slane %v4153, %v4531
    %v4533 = vsel %vm2095, %v4532, %v4528
    %v4534 = vlaneseq
    %v4535 = vshrl.u32 %v4534, 7
    %v4536 = vsub.s32 %v2097, %v4535
    %v4537 = vrot.slane %v4154, %v4536
    %v4538 = vsel %vm2102, %v4537, %v4533
    %v4539 = vlaneseq
    %v4540 = vshrl.u32 %v4539, 7
    %v4541 = vsub.s32 %v2104, %v4540
    %v4542 = vrot.slane %v4155, %v4541
    %v4543 = vsel %vm2109, %v4542, %v4538
    %v4544 = vlaneseq
    %v4545 = vshrl.u32 %v4544, 7
    %v4546 = vsub.s32 %v1410, %v4545
    %v4547 = vrot.slane %v4156, %v4546
    %v4548 = vlaneseq
    %v4549 = vshrl.u32 %v4548, 7
    %v4550 = vsub.s32 %v2083, %v4549
    %v4551 = vrot.slane %v4157, %v4550
    %v4552 = vsel %vm2088, %v4551, %v4547
    %v4553 = vlaneseq
    %v4554 = vshrl.u32 %v4553, 7
    %v4555 = vsub.s32 %v2090, %v4554
    %v4556 = vrot.slane %v4158, %v4555
    %v4557 = vsel %vm2095, %v4556, %v4552
    %v4558 = vlaneseq
    %v4559 = vshrl.u32 %v4558, 7
    %v4560 = vsub.s32 %v2097, %v4559
    %v4561 = vrot.slane %v4159, %v4560
    %v4562 = vsel %vm2102, %v4561, %v4557
    %v4563 = vlaneseq
    %v4564 = vshrl.u32 %v4563, 7
    %v4565 = vsub.s32 %v2104, %v4564
    %v4566 = vrot.slane %v4160, %v4565
    %v4567 = vsel %vm2109, %v4566, %v4562
    %v4568 = vlaneseq
    %v4569 = vshrl.u32 %v4568, 7
    %v4570 = vsub.s32 %v1410, %v4569
    %v4571 = vrot.slane %v4161, %v4570
    %v4572 = vlaneseq
    %v4573 = vshrl.u32 %v4572, 7
    %v4574 = vsub.s32 %v2083, %v4573
    %v4575 = vrot.slane %v4162, %v4574
    %v4576 = vsel %vm2088, %v4575, %v4571
    %v4577 = vlaneseq
    %v4578 = vshrl.u32 %v4577, 7
    %v4579 = vsub.s32 %v2090, %v4578
    %v4580 = vrot.slane %v4163, %v4579
    %v4581 = vsel %vm2095, %v4580, %v4576
    %v4582 = vlaneseq
    %v4583 = vshrl.u32 %v4582, 7
    %v4584 = vsub.s32 %v2097, %v4583
    %v4585 = vrot.slane %v4164, %v4584
    %v4586 = vsel %vm2102, %v4585, %v4581
    %v4587 = vlaneseq
    %v4588 = vshrl.u32 %v4587, 7
    %v4589 = vsub.s32 %v2104, %v4588
    %v4590 = vrot.slane %v4165, %v4589
    %v4591 = vsel %vm2109, %v4590, %v4586
    %v4592 = vlaneseq
    %v4593 = vshrl.u32 %v4592, 7
    %v4594 = vsub.s32 %v1410, %v4593
    %v4595 = vrot.slane %v4166, %v4594
    %v4596 = vlaneseq
    %v4597 = vshrl.u32 %v4596, 7
    %v4598 = vsub.s32 %v2083, %v4597
    %v4599 = vrot.slane %v4167, %v4598
    %v4600 = vsel %vm2088, %v4599, %v4595
    %v4601 = vlaneseq
    %v4602 = vshrl.u32 %v4601, 7
    %v4603 = vsub.s32 %v2090, %v4602
    %v4604 = vrot.slane %v4168, %v4603
    %v4605 = vsel %vm2095, %v4604, %v4600
    %v4606 = vlaneseq
    %v4607 = vshrl.u32 %v4606, 7
    %v4608 = vsub.s32 %v2097, %v4607
    %v4609 = vrot.slane %v4169, %v4608
    %v4610 = vsel %vm2102, %v4609, %v4605
    %v4611 = vlaneseq
    %v4612 = vshrl.u32 %v4611, 7
    %v4613 = vsub.s32 %v2104, %v4612
    %v4614 = vrot.slane %v4170, %v4613
    %v4615 = vsel %vm2109, %v4614, %v4610
    %v4616 = vlaneseq
    %v4617 = vshrl.u32 %v4616, 7
    %v4618 = vsub.s32 %v1410, %v4617
    %v4619 = vrot.slane %v4171, %v4618
    %v4620 = vlaneseq
    %v4621 = vshrl.u32 %v4620, 7
    %v4622 = vsub.s32 %v2083, %v4621
    %v4623 = vrot.slane %v4172, %v4622
    %v4624 = vsel %vm2088, %v4623, %v4619
    %v4625 = vlaneseq
    %v4626 = vshrl.u32 %v4625, 7
    %v4627 = vsub.s32 %v2090, %v4626
    %v4628 = vrot.slane %v4173, %v4627
    %v4629 = vsel %vm2095, %v4628, %v4624
    %v4630 = vlaneseq
    %v4631 = vshrl.u32 %v4630, 7
    %v4632 = vsub.s32 %v2097, %v4631
    %v4633 = vrot.slane %v4174, %v4632
    %v4634 = vsel %vm2102, %v4633, %v4629
    %v4635 = vlaneseq
    %v4636 = vshrl.u32 %v4635, 7
    %v4637 = vsub.s32 %v2104, %v4636
    %v4638 = vrot.slane %v4175, %v4637
    %v4639 = vsel %vm2109, %v4638, %v4634
    %v4640 = vsel %vm2471, %v4303, %v4279
    %v4641 = vsel %vm2473, %v4327, %v4640
    %v4642 = vsel %vm2475, %v4351, %v4641
    %v4643 = vsel %vm2477, %v4375, %v4642
    %v4644 = vsel %vm2479, %v4399, %v4643
    %v4645 = vsel %vm2481, %v4423, %v4644
    %v4646 = vsel %vm2483, %v4447, %v4645
    %v4647 = vsel %vm2471, %v4495, %v4471
    %v4648 = vsel %vm2473, %v4519, %v4647
    %v4649 = vsel %vm2475, %v4543, %v4648
    %v4650 = vsel %vm2477, %v4567, %v4649
    %v4651 = vsel %vm2479, %v4591, %v4650
    %v4652 = vsel %vm2481, %v4615, %v4651
    %v4653 = vsel %vm2483, %v4639, %v4652
    %v4656 = vsub.f32 %v3591, %v4646
    %v4657 = vsub.f32 %v3592, %v4653
    %s4658 = sld [smem:[#allocation8 + $0x2]]
    %v4659 = vstv %s4658
    %v4660 = vmul.f32 %v4659, %v4656
    %v4661 = vmul.f32 %v4659, %v4657
    %v4662 = vtanh.pop %v4660
    %v4663 = vtanh.pop %v4661
    %s4664 = sld [smem:[#allocation6 + $0x2]]
    %v4665 = vsub.f32 %v4662, %v3591
    %v4666 = vsub.f32 %v4663, %v3592
    %v4667 = vstv %s4664
    %v4668 = vmul.f32 %v4667, %v4665
    %v4669 = vmul.f32 %v4667, %v4666
    %v4670 = vadd.f32 %v3591, %v4668
    %v4671 = vadd.f32 %v3592, %v4669
    %v4672 = vsel %vm1411, -1.0, %v4670
    %v4673 = vsel %vm1411, -1.0, %v4671
    %s4674 = sld [smem:[#allocation2 + $0x3]]
    %s4675 = smul.f32 %s4674, 2.0
    %v4678 = vcombine.high %v4672, %v4672
    %v4680 = vunpack.c.l.s4 1966171168
    %v4681 = vunpack.c.0.s8 %v4680
    %v4682 = vlaneseq
    %v4683 = vshrl.u32 %v4682, 7
    %v4684 = vsub.s32 %v4681, %v4683
    %v4685 = vrot.slane %v4672, %v4684
    %v4687 = vunpack.c.l.s4 1966171168
    %v4688 = vunpack.c.0.s8 %v4687
    %v4689 = vlaneseq
    %v4690 = vshrl.u32 %v4689, 7
    %v4691 = vsub.s32 %v4688, %v4690
    %v4692 = vrot.slane %v4678, %v4691
    %v4693 = vcombine.high %v4685, %v4685
    %v4694 = vcombine.high %v4692, %v4692
    %v4696 = vunpack.c.l.s4 1966171168
    %v4697 = vunpack.c.0.s8 %v4696
    %v4698 = vlaneseq
    %v4699 = vshrl.u32 %v4698, 7
    %v4700 = vsub.s32 %v4697, %v4699
    %v4701 = vrot.slane %v4685, %v4700
    %v4703 = vunpack.c.l.s4 1966171168
    %v4704 = vunpack.c.0.s8 %v4703
    %v4705 = vlaneseq
    %v4706 = vshrl.u32 %v4705, 7
    %v4707 = vsub.s32 %v4704, %v4706
    %v4708 = vrot.slane %v4692, %v4707
    %v4710 = vunpack.c.l.s4 1966171168
    %v4711 = vunpack.c.0.s8 %v4710
    %v4712 = vlaneseq
    %v4713 = vshrl.u32 %v4712, 7
    %v4714 = vsub.s32 %v4711, %v4713
    %v4715 = vrot.slane %v4693, %v4714
    %v4717 = vunpack.c.l.s4 1966171168
    %v4718 = vunpack.c.0.s8 %v4717
    %v4719 = vlaneseq
    %v4720 = vshrl.u32 %v4719, 7
    %v4721 = vsub.s32 %v4718, %v4720
    %v4722 = vrot.slane %v4694, %v4721
    %v4723 = vcombine.high %v4701, %v4701
    %v4724 = vcombine.high %v4708, %v4708
    %v4725 = vcombine.high %v4715, %v4715
    %v4726 = vcombine.high %v4722, %v4722
    %v4727 = vcombine.high %v4673, %v4673
    %v4729 = vunpack.c.l.s4 1966171168
    %v4730 = vunpack.c.0.s8 %v4729
    %v4731 = vlaneseq
    %v4732 = vshrl.u32 %v4731, 7
    %v4733 = vsub.s32 %v4730, %v4732
    %v4734 = vrot.slane %v4673, %v4733
    %v4736 = vunpack.c.l.s4 1966171168
    %v4737 = vunpack.c.0.s8 %v4736
    %v4738 = vlaneseq
    %v4739 = vshrl.u32 %v4738, 7
    %v4740 = vsub.s32 %v4737, %v4739
    %v4741 = vrot.slane %v4727, %v4740
    %v4742 = vcombine.high %v4734, %v4734
    %v4743 = vcombine.high %v4741, %v4741
    %v4745 = vunpack.c.l.s4 1966171168
    %v4746 = vunpack.c.0.s8 %v4745
    %v4747 = vlaneseq
    %v4748 = vshrl.u32 %v4747, 7
    %v4749 = vsub.s32 %v4746, %v4748
    %v4750 = vrot.slane %v4734, %v4749
    %v4752 = vunpack.c.l.s4 1966171168
    %v4753 = vunpack.c.0.s8 %v4752
    %v4754 = vlaneseq
    %v4755 = vshrl.u32 %v4754, 7
    %v4756 = vsub.s32 %v4753, %v4755
    %v4757 = vrot.slane %v4741, %v4756
    %v4759 = vunpack.c.l.s4 1966171168
    %v4760 = vunpack.c.0.s8 %v4759
    %v4761 = vlaneseq
    %v4762 = vshrl.u32 %v4761, 7
    %v4763 = vsub.s32 %v4760, %v4762
    %v4764 = vrot.slane %v4742, %v4763
    %v4766 = vunpack.c.l.s4 1966171168
    %v4767 = vunpack.c.0.s8 %v4766
    %v4768 = vlaneseq
    %v4769 = vshrl.u32 %v4768, 7
    %v4770 = vsub.s32 %v4767, %v4769
    %v4771 = vrot.slane %v4743, %v4770
    %v4772 = vcombine.high %v4750, %v4750
    %v4773 = vcombine.high %v4757, %v4757
    %v4774 = vcombine.high %v4764, %v4764
    %v4775 = vcombine.high %v4771, %v4771
    %v4776 = vlaneseq
    %v4777 = vshrl.u32 %v4776, 7
    %v4778 = vsub.s32 0, %v4777
    %v4779 = vrot.slane %v4701, %v4778
    %v4780 = vlaneseq
    %v4781 = vshrl.u32 %v4780, 7
    %v4782 = vsub.s32 0, %v4781
    %v4783 = vrot.slane %v4715, %v4782
    %v4784 = vlaneseq
    %v4785 = vshrl.u32 %v4784, 7
    %v4786 = vsub.s32 0, %v4785
    %v4787 = vrot.slane %v4723, %v4786
    %v4788 = vlaneseq
    %v4789 = vshrl.u32 %v4788, 7
    %v4790 = vsub.s32 0, %v4789
    %v4791 = vrot.slane %v4725, %v4790
    %v4792 = vlaneseq
    %v4793 = vshrl.u32 %v4792, 7
    %v4794 = vsub.s32 0, %v4793
    %v4795 = vrot.slane %v4708, %v4794
    %v4796 = vlaneseq
    %v4797 = vshrl.u32 %v4796, 7
    %v4798 = vsub.s32 0, %v4797
    %v4799 = vrot.slane %v4722, %v4798
    %v4800 = vlaneseq
    %v4801 = vshrl.u32 %v4800, 7
    %v4802 = vsub.s32 0, %v4801
    %v4803 = vrot.slane %v4724, %v4802
    %v4804 = vlaneseq
    %v4805 = vshrl.u32 %v4804, 7
    %v4806 = vsub.s32 0, %v4805
    %v4807 = vrot.slane %v4726, %v4806
    %v4808 = vlaneseq
    %v4809 = vshrl.u32 %v4808, 7
    %v4810 = vsub.s32 0, %v4809
    %v4811 = vrot.slane %v4750, %v4810
    %v4812 = vlaneseq
    %v4813 = vshrl.u32 %v4812, 7
    %v4814 = vsub.s32 0, %v4813
    %v4815 = vrot.slane %v4764, %v4814
    %v4816 = vlaneseq
    %v4817 = vshrl.u32 %v4816, 7
    %v4818 = vsub.s32 0, %v4817
    %v4819 = vrot.slane %v4772, %v4818
    %v4820 = vlaneseq
    %v4821 = vshrl.u32 %v4820, 7
    %v4822 = vsub.s32 0, %v4821
    %v4823 = vrot.slane %v4774, %v4822
    %v4824 = vlaneseq
    %v4825 = vshrl.u32 %v4824, 7
    %v4826 = vsub.s32 0, %v4825
    %v4827 = vrot.slane %v4757, %v4826
    %v4828 = vlaneseq
    %v4829 = vshrl.u32 %v4828, 7
    %v4830 = vsub.s32 0, %v4829
    %v4831 = vrot.slane %v4771, %v4830
    %v4832 = vlaneseq
    %v4833 = vshrl.u32 %v4832, 7
    %v4834 = vsub.s32 0, %v4833
    %v4835 = vrot.slane %v4773, %v4834
    %v4836 = vlaneseq
    %v4837 = vshrl.u32 %v4836, 7
    %v4838 = vsub.s32 0, %v4837
    %v4839 = vrot.slane %v4775, %v4838
    %v4856 = vmul.f32 %v218, %v4779
    %v4857 = vmul.f32 %v221, %v4779
    %v4858 = vmul.f32 %v226, %v4779
    %v4859 = vmul.f32 %v229, %v4779
    %v4860 = vmul.f32 %v234, %v4779
    %v4861 = vmul.f32 %v296, %v4783
    %v4862 = vmul.f32 %v299, %v4783
    %v4863 = vmul.f32 %v304, %v4783
    %v4864 = vmul.f32 %v307, %v4783
    %v4865 = vmul.f32 %v312, %v4783
    %v4866 = vmul.f32 %v374, %v4787
    %v4867 = vmul.f32 %v377, %v4787
    %v4868 = vmul.f32 %v382, %v4787
    %v4869 = vmul.f32 %v385, %v4787
    %v4870 = vmul.f32 %v390, %v4787
    %v4871 = vmul.f32 %v452, %v4791
    %v4872 = vmul.f32 %v455, %v4791
    %v4873 = vmul.f32 %v460, %v4791
    %v4874 = vmul.f32 %v463, %v4791
    %v4875 = vmul.f32 %v468, %v4791
    %v4876 = vmul.f32 %v530, %v4795
    %v4877 = vmul.f32 %v533, %v4795
    %v4878 = vmul.f32 %v538, %v4795
    %v4879 = vmul.f32 %v541, %v4795
    %v4880 = vmul.f32 %v546, %v4795
    %v4881 = vmul.f32 %v608, %v4799
    %v4882 = vmul.f32 %v611, %v4799
    %v4883 = vmul.f32 %v616, %v4799
    %v4884 = vmul.f32 %v619, %v4799
    %v4885 = vmul.f32 %v624, %v4799
    %v4886 = vmul.f32 %v686, %v4803
    %v4887 = vmul.f32 %v689, %v4803
    %v4888 = vmul.f32 %v694, %v4803
    %v4889 = vmul.f32 %v697, %v4803
    %v4890 = vmul.f32 %v702, %v4803
    %v4891 = vmul.f32 %v764, %v4807
    %v4892 = vmul.f32 %v767, %v4807
    %v4893 = vmul.f32 %v772, %v4807
    %v4894 = vmul.f32 %v775, %v4807
    %v4895 = vmul.f32 %v780, %v4807
    %v4896 = vmul.f32 %v842, %v4811
    %v4897 = vmul.f32 %v845, %v4811
    %v4898 = vmul.f32 %v850, %v4811
    %v4899 = vmul.f32 %v853, %v4811
    %v4900 = vmul.f32 %v858, %v4811
    %v4901 = vmul.f32 %v920, %v4815
    %v4902 = vmul.f32 %v923, %v4815
    %v4903 = vmul.f32 %v928, %v4815
    %v4904 = vmul.f32 %v931, %v4815
    %v4905 = vmul.f32 %v936, %v4815
    %v4906 = vmul.f32 %v998, %v4819
    %v4907 = vmul.f32 %v1001, %v4819
    %v4908 = vmul.f32 %v1006, %v4819
    %v4909 = vmul.f32 %v1009, %v4819
    %v4910 = vmul.f32 %v1014, %v4819
    %v4911 = vmul.f32 %v1076, %v4823
    %v4912 = vmul.f32 %v1079, %v4823
    %v4913 = vmul.f32 %v1084, %v4823
    %v4914 = vmul.f32 %v1087, %v4823
    %v4915 = vmul.f32 %v1092, %v4823
    %v4916 = vmul.f32 %v1154, %v4827
    %v4917 = vmul.f32 %v1157, %v4827
    %v4918 = vmul.f32 %v1162, %v4827
    %v4919 = vmul.f32 %v1165, %v4827
    %v4920 = vmul.f32 %v1170, %v4827
    %v4921 = vmul.f32 %v1232, %v4831
    %v4922 = vmul.f32 %v1235, %v4831
    %v4923 = vmul.f32 %v1240, %v4831
    %v4924 = vmul.f32 %v1243, %v4831
    %v4925 = vmul.f32 %v1248, %v4831
    %v4926 = vmul.f32 %v1310, %v4835
    %v4927 = vmul.f32 %v1313, %v4835
    %v4928 = vmul.f32 %v1318, %v4835
    %v4929 = vmul.f32 %v1321, %v4835
    %v4930 = vmul.f32 %v1326, %v4835
    %v4931 = vmul.f32 %v1388, %v4839
    %v4932 = vmul.f32 %v1391, %v4839
    %v4933 = vmul.f32 %v1396, %v4839
    %v4934 = vmul.f32 %v1399, %v4839
    %v4935 = vmul.f32 %v1404, %v4839
    %v4936 = vsel %vm1676, %v4856, 0.0
    %4937 = vadd.xlane.f32.xlu0 %v4936
    %v4938 = vpop.xlane.xlu0 %4937
    %v4939 = vsel %vm1676, %v4857, 0.0
    %4940 = vadd.xlane.f32.xlu0 %v4939
    %v4941 = vpop.xlane.xlu0 %4940
    %v4942 = vsel %vm1676, %v4858, 0.0
    %4943 = vadd.xlane.f32.xlu0 %v4942
    %v4944 = vpop.xlane.xlu0 %4943
    %v4945 = vsel %vm1676, %v4859, 0.0
    %4946 = vadd.xlane.f32.xlu0 %v4945
    %v4947 = vpop.xlane.xlu0 %4946
    %v4948 = vsel %vm1689, %v4860, 0.0
    %4949 = vadd.xlane.f32.xlu0 %v4948
    %v4950 = vpop.xlane.xlu0 %4949
    %v4951 = vsel %vm1676, %v4861, 0.0
    %4952 = vadd.xlane.f32.xlu0 %v4951
    %v4953 = vpop.xlane.xlu0 %4952
    %v4954 = vsel %vm1676, %v4862, 0.0
    %4955 = vadd.xlane.f32.xlu0 %v4954
    %v4956 = vpop.xlane.xlu0 %4955
    %v4957 = vsel %vm1676, %v4863, 0.0
    %4958 = vadd.xlane.f32.xlu0 %v4957
    %v4959 = vpop.xlane.xlu0 %4958
    %v4960 = vsel %vm1676, %v4864, 0.0
    %4961 = vadd.xlane.f32.xlu0 %v4960
    %v4962 = vpop.xlane.xlu0 %4961
    %v4963 = vsel %vm1689, %v4865, 0.0
    %4964 = vadd.xlane.f32.xlu0 %v4963
    %v4965 = vpop.xlane.xlu0 %4964
    %v4966 = vsel %vm1676, %v4866, 0.0
    %4967 = vadd.xlane.f32.xlu0 %v4966
    %v4968 = vpop.xlane.xlu0 %4967
    %v4969 = vsel %vm1676, %v4867, 0.0
    %4970 = vadd.xlane.f32.xlu0 %v4969
    %v4971 = vpop.xlane.xlu0 %4970
    %v4972 = vsel %vm1676, %v4868, 0.0
    %4973 = vadd.xlane.f32.xlu0 %v4972
    %v4974 = vpop.xlane.xlu0 %4973
    %v4975 = vsel %vm1676, %v4869, 0.0
    %4976 = vadd.xlane.f32.xlu0 %v4975
    %v4977 = vpop.xlane.xlu0 %4976
    %v4978 = vsel %vm1689, %v4870, 0.0
    %4979 = vadd.xlane.f32.xlu0 %v4978
    %v4980 = vpop.xlane.xlu0 %4979
    %v4981 = vsel %vm1676, %v4871, 0.0
    %4982 = vadd.xlane.f32.xlu0 %v4981
    %v4983 = vpop.xlane.xlu0 %4982
    %v4984 = vsel %vm1676, %v4872, 0.0
    %4985 = vadd.xlane.f32.xlu0 %v4984
    %v4986 = vpop.xlane.xlu0 %4985
    %v4987 = vsel %vm1676, %v4873, 0.0
    %4988 = vadd.xlane.f32.xlu0 %v4987
    %v4989 = vpop.xlane.xlu0 %4988
    %v4990 = vsel %vm1676, %v4874, 0.0
    %4991 = vadd.xlane.f32.xlu0 %v4990
    %v4992 = vpop.xlane.xlu0 %4991
    %v4993 = vsel %vm1689, %v4875, 0.0
    %4994 = vadd.xlane.f32.xlu0 %v4993
    %v4995 = vpop.xlane.xlu0 %4994
    %v4996 = vsel %vm1676, %v4876, 0.0
    %4997 = vadd.xlane.f32.xlu0 %v4996
    %v4998 = vpop.xlane.xlu0 %4997
    %v4999 = vsel %vm1676, %v4877, 0.0
    %5000 = vadd.xlane.f32.xlu0 %v4999
    %v5001 = vpop.xlane.xlu0 %5000
    %v5002 = vsel %vm1676, %v4878, 0.0
    %5003 = vadd.xlane.f32.xlu0 %v5002
    %v5004 = vpop.xlane.xlu0 %5003
    %v5005 = vsel %vm1676, %v4879, 0.0
    %5006 = vadd.xlane.f32.xlu0 %v5005
    %v5007 = vpop.xlane.xlu0 %5006
    %v5008 = vsel %vm1689, %v4880, 0.0
    %5009 = vadd.xlane.f32.xlu0 %v5008
    %v5010 = vpop.xlane.xlu0 %5009
    %v5011 = vsel %vm1676, %v4881, 0.0
    %5012 = vadd.xlane.f32.xlu0 %v5011
    %v5013 = vpop.xlane.xlu0 %5012
    %v5014 = vsel %vm1676, %v4882, 0.0
    %5015 = vadd.xlane.f32.xlu0 %v5014
    %v5016 = vpop.xlane.xlu0 %5015
    %v5017 = vsel %vm1676, %v4883, 0.0
    %5018 = vadd.xlane.f32.xlu0 %v5017
    %v5019 = vpop.xlane.xlu0 %5018
    %v5020 = vsel %vm1676, %v4884, 0.0
    %5021 = vadd.xlane.f32.xlu0 %v5020
    %v5022 = vpop.xlane.xlu0 %5021
    %v5023 = vsel %vm1689, %v4885, 0.0
    %5024 = vadd.xlane.f32.xlu0 %v5023
    %v5025 = vpop.xlane.xlu0 %5024
    %v5026 = vsel %vm1676, %v4886, 0.0
    %5027 = vadd.xlane.f32.xlu0 %v5026
    %v5028 = vpop.xlane.xlu0 %5027
    %v5029 = vsel %vm1676, %v4887, 0.0
    %5030 = vadd.xlane.f32.xlu0 %v5029
    %v5031 = vpop.xlane.xlu0 %5030
    %v5032 = vsel %vm1676, %v4888, 0.0
    %5033 = vadd.xlane.f32.xlu0 %v5032
    %v5034 = vpop.xlane.xlu0 %5033
    %v5035 = vsel %vm1676, %v4889, 0.0
    %5036 = vadd.xlane.f32.xlu0 %v5035
    %v5037 = vpop.xlane.xlu0 %5036
    %v5038 = vsel %vm1689, %v4890, 0.0
    %5039 = vadd.xlane.f32.xlu0 %v5038
    %v5040 = vpop.xlane.xlu0 %5039
    %v5041 = vsel %vm1676, %v4891, 0.0
    %5042 = vadd.xlane.f32.xlu0 %v5041
    %v5043 = vpop.xlane.xlu0 %5042
    %v5044 = vsel %vm1676, %v4892, 0.0
    %5045 = vadd.xlane.f32.xlu0 %v5044
    %v5046 = vpop.xlane.xlu0 %5045
    %v5047 = vsel %vm1676, %v4893, 0.0
    %5048 = vadd.xlane.f32.xlu0 %v5047
    %v5049 = vpop.xlane.xlu0 %5048
    %v5050 = vsel %vm1676, %v4894, 0.0
    %5051 = vadd.xlane.f32.xlu0 %v5050
    %v5052 = vpop.xlane.xlu0 %5051
    %v5053 = vsel %vm1689, %v4895, 0.0
    %5054 = vadd.xlane.f32.xlu0 %v5053
    %v5055 = vpop.xlane.xlu0 %5054
    %v5056 = vsel %vm1676, %v4896, 0.0
    %5057 = vadd.xlane.f32.xlu0 %v5056
    %v5058 = vpop.xlane.xlu0 %5057
    %v5059 = vsel %vm1676, %v4897, 0.0
    %5060 = vadd.xlane.f32.xlu0 %v5059
    %v5061 = vpop.xlane.xlu0 %5060
    %v5062 = vsel %vm1676, %v4898, 0.0
    %5063 = vadd.xlane.f32.xlu0 %v5062
    %v5064 = vpop.xlane.xlu0 %5063
    %v5065 = vsel %vm1676, %v4899, 0.0
    %5066 = vadd.xlane.f32.xlu0 %v5065
    %v5067 = vpop.xlane.xlu0 %5066
    %v5068 = vsel %vm1689, %v4900, 0.0
    %5069 = vadd.xlane.f32.xlu0 %v5068
    %v5070 = vpop.xlane.xlu0 %5069
    %v5071 = vsel %vm1676, %v4901, 0.0
    %5072 = vadd.xlane.f32.xlu0 %v5071
    %v5073 = vpop.xlane.xlu0 %5072
    %v5074 = vsel %vm1676, %v4902, 0.0
    %5075 = vadd.xlane.f32.xlu0 %v5074
    %v5076 = vpop.xlane.xlu0 %5075
    %v5077 = vsel %vm1676, %v4903, 0.0
    %5078 = vadd.xlane.f32.xlu0 %v5077
    %v5079 = vpop.xlane.xlu0 %5078
    %v5080 = vsel %vm1676, %v4904, 0.0
    %5081 = vadd.xlane.f32.xlu0 %v5080
    %v5082 = vpop.xlane.xlu0 %5081
    %v5083 = vsel %vm1689, %v4905, 0.0
    %5084 = vadd.xlane.f32.xlu0 %v5083
    %v5085 = vpop.xlane.xlu0 %5084
    %v5086 = vsel %vm1676, %v4906, 0.0
    %5087 = vadd.xlane.f32.xlu0 %v5086
    %v5088 = vpop.xlane.xlu0 %5087
    %v5089 = vsel %vm1676, %v4907, 0.0
    %5090 = vadd.xlane.f32.xlu0 %v5089
    %v5091 = vpop.xlane.xlu0 %5090
    %v5092 = vsel %vm1676, %v4908, 0.0
    %5093 = vadd.xlane.f32.xlu0 %v5092
    %v5094 = vpop.xlane.xlu0 %5093
    %v5095 = vsel %vm1676, %v4909, 0.0
    %5096 = vadd.xlane.f32.xlu0 %v5095
    %v5097 = vpop.xlane.xlu0 %5096
    %v5098 = vsel %vm1689, %v4910, 0.0
    %5099 = vadd.xlane.f32.xlu0 %v5098
    %v5100 = vpop.xlane.xlu0 %5099
    %v5101 = vsel %vm1676, %v4911, 0.0
    %5102 = vadd.xlane.f32.xlu0 %v5101
    %v5103 = vpop.xlane.xlu0 %5102
    %v5104 = vsel %vm1676, %v4912, 0.0
    %5105 = vadd.xlane.f32.xlu0 %v5104
    %v5106 = vpop.xlane.xlu0 %5105
    %v5107 = vsel %vm1676, %v4913, 0.0
    %5108 = vadd.xlane.f32.xlu0 %v5107
    %v5109 = vpop.xlane.xlu0 %5108
    %v5110 = vsel %vm1676, %v4914, 0.0
    %5111 = vadd.xlane.f32.xlu0 %v5110
    %v5112 = vpop.xlane.xlu0 %5111
    %v5113 = vsel %vm1689, %v4915, 0.0
    %5114 = vadd.xlane.f32.xlu0 %v5113
    %v5115 = vpop.xlane.xlu0 %5114
    %v5116 = vsel %vm1676, %v4916, 0.0
    %5117 = vadd.xlane.f32.xlu0 %v5116
    %v5118 = vpop.xlane.xlu0 %5117
    %v5119 = vsel %vm1676, %v4917, 0.0
    %5120 = vadd.xlane.f32.xlu0 %v5119
    %v5121 = vpop.xlane.xlu0 %5120
    %v5122 = vsel %vm1676, %v4918, 0.0
    %5123 = vadd.xlane.f32.xlu0 %v5122
    %v5124 = vpop.xlane.xlu0 %5123
    %v5125 = vsel %vm1676, %v4919, 0.0
    %5126 = vadd.xlane.f32.xlu0 %v5125
    %v5127 = vpop.xlane.xlu0 %5126
    %v5128 = vsel %vm1689, %v4920, 0.0
    %5129 = vadd.xlane.f32.xlu0 %v5128
    %v5130 = vpop.xlane.xlu0 %5129
    %v5131 = vsel %vm1676, %v4921, 0.0
    %5132 = vadd.xlane.f32.xlu0 %v5131
    %v5133 = vpop.xlane.xlu0 %5132
    %v5134 = vsel %vm1676, %v4922, 0.0
    %5135 = vadd.xlane.f32.xlu0 %v5134
    %v5136 = vpop.xlane.xlu0 %5135
    %v5137 = vsel %vm1676, %v4923, 0.0
    %5138 = vadd.xlane.f32.xlu0 %v5137
    %v5139 = vpop.xlane.xlu0 %5138
    %v5140 = vsel %vm1676, %v4924, 0.0
    %5141 = vadd.xlane.f32.xlu0 %v5140
    %v5142 = vpop.xlane.xlu0 %5141
    %v5143 = vsel %vm1689, %v4925, 0.0
    %5144 = vadd.xlane.f32.xlu0 %v5143
    %v5145 = vpop.xlane.xlu0 %5144
    %v5146 = vsel %vm1676, %v4926, 0.0
    %5147 = vadd.xlane.f32.xlu0 %v5146
    %v5148 = vpop.xlane.xlu0 %5147
    %v5149 = vsel %vm1676, %v4927, 0.0
    %5150 = vadd.xlane.f32.xlu0 %v5149
    %v5151 = vpop.xlane.xlu0 %5150
    %v5152 = vsel %vm1676, %v4928, 0.0
    %5153 = vadd.xlane.f32.xlu0 %v5152
    %v5154 = vpop.xlane.xlu0 %5153
    %v5155 = vsel %vm1676, %v4929, 0.0
    %5156 = vadd.xlane.f32.xlu0 %v5155
    %v5157 = vpop.xlane.xlu0 %5156
    %v5158 = vsel %vm1689, %v4930, 0.0
    %5159 = vadd.xlane.f32.xlu0 %v5158
    %v5160 = vpop.xlane.xlu0 %5159
    %v5161 = vsel %vm1676, %v4931, 0.0
    %5162 = vadd.xlane.f32.xlu0 %v5161
    %v5163 = vpop.xlane.xlu0 %5162
    %v5164 = vsel %vm1676, %v4932, 0.0
    %5165 = vadd.xlane.f32.xlu0 %v5164
    %v5166 = vpop.xlane.xlu0 %5165
    %v5167 = vsel %vm1676, %v4933, 0.0
    %5168 = vadd.xlane.f32.xlu0 %v5167
    %v5169 = vpop.xlane.xlu0 %5168
    %v5170 = vsel %vm1676, %v4934, 0.0
    %5171 = vadd.xlane.f32.xlu0 %v5170
    %v5172 = vpop.xlane.xlu0 %5171
    %v5173 = vsel %vm1689, %v4935, 0.0
    %5174 = vadd.xlane.f32.xlu0 %v5173
    %v5175 = vpop.xlane.xlu0 %5174
    %v5176 = vstv %s4675
    %v5177 = vmul.f32 %v5176, %v4938
    %v5178 = vmul.f32 %v5176, %v4941
    %v5179 = vmul.f32 %v5176, %v4944
    %v5180 = vmul.f32 %v5176, %v4947
    %v5181 = vmul.f32 %v5176, %v4950
    %v5182 = vmul.f32 %v5176, %v4953
    %v5183 = vmul.f32 %v5176, %v4956
    %v5184 = vmul.f32 %v5176, %v4959
    %v5185 = vmul.f32 %v5176, %v4962
    %v5186 = vmul.f32 %v5176, %v4965
    %v5187 = vmul.f32 %v5176, %v4968
    %v5188 = vmul.f32 %v5176, %v4971
    %v5189 = vmul.f32 %v5176, %v4974
    %v5190 = vmul.f32 %v5176, %v4977
    %v5191 = vmul.f32 %v5176, %v4980
    %v5192 = vmul.f32 %v5176, %v4983
    %v5193 = vmul.f32 %v5176, %v4986
    %v5194 = vmul.f32 %v5176, %v4989
    %v5195 = vmul.f32 %v5176, %v4992
    %v5196 = vmul.f32 %v5176, %v4995
    %v5197 = vmul.f32 %v5176, %v4998
    %v5198 = vmul.f32 %v5176, %v5001
    %v5199 = vmul.f32 %v5176, %v5004
    %v5200 = vmul.f32 %v5176, %v5007
    %v5201 = vmul.f32 %v5176, %v5010
    %v5202 = vmul.f32 %v5176, %v5013
    %v5203 = vmul.f32 %v5176, %v5016
    %v5204 = vmul.f32 %v5176, %v5019
    %v5205 = vmul.f32 %v5176, %v5022
    %v5206 = vmul.f32 %v5176, %v5025
    %v5207 = vmul.f32 %v5176, %v5028
    %v5208 = vmul.f32 %v5176, %v5031
    %v5209 = vmul.f32 %v5176, %v5034
    %v5210 = vmul.f32 %v5176, %v5037
    %v5211 = vmul.f32 %v5176, %v5040
    %v5212 = vmul.f32 %v5176, %v5043
    %v5213 = vmul.f32 %v5176, %v5046
    %v5214 = vmul.f32 %v5176, %v5049
    %v5215 = vmul.f32 %v5176, %v5052
    %v5216 = vmul.f32 %v5176, %v5055
    %v5217 = vmul.f32 %v5176, %v5058
    %v5218 = vmul.f32 %v5176, %v5061
    %v5219 = vmul.f32 %v5176, %v5064
    %v5220 = vmul.f32 %v5176, %v5067
    %v5221 = vmul.f32 %v5176, %v5070
    %v5222 = vmul.f32 %v5176, %v5073
    %v5223 = vmul.f32 %v5176, %v5076
    %v5224 = vmul.f32 %v5176, %v5079
    %v5225 = vmul.f32 %v5176, %v5082
    %v5226 = vmul.f32 %v5176, %v5085
    %v5227 = vmul.f32 %v5176, %v5088
    %v5228 = vmul.f32 %v5176, %v5091
    %v5229 = vmul.f32 %v5176, %v5094
    %v5230 = vmul.f32 %v5176, %v5097
    %v5231 = vmul.f32 %v5176, %v5100
    %v5232 = vmul.f32 %v5176, %v5103
    %v5233 = vmul.f32 %v5176, %v5106
    %v5234 = vmul.f32 %v5176, %v5109
    %v5235 = vmul.f32 %v5176, %v5112
    %v5236 = vmul.f32 %v5176, %v5115
    %v5237 = vmul.f32 %v5176, %v5118
    %v5238 = vmul.f32 %v5176, %v5121
    %v5239 = vmul.f32 %v5176, %v5124
    %v5240 = vmul.f32 %v5176, %v5127
    %v5241 = vmul.f32 %v5176, %v5130
    %v5242 = vmul.f32 %v5176, %v5133
    %v5243 = vmul.f32 %v5176, %v5136
    %v5244 = vmul.f32 %v5176, %v5139
    %v5245 = vmul.f32 %v5176, %v5142
    %v5246 = vmul.f32 %v5176, %v5145
    %v5247 = vmul.f32 %v5176, %v5148
    %v5248 = vmul.f32 %v5176, %v5151
    %v5249 = vmul.f32 %v5176, %v5154
    %v5250 = vmul.f32 %v5176, %v5157
    %v5251 = vmul.f32 %v5176, %v5160
    %v5252 = vmul.f32 %v5176, %v5163
    %v5253 = vmul.f32 %v5176, %v5166
    %v5254 = vmul.f32 %v5176, %v5169
    %v5255 = vmul.f32 %v5176, %v5172
    %v5256 = vmul.f32 %v5176, %v5175
    %v5337 = vlaneseq
    %v5338 = vshrl.u32 %v5337, 7
    %v5339 = vsub.s32 %v1410, %v5338
    %v5340 = vrot.slane %v5177, %v5339
    %v5341 = vlaneseq
    %v5342 = vshrl.u32 %v5341, 7
    %v5343 = vsub.s32 %v2083, %v5342
    %v5344 = vrot.slane %v5178, %v5343
    %v5345 = vsel %vm2088, %v5344, %v5340
    %v5346 = vlaneseq
    %v5347 = vshrl.u32 %v5346, 7
    %v5348 = vsub.s32 %v2090, %v5347
    %v5349 = vrot.slane %v5179, %v5348
    %v5350 = vsel %vm2095, %v5349, %v5345
    %v5351 = vlaneseq
    %v5352 = vshrl.u32 %v5351, 7
    %v5353 = vsub.s32 %v2097, %v5352
    %v5354 = vrot.slane %v5180, %v5353
    %v5355 = vsel %vm2102, %v5354, %v5350
    %v5356 = vlaneseq
    %v5357 = vshrl.u32 %v5356, 7
    %v5358 = vsub.s32 %v2104, %v5357
    %v5359 = vrot.slane %v5181, %v5358
    %v5360 = vsel %vm2109, %v5359, %v5355
    %v5361 = vlaneseq
    %v5362 = vshrl.u32 %v5361, 7
    %v5363 = vsub.s32 %v1410, %v5362
    %v5364 = vrot.slane %v5182, %v5363
    %v5365 = vlaneseq
    %v5366 = vshrl.u32 %v5365, 7
    %v5367 = vsub.s32 %v2083, %v5366
    %v5368 = vrot.slane %v5183, %v5367
    %v5369 = vsel %vm2088, %v5368, %v5364
    %v5370 = vlaneseq
    %v5371 = vshrl.u32 %v5370, 7
    %v5372 = vsub.s32 %v2090, %v5371
    %v5373 = vrot.slane %v5184, %v5372
    %v5374 = vsel %vm2095, %v5373, %v5369
    %v5375 = vlaneseq
    %v5376 = vshrl.u32 %v5375, 7
    %v5377 = vsub.s32 %v2097, %v5376
    %v5378 = vrot.slane %v5185, %v5377
    %v5379 = vsel %vm2102, %v5378, %v5374
    %v5380 = vlaneseq
    %v5381 = vshrl.u32 %v5380, 7
    %v5382 = vsub.s32 %v2104, %v5381
    %v5383 = vrot.slane %v5186, %v5382
    %v5384 = vsel %vm2109, %v5383, %v5379
    %v5385 = vlaneseq
    %v5386 = vshrl.u32 %v5385, 7
    %v5387 = vsub.s32 %v1410, %v5386
    %v5388 = vrot.slane %v5187, %v5387
    %v5389 = vlaneseq
    %v5390 = vshrl.u32 %v5389, 7
    %v5391 = vsub.s32 %v2083, %v5390
    %v5392 = vrot.slane %v5188, %v5391
    %v5393 = vsel %vm2088, %v5392, %v5388
    %v5394 = vlaneseq
    %v5395 = vshrl.u32 %v5394, 7
    %v5396 = vsub.s32 %v2090, %v5395
    %v5397 = vrot.slane %v5189, %v5396
    %v5398 = vsel %vm2095, %v5397, %v5393
    %v5399 = vlaneseq
    %v5400 = vshrl.u32 %v5399, 7
    %v5401 = vsub.s32 %v2097, %v5400
    %v5402 = vrot.slane %v5190, %v5401
    %v5403 = vsel %vm2102, %v5402, %v5398
    %v5404 = vlaneseq
    %v5405 = vshrl.u32 %v5404, 7
    %v5406 = vsub.s32 %v2104, %v5405
    %v5407 = vrot.slane %v5191, %v5406
    %v5408 = vsel %vm2109, %v5407, %v5403
    %v5409 = vlaneseq
    %v5410 = vshrl.u32 %v5409, 7
    %v5411 = vsub.s32 %v1410, %v5410
    %v5412 = vrot.slane %v5192, %v5411
    %v5413 = vlaneseq
    %v5414 = vshrl.u32 %v5413, 7
    %v5415 = vsub.s32 %v2083, %v5414
    %v5416 = vrot.slane %v5193, %v5415
    %v5417 = vsel %vm2088, %v5416, %v5412
    %v5418 = vlaneseq
    %v5419 = vshrl.u32 %v5418, 7
    %v5420 = vsub.s32 %v2090, %v5419
    %v5421 = vrot.slane %v5194, %v5420
    %v5422 = vsel %vm2095, %v5421, %v5417
    %v5423 = vlaneseq
    %v5424 = vshrl.u32 %v5423, 7
    %v5425 = vsub.s32 %v2097, %v5424
    %v5426 = vrot.slane %v5195, %v5425
    %v5427 = vsel %vm2102, %v5426, %v5422
    %v5428 = vlaneseq
    %v5429 = vshrl.u32 %v5428, 7
    %v5430 = vsub.s32 %v2104, %v5429
    %v5431 = vrot.slane %v5196, %v5430
    %v5432 = vsel %vm2109, %v5431, %v5427
    %v5433 = vlaneseq
    %v5434 = vshrl.u32 %v5433, 7
    %v5435 = vsub.s32 %v1410, %v5434
    %v5436 = vrot.slane %v5197, %v5435
    %v5437 = vlaneseq
    %v5438 = vshrl.u32 %v5437, 7
    %v5439 = vsub.s32 %v2083, %v5438
    %v5440 = vrot.slane %v5198, %v5439
    %v5441 = vsel %vm2088, %v5440, %v5436
    %v5442 = vlaneseq
    %v5443 = vshrl.u32 %v5442, 7
    %v5444 = vsub.s32 %v2090, %v5443
    %v5445 = vrot.slane %v5199, %v5444
    %v5446 = vsel %vm2095, %v5445, %v5441
    %v5447 = vlaneseq
    %v5448 = vshrl.u32 %v5447, 7
    %v5449 = vsub.s32 %v2097, %v5448
    %v5450 = vrot.slane %v5200, %v5449
    %v5451 = vsel %vm2102, %v5450, %v5446
    %v5452 = vlaneseq
    %v5453 = vshrl.u32 %v5452, 7
    %v5454 = vsub.s32 %v2104, %v5453
    %v5455 = vrot.slane %v5201, %v5454
    %v5456 = vsel %vm2109, %v5455, %v5451
    %v5457 = vlaneseq
    %v5458 = vshrl.u32 %v5457, 7
    %v5459 = vsub.s32 %v1410, %v5458
    %v5460 = vrot.slane %v5202, %v5459
    %v5461 = vlaneseq
    %v5462 = vshrl.u32 %v5461, 7
    %v5463 = vsub.s32 %v2083, %v5462
    %v5464 = vrot.slane %v5203, %v5463
    %v5465 = vsel %vm2088, %v5464, %v5460
    %v5466 = vlaneseq
    %v5467 = vshrl.u32 %v5466, 7
    %v5468 = vsub.s32 %v2090, %v5467
    %v5469 = vrot.slane %v5204, %v5468
    %v5470 = vsel %vm2095, %v5469, %v5465
    %v5471 = vlaneseq
    %v5472 = vshrl.u32 %v5471, 7
    %v5473 = vsub.s32 %v2097, %v5472
    %v5474 = vrot.slane %v5205, %v5473
    %v5475 = vsel %vm2102, %v5474, %v5470
    %v5476 = vlaneseq
    %v5477 = vshrl.u32 %v5476, 7
    %v5478 = vsub.s32 %v2104, %v5477
    %v5479 = vrot.slane %v5206, %v5478
    %v5480 = vsel %vm2109, %v5479, %v5475
    %v5481 = vlaneseq
    %v5482 = vshrl.u32 %v5481, 7
    %v5483 = vsub.s32 %v1410, %v5482
    %v5484 = vrot.slane %v5207, %v5483
    %v5485 = vlaneseq
    %v5486 = vshrl.u32 %v5485, 7
    %v5487 = vsub.s32 %v2083, %v5486
    %v5488 = vrot.slane %v5208, %v5487
    %v5489 = vsel %vm2088, %v5488, %v5484
    %v5490 = vlaneseq
    %v5491 = vshrl.u32 %v5490, 7
    %v5492 = vsub.s32 %v2090, %v5491
    %v5493 = vrot.slane %v5209, %v5492
    %v5494 = vsel %vm2095, %v5493, %v5489
    %v5495 = vlaneseq
    %v5496 = vshrl.u32 %v5495, 7
    %v5497 = vsub.s32 %v2097, %v5496
    %v5498 = vrot.slane %v5210, %v5497
    %v5499 = vsel %vm2102, %v5498, %v5494
    %v5500 = vlaneseq
    %v5501 = vshrl.u32 %v5500, 7
    %v5502 = vsub.s32 %v2104, %v5501
    %v5503 = vrot.slane %v5211, %v5502
    %v5504 = vsel %vm2109, %v5503, %v5499
    %v5505 = vlaneseq
    %v5506 = vshrl.u32 %v5505, 7
    %v5507 = vsub.s32 %v1410, %v5506
    %v5508 = vrot.slane %v5212, %v5507
    %v5509 = vlaneseq
    %v5510 = vshrl.u32 %v5509, 7
    %v5511 = vsub.s32 %v2083, %v5510
    %v5512 = vrot.slane %v5213, %v5511
    %v5513 = vsel %vm2088, %v5512, %v5508
    %v5514 = vlaneseq
    %v5515 = vshrl.u32 %v5514, 7
    %v5516 = vsub.s32 %v2090, %v5515
    %v5517 = vrot.slane %v5214, %v5516
    %v5518 = vsel %vm2095, %v5517, %v5513
    %v5519 = vlaneseq
    %v5520 = vshrl.u32 %v5519, 7
    %v5521 = vsub.s32 %v2097, %v5520
    %v5522 = vrot.slane %v5215, %v5521
    %v5523 = vsel %vm2102, %v5522, %v5518
    %v5524 = vlaneseq
    %v5525 = vshrl.u32 %v5524, 7
    %v5526 = vsub.s32 %v2104, %v5525
    %v5527 = vrot.slane %v5216, %v5526
    %v5528 = vsel %vm2109, %v5527, %v5523
    %v5529 = vlaneseq
    %v5530 = vshrl.u32 %v5529, 7
    %v5531 = vsub.s32 %v1410, %v5530
    %v5532 = vrot.slane %v5217, %v5531
    %v5533 = vlaneseq
    %v5534 = vshrl.u32 %v5533, 7
    %v5535 = vsub.s32 %v2083, %v5534
    %v5536 = vrot.slane %v5218, %v5535
    %v5537 = vsel %vm2088, %v5536, %v5532
    %v5538 = vlaneseq
    %v5539 = vshrl.u32 %v5538, 7
    %v5540 = vsub.s32 %v2090, %v5539
    %v5541 = vrot.slane %v5219, %v5540
    %v5542 = vsel %vm2095, %v5541, %v5537
    %v5543 = vlaneseq
    %v5544 = vshrl.u32 %v5543, 7
    %v5545 = vsub.s32 %v2097, %v5544
    %v5546 = vrot.slane %v5220, %v5545
    %v5547 = vsel %vm2102, %v5546, %v5542
    %v5548 = vlaneseq
    %v5549 = vshrl.u32 %v5548, 7
    %v5550 = vsub.s32 %v2104, %v5549
    %v5551 = vrot.slane %v5221, %v5550
    %v5552 = vsel %vm2109, %v5551, %v5547
    %v5553 = vlaneseq
    %v5554 = vshrl.u32 %v5553, 7
    %v5555 = vsub.s32 %v1410, %v5554
    %v5556 = vrot.slane %v5222, %v5555
    %v5557 = vlaneseq
    %v5558 = vshrl.u32 %v5557, 7
    %v5559 = vsub.s32 %v2083, %v5558
    %v5560 = vrot.slane %v5223, %v5559
    %v5561 = vsel %vm2088, %v5560, %v5556
    %v5562 = vlaneseq
    %v5563 = vshrl.u32 %v5562, 7
    %v5564 = vsub.s32 %v2090, %v5563
    %v5565 = vrot.slane %v5224, %v5564
    %v5566 = vsel %vm2095, %v5565, %v5561
    %v5567 = vlaneseq
    %v5568 = vshrl.u32 %v5567, 7
    %v5569 = vsub.s32 %v2097, %v5568
    %v5570 = vrot.slane %v5225, %v5569
    %v5571 = vsel %vm2102, %v5570, %v5566
    %v5572 = vlaneseq
    %v5573 = vshrl.u32 %v5572, 7
    %v5574 = vsub.s32 %v2104, %v5573
    %v5575 = vrot.slane %v5226, %v5574
    %v5576 = vsel %vm2109, %v5575, %v5571
    %v5577 = vlaneseq
    %v5578 = vshrl.u32 %v5577, 7
    %v5579 = vsub.s32 %v1410, %v5578
    %v5580 = vrot.slane %v5227, %v5579
    %v5581 = vlaneseq
    %v5582 = vshrl.u32 %v5581, 7
    %v5583 = vsub.s32 %v2083, %v5582
    %v5584 = vrot.slane %v5228, %v5583
    %v5585 = vsel %vm2088, %v5584, %v5580
    %v5586 = vlaneseq
    %v5587 = vshrl.u32 %v5586, 7
    %v5588 = vsub.s32 %v2090, %v5587
    %v5589 = vrot.slane %v5229, %v5588
    %v5590 = vsel %vm2095, %v5589, %v5585
    %v5591 = vlaneseq
    %v5592 = vshrl.u32 %v5591, 7
    %v5593 = vsub.s32 %v2097, %v5592
    %v5594 = vrot.slane %v5230, %v5593
    %v5595 = vsel %vm2102, %v5594, %v5590
    %v5596 = vlaneseq
    %v5597 = vshrl.u32 %v5596, 7
    %v5598 = vsub.s32 %v2104, %v5597
    %v5599 = vrot.slane %v5231, %v5598
    %v5600 = vsel %vm2109, %v5599, %v5595
    %v5601 = vlaneseq
    %v5602 = vshrl.u32 %v5601, 7
    %v5603 = vsub.s32 %v1410, %v5602
    %v5604 = vrot.slane %v5232, %v5603
    %v5605 = vlaneseq
    %v5606 = vshrl.u32 %v5605, 7
    %v5607 = vsub.s32 %v2083, %v5606
    %v5608 = vrot.slane %v5233, %v5607
    %v5609 = vsel %vm2088, %v5608, %v5604
    %v5610 = vlaneseq
    %v5611 = vshrl.u32 %v5610, 7
    %v5612 = vsub.s32 %v2090, %v5611
    %v5613 = vrot.slane %v5234, %v5612
    %v5614 = vsel %vm2095, %v5613, %v5609
    %v5615 = vlaneseq
    %v5616 = vshrl.u32 %v5615, 7
    %v5617 = vsub.s32 %v2097, %v5616
    %v5618 = vrot.slane %v5235, %v5617
    %v5619 = vsel %vm2102, %v5618, %v5614
    %v5620 = vlaneseq
    %v5621 = vshrl.u32 %v5620, 7
    %v5622 = vsub.s32 %v2104, %v5621
    %v5623 = vrot.slane %v5236, %v5622
    %v5624 = vsel %vm2109, %v5623, %v5619
    %v5625 = vlaneseq
    %v5626 = vshrl.u32 %v5625, 7
    %v5627 = vsub.s32 %v1410, %v5626
    %v5628 = vrot.slane %v5237, %v5627
    %v5629 = vlaneseq
    %v5630 = vshrl.u32 %v5629, 7
    %v5631 = vsub.s32 %v2083, %v5630
    %v5632 = vrot.slane %v5238, %v5631
    %v5633 = vsel %vm2088, %v5632, %v5628
    %v5634 = vlaneseq
    %v5635 = vshrl.u32 %v5634, 7
    %v5636 = vsub.s32 %v2090, %v5635
    %v5637 = vrot.slane %v5239, %v5636
    %v5638 = vsel %vm2095, %v5637, %v5633
    %v5639 = vlaneseq
    %v5640 = vshrl.u32 %v5639, 7
    %v5641 = vsub.s32 %v2097, %v5640
    %v5642 = vrot.slane %v5240, %v5641
    %v5643 = vsel %vm2102, %v5642, %v5638
    %v5644 = vlaneseq
    %v5645 = vshrl.u32 %v5644, 7
    %v5646 = vsub.s32 %v2104, %v5645
    %v5647 = vrot.slane %v5241, %v5646
    %v5648 = vsel %vm2109, %v5647, %v5643
    %v5649 = vlaneseq
    %v5650 = vshrl.u32 %v5649, 7
    %v5651 = vsub.s32 %v1410, %v5650
    %v5652 = vrot.slane %v5242, %v5651
    %v5653 = vlaneseq
    %v5654 = vshrl.u32 %v5653, 7
    %v5655 = vsub.s32 %v2083, %v5654
    %v5656 = vrot.slane %v5243, %v5655
    %v5657 = vsel %vm2088, %v5656, %v5652
    %v5658 = vlaneseq
    %v5659 = vshrl.u32 %v5658, 7
    %v5660 = vsub.s32 %v2090, %v5659
    %v5661 = vrot.slane %v5244, %v5660
    %v5662 = vsel %vm2095, %v5661, %v5657
    %v5663 = vlaneseq
    %v5664 = vshrl.u32 %v5663, 7
    %v5665 = vsub.s32 %v2097, %v5664
    %v5666 = vrot.slane %v5245, %v5665
    %v5667 = vsel %vm2102, %v5666, %v5662
    %v5668 = vlaneseq
    %v5669 = vshrl.u32 %v5668, 7
    %v5670 = vsub.s32 %v2104, %v5669
    %v5671 = vrot.slane %v5246, %v5670
    %v5672 = vsel %vm2109, %v5671, %v5667
    %v5673 = vlaneseq
    %v5674 = vshrl.u32 %v5673, 7
    %v5675 = vsub.s32 %v1410, %v5674
    %v5676 = vrot.slane %v5247, %v5675
    %v5677 = vlaneseq
    %v5678 = vshrl.u32 %v5677, 7
    %v5679 = vsub.s32 %v2083, %v5678
    %v5680 = vrot.slane %v5248, %v5679
    %v5681 = vsel %vm2088, %v5680, %v5676
    %v5682 = vlaneseq
    %v5683 = vshrl.u32 %v5682, 7
    %v5684 = vsub.s32 %v2090, %v5683
    %v5685 = vrot.slane %v5249, %v5684
    %v5686 = vsel %vm2095, %v5685, %v5681
    %v5687 = vlaneseq
    %v5688 = vshrl.u32 %v5687, 7
    %v5689 = vsub.s32 %v2097, %v5688
    %v5690 = vrot.slane %v5250, %v5689
    %v5691 = vsel %vm2102, %v5690, %v5686
    %v5692 = vlaneseq
    %v5693 = vshrl.u32 %v5692, 7
    %v5694 = vsub.s32 %v2104, %v5693
    %v5695 = vrot.slane %v5251, %v5694
    %v5696 = vsel %vm2109, %v5695, %v5691
    %v5697 = vlaneseq
    %v5698 = vshrl.u32 %v5697, 7
    %v5699 = vsub.s32 %v1410, %v5698
    %v5700 = vrot.slane %v5252, %v5699
    %v5701 = vlaneseq
    %v5702 = vshrl.u32 %v5701, 7
    %v5703 = vsub.s32 %v2083, %v5702
    %v5704 = vrot.slane %v5253, %v5703
    %v5705 = vsel %vm2088, %v5704, %v5700
    %v5706 = vlaneseq
    %v5707 = vshrl.u32 %v5706, 7
    %v5708 = vsub.s32 %v2090, %v5707
    %v5709 = vrot.slane %v5254, %v5708
    %v5710 = vsel %vm2095, %v5709, %v5705
    %v5711 = vlaneseq
    %v5712 = vshrl.u32 %v5711, 7
    %v5713 = vsub.s32 %v2097, %v5712
    %v5714 = vrot.slane %v5255, %v5713
    %v5715 = vsel %vm2102, %v5714, %v5710
    %v5716 = vlaneseq
    %v5717 = vshrl.u32 %v5716, 7
    %v5718 = vsub.s32 %v2104, %v5717
    %v5719 = vrot.slane %v5256, %v5718
    %v5720 = vsel %vm2109, %v5719, %v5715
    %v5721 = vsel %vm2471, %v5384, %v5360
    %v5722 = vsel %vm2473, %v5408, %v5721
    %v5723 = vsel %vm2475, %v5432, %v5722
    %v5724 = vsel %vm2477, %v5456, %v5723
    %v5725 = vsel %vm2479, %v5480, %v5724
    %v5726 = vsel %vm2481, %v5504, %v5725
    %v5727 = vsel %vm2483, %v5528, %v5726
    %v5728 = vsel %vm2471, %v5576, %v5552
    %v5729 = vsel %vm2473, %v5600, %v5728
    %v5730 = vsel %vm2475, %v5624, %v5729
    %v5731 = vsel %vm2477, %v5648, %v5730
    %v5732 = vsel %vm2479, %v5672, %v5731
    %v5733 = vsel %vm2481, %v5696, %v5732
    %v5734 = vsel %vm2483, %v5720, %v5733
    %v5737 = vsub.f32 %v4672, %v5727
    %v5738 = vsub.f32 %v4673, %v5734
    %s5739 = sld [smem:[#allocation8 + $0x3]]
    %v5740 = vstv %s5739
    %v5741 = vmul.f32 %v5740, %v5737
    %v5742 = vmul.f32 %v5740, %v5738
    %v5743 = vtanh.pop %v5741
    %v5744 = vtanh.pop %v5742
    %s5745 = sld [smem:[#allocation6 + $0x3]]
    %v5746 = vsub.f32 %v5743, %v4672
    %v5747 = vsub.f32 %v5744, %v4673
    %v5748 = vstv %s5745
    %v5749 = vmul.f32 %v5748, %v5746
    %v5750 = vmul.f32 %v5748, %v5747
    %v5751 = vadd.f32 %v4672, %v5749
    %v5752 = vadd.f32 %v4673, %v5750
    %v5753 = vsel %vm1411, -1.0, %v5751
    %v5754 = vsel %vm1411, -1.0, %v5752
    %s5755 = sld [smem:[#allocation2 + $0x4]]
    %s5756 = smul.f32 %s5755, 2.0
    %v5759 = vcombine.high %v5753, %v5753
    %v5761 = vunpack.c.l.s4 1966171168
    %v5762 = vunpack.c.0.s8 %v5761
    %v5763 = vlaneseq
    %v5764 = vshrl.u32 %v5763, 7
    %v5765 = vsub.s32 %v5762, %v5764
    %v5766 = vrot.slane %v5753, %v5765
    %v5768 = vunpack.c.l.s4 1966171168
    %v5769 = vunpack.c.0.s8 %v5768
    %v5770 = vlaneseq
    %v5771 = vshrl.u32 %v5770, 7
    %v5772 = vsub.s32 %v5769, %v5771
    %v5773 = vrot.slane %v5759, %v5772
    %v5774 = vcombine.high %v5766, %v5766
    %v5775 = vcombine.high %v5773, %v5773
    %v5777 = vunpack.c.l.s4 1966171168
    %v5778 = vunpack.c.0.s8 %v5777
    %v5779 = vlaneseq
    %v5780 = vshrl.u32 %v5779, 7
    %v5781 = vsub.s32 %v5778, %v5780
    %v5782 = vrot.slane %v5766, %v5781
    %v5784 = vunpack.c.l.s4 1966171168
    %v5785 = vunpack.c.0.s8 %v5784
    %v5786 = vlaneseq
    %v5787 = vshrl.u32 %v5786, 7
    %v5788 = vsub.s32 %v5785, %v5787
    %v5789 = vrot.slane %v5773, %v5788
    %v5791 = vunpack.c.l.s4 1966171168
    %v5792 = vunpack.c.0.s8 %v5791
    %v5793 = vlaneseq
    %v5794 = vshrl.u32 %v5793, 7
    %v5795 = vsub.s32 %v5792, %v5794
    %v5796 = vrot.slane %v5774, %v5795
    %v5798 = vunpack.c.l.s4 1966171168
    %v5799 = vunpack.c.0.s8 %v5798
    %v5800 = vlaneseq
    %v5801 = vshrl.u32 %v5800, 7
    %v5802 = vsub.s32 %v5799, %v5801
    %v5803 = vrot.slane %v5775, %v5802
    %v5804 = vcombine.high %v5782, %v5782
    %v5805 = vcombine.high %v5789, %v5789
    %v5806 = vcombine.high %v5796, %v5796
    %v5807 = vcombine.high %v5803, %v5803
    %v5808 = vcombine.high %v5754, %v5754
    %v5810 = vunpack.c.l.s4 1966171168
    %v5811 = vunpack.c.0.s8 %v5810
    %v5812 = vlaneseq
    %v5813 = vshrl.u32 %v5812, 7
    %v5814 = vsub.s32 %v5811, %v5813
    %v5815 = vrot.slane %v5754, %v5814
    %v5817 = vunpack.c.l.s4 1966171168
    %v5818 = vunpack.c.0.s8 %v5817
    %v5819 = vlaneseq
    %v5820 = vshrl.u32 %v5819, 7
    %v5821 = vsub.s32 %v5818, %v5820
    %v5822 = vrot.slane %v5808, %v5821
    %v5823 = vcombine.high %v5815, %v5815
    %v5824 = vcombine.high %v5822, %v5822
    %v5826 = vunpack.c.l.s4 1966171168
    %v5827 = vunpack.c.0.s8 %v5826
    %v5828 = vlaneseq
    %v5829 = vshrl.u32 %v5828, 7
    %v5830 = vsub.s32 %v5827, %v5829
    %v5831 = vrot.slane %v5815, %v5830
    %v5833 = vunpack.c.l.s4 1966171168
    %v5834 = vunpack.c.0.s8 %v5833
    %v5835 = vlaneseq
    %v5836 = vshrl.u32 %v5835, 7
    %v5837 = vsub.s32 %v5834, %v5836
    %v5838 = vrot.slane %v5822, %v5837
    %v5840 = vunpack.c.l.s4 1966171168
    %v5841 = vunpack.c.0.s8 %v5840
    %v5842 = vlaneseq
    %v5843 = vshrl.u32 %v5842, 7
    %v5844 = vsub.s32 %v5841, %v5843
    %v5845 = vrot.slane %v5823, %v5844
    %v5847 = vunpack.c.l.s4 1966171168
    %v5848 = vunpack.c.0.s8 %v5847
    %v5849 = vlaneseq
    %v5850 = vshrl.u32 %v5849, 7
    %v5851 = vsub.s32 %v5848, %v5850
    %v5852 = vrot.slane %v5824, %v5851
    %v5853 = vcombine.high %v5831, %v5831
    %v5854 = vcombine.high %v5838, %v5838
    %v5855 = vcombine.high %v5845, %v5845
    %v5856 = vcombine.high %v5852, %v5852
    %v5857 = vlaneseq
    %v5858 = vshrl.u32 %v5857, 7
    %v5859 = vsub.s32 0, %v5858
    %v5860 = vrot.slane %v5782, %v5859
    %v5861 = vlaneseq
    %v5862 = vshrl.u32 %v5861, 7
    %v5863 = vsub.s32 0, %v5862
    %v5864 = vrot.slane %v5796, %v5863
    %v5865 = vlaneseq
    %v5866 = vshrl.u32 %v5865, 7
    %v5867 = vsub.s32 0, %v5866
    %v5868 = vrot.slane %v5804, %v5867
    %v5869 = vlaneseq
    %v5870 = vshrl.u32 %v5869, 7
    %v5871 = vsub.s32 0, %v5870
    %v5872 = vrot.slane %v5806, %v5871
    %v5873 = vlaneseq
    %v5874 = vshrl.u32 %v5873, 7
    %v5875 = vsub.s32 0, %v5874
    %v5876 = vrot.slane %v5789, %v5875
    %v5877 = vlaneseq
    %v5878 = vshrl.u32 %v5877, 7
    %v5879 = vsub.s32 0, %v5878
    %v5880 = vrot.slane %v5803, %v5879
    %v5881 = vlaneseq
    %v5882 = vshrl.u32 %v5881, 7
    %v5883 = vsub.s32 0, %v5882
    %v5884 = vrot.slane %v5805, %v5883
    %v5885 = vlaneseq
    %v5886 = vshrl.u32 %v5885, 7
    %v5887 = vsub.s32 0, %v5886
    %v5888 = vrot.slane %v5807, %v5887
    %v5889 = vlaneseq
    %v5890 = vshrl.u32 %v5889, 7
    %v5891 = vsub.s32 0, %v5890
    %v5892 = vrot.slane %v5831, %v5891
    %v5893 = vlaneseq
    %v5894 = vshrl.u32 %v5893, 7
    %v5895 = vsub.s32 0, %v5894
    %v5896 = vrot.slane %v5845, %v5895
    %v5897 = vlaneseq
    %v5898 = vshrl.u32 %v5897, 7
    %v5899 = vsub.s32 0, %v5898
    %v5900 = vrot.slane %v5853, %v5899
    %v5901 = vlaneseq
    %v5902 = vshrl.u32 %v5901, 7
    %v5903 = vsub.s32 0, %v5902
    %v5904 = vrot.slane %v5855, %v5903
    %v5905 = vlaneseq
    %v5906 = vshrl.u32 %v5905, 7
    %v5907 = vsub.s32 0, %v5906
    %v5908 = vrot.slane %v5838, %v5907
    %v5909 = vlaneseq
    %v5910 = vshrl.u32 %v5909, 7
    %v5911 = vsub.s32 0, %v5910
    %v5912 = vrot.slane %v5852, %v5911
    %v5913 = vlaneseq
    %v5914 = vshrl.u32 %v5913, 7
    %v5915 = vsub.s32 0, %v5914
    %v5916 = vrot.slane %v5854, %v5915
    %v5917 = vlaneseq
    %v5918 = vshrl.u32 %v5917, 7
    %v5919 = vsub.s32 0, %v5918
    %v5920 = vrot.slane %v5856, %v5919
    %v5937 = vmul.f32 %v218, %v5860
    %v5938 = vmul.f32 %v221, %v5860
    %v5939 = vmul.f32 %v226, %v5860
    %v5940 = vmul.f32 %v229, %v5860
    %v5941 = vmul.f32 %v234, %v5860
    %v5942 = vmul.f32 %v296, %v5864
    %v5943 = vmul.f32 %v299, %v5864
    %v5944 = vmul.f32 %v304, %v5864
    %v5945 = vmul.f32 %v307, %v5864
    %v5946 = vmul.f32 %v312, %v5864
    %v5947 = vmul.f32 %v374, %v5868
    %v5948 = vmul.f32 %v377, %v5868
    %v5949 = vmul.f32 %v382, %v5868
    %v5950 = vmul.f32 %v385, %v5868
    %v5951 = vmul.f32 %v390, %v5868
    %v5952 = vmul.f32 %v452, %v5872
    %v5953 = vmul.f32 %v455, %v5872
    %v5954 = vmul.f32 %v460, %v5872
    %v5955 = vmul.f32 %v463, %v5872
    %v5956 = vmul.f32 %v468, %v5872
    %v5957 = vmul.f32 %v530, %v5876
    %v5958 = vmul.f32 %v533, %v5876
    %v5959 = vmul.f32 %v538, %v5876
    %v5960 = vmul.f32 %v541, %v5876
    %v5961 = vmul.f32 %v546, %v5876
    %v5962 = vmul.f32 %v608, %v5880
    %v5963 = vmul.f32 %v611, %v5880
    %v5964 = vmul.f32 %v616, %v5880
    %v5965 = vmul.f32 %v619, %v5880
    %v5966 = vmul.f32 %v624, %v5880
    %v5967 = vmul.f32 %v686, %v5884
    %v5968 = vmul.f32 %v689, %v5884
    %v5969 = vmul.f32 %v694, %v5884
    %v5970 = vmul.f32 %v697, %v5884
    %v5971 = vmul.f32 %v702, %v5884
    %v5972 = vmul.f32 %v764, %v5888
    %v5973 = vmul.f32 %v767, %v5888
    %v5974 = vmul.f32 %v772, %v5888
    %v5975 = vmul.f32 %v775, %v5888
    %v5976 = vmul.f32 %v780, %v5888
    %v5977 = vmul.f32 %v842, %v5892
    %v5978 = vmul.f32 %v845, %v5892
    %v5979 = vmul.f32 %v850, %v5892
    %v5980 = vmul.f32 %v853, %v5892
    %v5981 = vmul.f32 %v858, %v5892
    %v5982 = vmul.f32 %v920, %v5896
    %v5983 = vmul.f32 %v923, %v5896
    %v5984 = vmul.f32 %v928, %v5896
    %v5985 = vmul.f32 %v931, %v5896
    %v5986 = vmul.f32 %v936, %v5896
    %v5987 = vmul.f32 %v998, %v5900
    %v5988 = vmul.f32 %v1001, %v5900
    %v5989 = vmul.f32 %v1006, %v5900
    %v5990 = vmul.f32 %v1009, %v5900
    %v5991 = vmul.f32 %v1014, %v5900
    %v5992 = vmul.f32 %v1076, %v5904
    %v5993 = vmul.f32 %v1079, %v5904
    %v5994 = vmul.f32 %v1084, %v5904
    %v5995 = vmul.f32 %v1087, %v5904
    %v5996 = vmul.f32 %v1092, %v5904
    %v5997 = vmul.f32 %v1154, %v5908
    %v5998 = vmul.f32 %v1157, %v5908
    %v5999 = vmul.f32 %v1162, %v5908
    %v6000 = vmul.f32 %v1165, %v5908
    %v6001 = vmul.f32 %v1170, %v5908
    %v6002 = vmul.f32 %v1232, %v5912
    %v6003 = vmul.f32 %v1235, %v5912
    %v6004 = vmul.f32 %v1240, %v5912
    %v6005 = vmul.f32 %v1243, %v5912
    %v6006 = vmul.f32 %v1248, %v5912
    %v6007 = vmul.f32 %v1310, %v5916
    %v6008 = vmul.f32 %v1313, %v5916
    %v6009 = vmul.f32 %v1318, %v5916
    %v6010 = vmul.f32 %v1321, %v5916
    %v6011 = vmul.f32 %v1326, %v5916
    %v6012 = vmul.f32 %v1388, %v5920
    %v6013 = vmul.f32 %v1391, %v5920
    %v6014 = vmul.f32 %v1396, %v5920
    %v6015 = vmul.f32 %v1399, %v5920
    %v6016 = vmul.f32 %v1404, %v5920
    %v6017 = vsel %vm1676, %v5937, 0.0
    %6018 = vadd.xlane.f32.xlu0 %v6017
    %v6019 = vpop.xlane.xlu0 %6018
    %v6020 = vsel %vm1676, %v5938, 0.0
    %6021 = vadd.xlane.f32.xlu0 %v6020
    %v6022 = vpop.xlane.xlu0 %6021
    %v6023 = vsel %vm1676, %v5939, 0.0
    %6024 = vadd.xlane.f32.xlu0 %v6023
    %v6025 = vpop.xlane.xlu0 %6024
    %v6026 = vsel %vm1676, %v5940, 0.0
    %6027 = vadd.xlane.f32.xlu0 %v6026
    %v6028 = vpop.xlane.xlu0 %6027
    %v6029 = vsel %vm1689, %v5941, 0.0
    %6030 = vadd.xlane.f32.xlu0 %v6029
    %v6031 = vpop.xlane.xlu0 %6030
    %v6032 = vsel %vm1676, %v5942, 0.0
    %6033 = vadd.xlane.f32.xlu0 %v6032
    %v6034 = vpop.xlane.xlu0 %6033
    %v6035 = vsel %vm1676, %v5943, 0.0
    %6036 = vadd.xlane.f32.xlu0 %v6035
    %v6037 = vpop.xlane.xlu0 %6036
    %v6038 = vsel %vm1676, %v5944, 0.0
    %6039 = vadd.xlane.f32.xlu0 %v6038
    %v6040 = vpop.xlane.xlu0 %6039
    %v6041 = vsel %vm1676, %v5945, 0.0
    %6042 = vadd.xlane.f32.xlu0 %v6041
    %v6043 = vpop.xlane.xlu0 %6042
    %v6044 = vsel %vm1689, %v5946, 0.0
    %6045 = vadd.xlane.f32.xlu0 %v6044
    %v6046 = vpop.xlane.xlu0 %6045
    %v6047 = vsel %vm1676, %v5947, 0.0
    %6048 = vadd.xlane.f32.xlu0 %v6047
    %v6049 = vpop.xlane.xlu0 %6048
    %v6050 = vsel %vm1676, %v5948, 0.0
    %6051 = vadd.xlane.f32.xlu0 %v6050
    %v6052 = vpop.xlane.xlu0 %6051
    %v6053 = vsel %vm1676, %v5949, 0.0
    %6054 = vadd.xlane.f32.xlu0 %v6053
    %v6055 = vpop.xlane.xlu0 %6054
    %v6056 = vsel %vm1676, %v5950, 0.0
    %6057 = vadd.xlane.f32.xlu0 %v6056
    %v6058 = vpop.xlane.xlu0 %6057
    %v6059 = vsel %vm1689, %v5951, 0.0
    %6060 = vadd.xlane.f32.xlu0 %v6059
    %v6061 = vpop.xlane.xlu0 %6060
    %v6062 = vsel %vm1676, %v5952, 0.0
    %6063 = vadd.xlane.f32.xlu0 %v6062
    %v6064 = vpop.xlane.xlu0 %6063
    %v6065 = vsel %vm1676, %v5953, 0.0
    %6066 = vadd.xlane.f32.xlu0 %v6065
    %v6067 = vpop.xlane.xlu0 %6066
    %v6068 = vsel %vm1676, %v5954, 0.0
    %6069 = vadd.xlane.f32.xlu0 %v6068
    %v6070 = vpop.xlane.xlu0 %6069
    %v6071 = vsel %vm1676, %v5955, 0.0
    %6072 = vadd.xlane.f32.xlu0 %v6071
    %v6073 = vpop.xlane.xlu0 %6072
    %v6074 = vsel %vm1689, %v5956, 0.0
    %6075 = vadd.xlane.f32.xlu0 %v6074
    %v6076 = vpop.xlane.xlu0 %6075
    %v6077 = vsel %vm1676, %v5957, 0.0
    %6078 = vadd.xlane.f32.xlu0 %v6077
    %v6079 = vpop.xlane.xlu0 %6078
    %v6080 = vsel %vm1676, %v5958, 0.0
    %6081 = vadd.xlane.f32.xlu0 %v6080
    %v6082 = vpop.xlane.xlu0 %6081
    %v6083 = vsel %vm1676, %v5959, 0.0
    %6084 = vadd.xlane.f32.xlu0 %v6083
    %v6085 = vpop.xlane.xlu0 %6084
    %v6086 = vsel %vm1676, %v5960, 0.0
    %6087 = vadd.xlane.f32.xlu0 %v6086
    %v6088 = vpop.xlane.xlu0 %6087
    %v6089 = vsel %vm1689, %v5961, 0.0
    %6090 = vadd.xlane.f32.xlu0 %v6089
    %v6091 = vpop.xlane.xlu0 %6090
    %v6092 = vsel %vm1676, %v5962, 0.0
    %6093 = vadd.xlane.f32.xlu0 %v6092
    %v6094 = vpop.xlane.xlu0 %6093
    %v6095 = vsel %vm1676, %v5963, 0.0
    %6096 = vadd.xlane.f32.xlu0 %v6095
    %v6097 = vpop.xlane.xlu0 %6096
    %v6098 = vsel %vm1676, %v5964, 0.0
    %6099 = vadd.xlane.f32.xlu0 %v6098
    %v6100 = vpop.xlane.xlu0 %6099
    %v6101 = vsel %vm1676, %v5965, 0.0
    %6102 = vadd.xlane.f32.xlu0 %v6101
    %v6103 = vpop.xlane.xlu0 %6102
    %v6104 = vsel %vm1689, %v5966, 0.0
    %6105 = vadd.xlane.f32.xlu0 %v6104
    %v6106 = vpop.xlane.xlu0 %6105
    %v6107 = vsel %vm1676, %v5967, 0.0
    %6108 = vadd.xlane.f32.xlu0 %v6107
    %v6109 = vpop.xlane.xlu0 %6108
    %v6110 = vsel %vm1676, %v5968, 0.0
    %6111 = vadd.xlane.f32.xlu0 %v6110
    %v6112 = vpop.xlane.xlu0 %6111
    %v6113 = vsel %vm1676, %v5969, 0.0
    %6114 = vadd.xlane.f32.xlu0 %v6113
    %v6115 = vpop.xlane.xlu0 %6114
    %v6116 = vsel %vm1676, %v5970, 0.0
    %6117 = vadd.xlane.f32.xlu0 %v6116
    %v6118 = vpop.xlane.xlu0 %6117
    %v6119 = vsel %vm1689, %v5971, 0.0
    %6120 = vadd.xlane.f32.xlu0 %v6119
    %v6121 = vpop.xlane.xlu0 %6120
    %v6122 = vsel %vm1676, %v5972, 0.0
    %6123 = vadd.xlane.f32.xlu0 %v6122
    %v6124 = vpop.xlane.xlu0 %6123
    %v6125 = vsel %vm1676, %v5973, 0.0
    %6126 = vadd.xlane.f32.xlu0 %v6125
    %v6127 = vpop.xlane.xlu0 %6126
    %v6128 = vsel %vm1676, %v5974, 0.0
    %6129 = vadd.xlane.f32.xlu0 %v6128
    %v6130 = vpop.xlane.xlu0 %6129
    %v6131 = vsel %vm1676, %v5975, 0.0
    %6132 = vadd.xlane.f32.xlu0 %v6131
    %v6133 = vpop.xlane.xlu0 %6132
    %v6134 = vsel %vm1689, %v5976, 0.0
    %6135 = vadd.xlane.f32.xlu0 %v6134
    %v6136 = vpop.xlane.xlu0 %6135
    %v6137 = vsel %vm1676, %v5977, 0.0
    %6138 = vadd.xlane.f32.xlu0 %v6137
    %v6139 = vpop.xlane.xlu0 %6138
    %v6140 = vsel %vm1676, %v5978, 0.0
    %6141 = vadd.xlane.f32.xlu0 %v6140
    %v6142 = vpop.xlane.xlu0 %6141
    %v6143 = vsel %vm1676, %v5979, 0.0
    %6144 = vadd.xlane.f32.xlu0 %v6143
    %v6145 = vpop.xlane.xlu0 %6144
    %v6146 = vsel %vm1676, %v5980, 0.0
    %6147 = vadd.xlane.f32.xlu0 %v6146
    %v6148 = vpop.xlane.xlu0 %6147
    %v6149 = vsel %vm1689, %v5981, 0.0
    %6150 = vadd.xlane.f32.xlu0 %v6149
    %v6151 = vpop.xlane.xlu0 %6150
    %v6152 = vsel %vm1676, %v5982, 0.0
    %6153 = vadd.xlane.f32.xlu0 %v6152
    %v6154 = vpop.xlane.xlu0 %6153
    %v6155 = vsel %vm1676, %v5983, 0.0
    %6156 = vadd.xlane.f32.xlu0 %v6155
    %v6157 = vpop.xlane.xlu0 %6156
    %v6158 = vsel %vm1676, %v5984, 0.0
    %6159 = vadd.xlane.f32.xlu0 %v6158
    %v6160 = vpop.xlane.xlu0 %6159
    %v6161 = vsel %vm1676, %v5985, 0.0
    %6162 = vadd.xlane.f32.xlu0 %v6161
    %v6163 = vpop.xlane.xlu0 %6162
    %v6164 = vsel %vm1689, %v5986, 0.0
    %6165 = vadd.xlane.f32.xlu0 %v6164
    %v6166 = vpop.xlane.xlu0 %6165
    %v6167 = vsel %vm1676, %v5987, 0.0
    %6168 = vadd.xlane.f32.xlu0 %v6167
    %v6169 = vpop.xlane.xlu0 %6168
    %v6170 = vsel %vm1676, %v5988, 0.0
    %6171 = vadd.xlane.f32.xlu0 %v6170
    %v6172 = vpop.xlane.xlu0 %6171
    %v6173 = vsel %vm1676, %v5989, 0.0
    %6174 = vadd.xlane.f32.xlu0 %v6173
    %v6175 = vpop.xlane.xlu0 %6174
    %v6176 = vsel %vm1676, %v5990, 0.0
    %6177 = vadd.xlane.f32.xlu0 %v6176
    %v6178 = vpop.xlane.xlu0 %6177
    %v6179 = vsel %vm1689, %v5991, 0.0
    %6180 = vadd.xlane.f32.xlu0 %v6179
    %v6181 = vpop.xlane.xlu0 %6180
    %v6182 = vsel %vm1676, %v5992, 0.0
    %6183 = vadd.xlane.f32.xlu0 %v6182
    %v6184 = vpop.xlane.xlu0 %6183
    %v6185 = vsel %vm1676, %v5993, 0.0
    %6186 = vadd.xlane.f32.xlu0 %v6185
    %v6187 = vpop.xlane.xlu0 %6186
    %v6188 = vsel %vm1676, %v5994, 0.0
    %6189 = vadd.xlane.f32.xlu0 %v6188
    %v6190 = vpop.xlane.xlu0 %6189
    %v6191 = vsel %vm1676, %v5995, 0.0
    %6192 = vadd.xlane.f32.xlu0 %v6191
    %v6193 = vpop.xlane.xlu0 %6192
    %v6194 = vsel %vm1689, %v5996, 0.0
    %6195 = vadd.xlane.f32.xlu0 %v6194
    %v6196 = vpop.xlane.xlu0 %6195
    %v6197 = vsel %vm1676, %v5997, 0.0
    %6198 = vadd.xlane.f32.xlu0 %v6197
    %v6199 = vpop.xlane.xlu0 %6198
    %v6200 = vsel %vm1676, %v5998, 0.0
    %6201 = vadd.xlane.f32.xlu0 %v6200
    %v6202 = vpop.xlane.xlu0 %6201
    %v6203 = vsel %vm1676, %v5999, 0.0
    %6204 = vadd.xlane.f32.xlu0 %v6203
    %v6205 = vpop.xlane.xlu0 %6204
    %v6206 = vsel %vm1676, %v6000, 0.0
    %6207 = vadd.xlane.f32.xlu0 %v6206
    %v6208 = vpop.xlane.xlu0 %6207
    %v6209 = vsel %vm1689, %v6001, 0.0
    %6210 = vadd.xlane.f32.xlu0 %v6209
    %v6211 = vpop.xlane.xlu0 %6210
    %v6212 = vsel %vm1676, %v6002, 0.0
    %6213 = vadd.xlane.f32.xlu0 %v6212
    %v6214 = vpop.xlane.xlu0 %6213
    %v6215 = vsel %vm1676, %v6003, 0.0
    %6216 = vadd.xlane.f32.xlu0 %v6215
    %v6217 = vpop.xlane.xlu0 %6216
    %v6218 = vsel %vm1676, %v6004, 0.0
    %6219 = vadd.xlane.f32.xlu0 %v6218
    %v6220 = vpop.xlane.xlu0 %6219
    %v6221 = vsel %vm1676, %v6005, 0.0
    %6222 = vadd.xlane.f32.xlu0 %v6221
    %v6223 = vpop.xlane.xlu0 %6222
    %v6224 = vsel %vm1689, %v6006, 0.0
    %6225 = vadd.xlane.f32.xlu0 %v6224
    %v6226 = vpop.xlane.xlu0 %6225
    %v6227 = vsel %vm1676, %v6007, 0.0
    %6228 = vadd.xlane.f32.xlu0 %v6227
    %v6229 = vpop.xlane.xlu0 %6228
    %v6230 = vsel %vm1676, %v6008, 0.0
    %6231 = vadd.xlane.f32.xlu0 %v6230
    %v6232 = vpop.xlane.xlu0 %6231
    %v6233 = vsel %vm1676, %v6009, 0.0
    %6234 = vadd.xlane.f32.xlu0 %v6233
    %v6235 = vpop.xlane.xlu0 %6234
    %v6236 = vsel %vm1676, %v6010, 0.0
    %6237 = vadd.xlane.f32.xlu0 %v6236
    %v6238 = vpop.xlane.xlu0 %6237
    %v6239 = vsel %vm1689, %v6011, 0.0
    %6240 = vadd.xlane.f32.xlu0 %v6239
    %v6241 = vpop.xlane.xlu0 %6240
    %v6242 = vsel %vm1676, %v6012, 0.0
    %6243 = vadd.xlane.f32.xlu0 %v6242
    %v6244 = vpop.xlane.xlu0 %6243
    %v6245 = vsel %vm1676, %v6013, 0.0
    %6246 = vadd.xlane.f32.xlu0 %v6245
    %v6247 = vpop.xlane.xlu0 %6246
    %v6248 = vsel %vm1676, %v6014, 0.0
    %6249 = vadd.xlane.f32.xlu0 %v6248
    %v6250 = vpop.xlane.xlu0 %6249
    %v6251 = vsel %vm1676, %v6015, 0.0
    %6252 = vadd.xlane.f32.xlu0 %v6251
    %v6253 = vpop.xlane.xlu0 %6252
    %v6254 = vsel %vm1689, %v6016, 0.0
    %6255 = vadd.xlane.f32.xlu0 %v6254
    %v6256 = vpop.xlane.xlu0 %6255
    %v6257 = vstv %s5756
    %v6258 = vmul.f32 %v6257, %v6019
    %v6259 = vmul.f32 %v6257, %v6022
    %v6260 = vmul.f32 %v6257, %v6025
    %v6261 = vmul.f32 %v6257, %v6028
    %v6262 = vmul.f32 %v6257, %v6031
    %v6263 = vmul.f32 %v6257, %v6034
    %v6264 = vmul.f32 %v6257, %v6037
    %v6265 = vmul.f32 %v6257, %v6040
    %v6266 = vmul.f32 %v6257, %v6043
    %v6267 = vmul.f32 %v6257, %v6046
    %v6268 = vmul.f32 %v6257, %v6049
    %v6269 = vmul.f32 %v6257, %v6052
    %v6270 = vmul.f32 %v6257, %v6055
    %v6271 = vmul.f32 %v6257, %v6058
    %v6272 = vmul.f32 %v6257, %v6061
    %v6273 = vmul.f32 %v6257, %v6064
    %v6274 = vmul.f32 %v6257, %v6067
    %v6275 = vmul.f32 %v6257, %v6070
    %v6276 = vmul.f32 %v6257, %v6073
    %v6277 = vmul.f32 %v6257, %v6076
    %v6278 = vmul.f32 %v6257, %v6079
    %v6279 = vmul.f32 %v6257, %v6082
    %v6280 = vmul.f32 %v6257, %v6085
    %v6281 = vmul.f32 %v6257, %v6088
    %v6282 = vmul.f32 %v6257, %v6091
    %v6283 = vmul.f32 %v6257, %v6094
    %v6284 = vmul.f32 %v6257, %v6097
    %v6285 = vmul.f32 %v6257, %v6100
    %v6286 = vmul.f32 %v6257, %v6103
    %v6287 = vmul.f32 %v6257, %v6106
    %v6288 = vmul.f32 %v6257, %v6109
    %v6289 = vmul.f32 %v6257, %v6112
    %v6290 = vmul.f32 %v6257, %v6115
    %v6291 = vmul.f32 %v6257, %v6118
    %v6292 = vmul.f32 %v6257, %v6121
    %v6293 = vmul.f32 %v6257, %v6124
    %v6294 = vmul.f32 %v6257, %v6127
    %v6295 = vmul.f32 %v6257, %v6130
    %v6296 = vmul.f32 %v6257, %v6133
    %v6297 = vmul.f32 %v6257, %v6136
    %v6298 = vmul.f32 %v6257, %v6139
    %v6299 = vmul.f32 %v6257, %v6142
    %v6300 = vmul.f32 %v6257, %v6145
    %v6301 = vmul.f32 %v6257, %v6148
    %v6302 = vmul.f32 %v6257, %v6151
    %v6303 = vmul.f32 %v6257, %v6154
    %v6304 = vmul.f32 %v6257, %v6157
    %v6305 = vmul.f32 %v6257, %v6160
    %v6306 = vmul.f32 %v6257, %v6163
    %v6307 = vmul.f32 %v6257, %v6166
    %v6308 = vmul.f32 %v6257, %v6169
    %v6309 = vmul.f32 %v6257, %v6172
    %v6310 = vmul.f32 %v6257, %v6175
    %v6311 = vmul.f32 %v6257, %v6178
    %v6312 = vmul.f32 %v6257, %v6181
    %v6313 = vmul.f32 %v6257, %v6184
    %v6314 = vmul.f32 %v6257, %v6187
    %v6315 = vmul.f32 %v6257, %v6190
    %v6316 = vmul.f32 %v6257, %v6193
    %v6317 = vmul.f32 %v6257, %v6196
    %v6318 = vmul.f32 %v6257, %v6199
    %v6319 = vmul.f32 %v6257, %v6202
    %v6320 = vmul.f32 %v6257, %v6205
    %v6321 = vmul.f32 %v6257, %v6208
    %v6322 = vmul.f32 %v6257, %v6211
    %v6323 = vmul.f32 %v6257, %v6214
    %v6324 = vmul.f32 %v6257, %v6217
    %v6325 = vmul.f32 %v6257, %v6220
    %v6326 = vmul.f32 %v6257, %v6223
    %v6327 = vmul.f32 %v6257, %v6226
    %v6328 = vmul.f32 %v6257, %v6229
    %v6329 = vmul.f32 %v6257, %v6232
    %v6330 = vmul.f32 %v6257, %v6235
    %v6331 = vmul.f32 %v6257, %v6238
    %v6332 = vmul.f32 %v6257, %v6241
    %v6333 = vmul.f32 %v6257, %v6244
    %v6334 = vmul.f32 %v6257, %v6247
    %v6335 = vmul.f32 %v6257, %v6250
    %v6336 = vmul.f32 %v6257, %v6253
    %v6337 = vmul.f32 %v6257, %v6256
    %v6418 = vlaneseq
    %v6419 = vshrl.u32 %v6418, 7
    %v6420 = vsub.s32 %v1410, %v6419
    %v6421 = vrot.slane %v6258, %v6420
    %v6422 = vlaneseq
    %v6423 = vshrl.u32 %v6422, 7
    %v6424 = vsub.s32 %v2083, %v6423
    %v6425 = vrot.slane %v6259, %v6424
    %v6426 = vsel %vm2088, %v6425, %v6421
    %v6427 = vlaneseq
    %v6428 = vshrl.u32 %v6427, 7
    %v6429 = vsub.s32 %v2090, %v6428
    %v6430 = vrot.slane %v6260, %v6429
    %v6431 = vsel %vm2095, %v6430, %v6426
    %v6432 = vlaneseq
    %v6433 = vshrl.u32 %v6432, 7
    %v6434 = vsub.s32 %v2097, %v6433
    %v6435 = vrot.slane %v6261, %v6434
    %v6436 = vsel %vm2102, %v6435, %v6431
    %v6437 = vlaneseq
    %v6438 = vshrl.u32 %v6437, 7
    %v6439 = vsub.s32 %v2104, %v6438
    %v6440 = vrot.slane %v6262, %v6439
    %v6441 = vsel %vm2109, %v6440, %v6436
    %v6442 = vlaneseq
    %v6443 = vshrl.u32 %v6442, 7
    %v6444 = vsub.s32 %v1410, %v6443
    %v6445 = vrot.slane %v6263, %v6444
    %v6446 = vlaneseq
    %v6447 = vshrl.u32 %v6446, 7
    %v6448 = vsub.s32 %v2083, %v6447
    %v6449 = vrot.slane %v6264, %v6448
    %v6450 = vsel %vm2088, %v6449, %v6445
    %v6451 = vlaneseq
    %v6452 = vshrl.u32 %v6451, 7
    %v6453 = vsub.s32 %v2090, %v6452
    %v6454 = vrot.slane %v6265, %v6453
    %v6455 = vsel %vm2095, %v6454, %v6450
    %v6456 = vlaneseq
    %v6457 = vshrl.u32 %v6456, 7
    %v6458 = vsub.s32 %v2097, %v6457
    %v6459 = vrot.slane %v6266, %v6458
    %v6460 = vsel %vm2102, %v6459, %v6455
    %v6461 = vlaneseq
    %v6462 = vshrl.u32 %v6461, 7
    %v6463 = vsub.s32 %v2104, %v6462
    %v6464 = vrot.slane %v6267, %v6463
    %v6465 = vsel %vm2109, %v6464, %v6460
    %v6466 = vlaneseq
    %v6467 = vshrl.u32 %v6466, 7
    %v6468 = vsub.s32 %v1410, %v6467
    %v6469 = vrot.slane %v6268, %v6468
    %v6470 = vlaneseq
    %v6471 = vshrl.u32 %v6470, 7
    %v6472 = vsub.s32 %v2083, %v6471
    %v6473 = vrot.slane %v6269, %v6472
    %v6474 = vsel %vm2088, %v6473, %v6469
    %v6475 = vlaneseq
    %v6476 = vshrl.u32 %v6475, 7
    %v6477 = vsub.s32 %v2090, %v6476
    %v6478 = vrot.slane %v6270, %v6477
    %v6479 = vsel %vm2095, %v6478, %v6474
    %v6480 = vlaneseq
    %v6481 = vshrl.u32 %v6480, 7
    %v6482 = vsub.s32 %v2097, %v6481
    %v6483 = vrot.slane %v6271, %v6482
    %v6484 = vsel %vm2102, %v6483, %v6479
    %v6485 = vlaneseq
    %v6486 = vshrl.u32 %v6485, 7
    %v6487 = vsub.s32 %v2104, %v6486
    %v6488 = vrot.slane %v6272, %v6487
    %v6489 = vsel %vm2109, %v6488, %v6484
    %v6490 = vlaneseq
    %v6491 = vshrl.u32 %v6490, 7
    %v6492 = vsub.s32 %v1410, %v6491
    %v6493 = vrot.slane %v6273, %v6492
    %v6494 = vlaneseq
    %v6495 = vshrl.u32 %v6494, 7
    %v6496 = vsub.s32 %v2083, %v6495
    %v6497 = vrot.slane %v6274, %v6496
    %v6498 = vsel %vm2088, %v6497, %v6493
    %v6499 = vlaneseq
    %v6500 = vshrl.u32 %v6499, 7
    %v6501 = vsub.s32 %v2090, %v6500
    %v6502 = vrot.slane %v6275, %v6501
    %v6503 = vsel %vm2095, %v6502, %v6498
    %v6504 = vlaneseq
    %v6505 = vshrl.u32 %v6504, 7
    %v6506 = vsub.s32 %v2097, %v6505
    %v6507 = vrot.slane %v6276, %v6506
    %v6508 = vsel %vm2102, %v6507, %v6503
    %v6509 = vlaneseq
    %v6510 = vshrl.u32 %v6509, 7
    %v6511 = vsub.s32 %v2104, %v6510
    %v6512 = vrot.slane %v6277, %v6511
    %v6513 = vsel %vm2109, %v6512, %v6508
    %v6514 = vlaneseq
    %v6515 = vshrl.u32 %v6514, 7
    %v6516 = vsub.s32 %v1410, %v6515
    %v6517 = vrot.slane %v6278, %v6516
    %v6518 = vlaneseq
    %v6519 = vshrl.u32 %v6518, 7
    %v6520 = vsub.s32 %v2083, %v6519
    %v6521 = vrot.slane %v6279, %v6520
    %v6522 = vsel %vm2088, %v6521, %v6517
    %v6523 = vlaneseq
    %v6524 = vshrl.u32 %v6523, 7
    %v6525 = vsub.s32 %v2090, %v6524
    %v6526 = vrot.slane %v6280, %v6525
    %v6527 = vsel %vm2095, %v6526, %v6522
    %v6528 = vlaneseq
    %v6529 = vshrl.u32 %v6528, 7
    %v6530 = vsub.s32 %v2097, %v6529
    %v6531 = vrot.slane %v6281, %v6530
    %v6532 = vsel %vm2102, %v6531, %v6527
    %v6533 = vlaneseq
    %v6534 = vshrl.u32 %v6533, 7
    %v6535 = vsub.s32 %v2104, %v6534
    %v6536 = vrot.slane %v6282, %v6535
    %v6537 = vsel %vm2109, %v6536, %v6532
    %v6538 = vlaneseq
    %v6539 = vshrl.u32 %v6538, 7
    %v6540 = vsub.s32 %v1410, %v6539
    %v6541 = vrot.slane %v6283, %v6540
    %v6542 = vlaneseq
    %v6543 = vshrl.u32 %v6542, 7
    %v6544 = vsub.s32 %v2083, %v6543
    %v6545 = vrot.slane %v6284, %v6544
    %v6546 = vsel %vm2088, %v6545, %v6541
    %v6547 = vlaneseq
    %v6548 = vshrl.u32 %v6547, 7
    %v6549 = vsub.s32 %v2090, %v6548
    %v6550 = vrot.slane %v6285, %v6549
    %v6551 = vsel %vm2095, %v6550, %v6546
    %v6552 = vlaneseq
    %v6553 = vshrl.u32 %v6552, 7
    %v6554 = vsub.s32 %v2097, %v6553
    %v6555 = vrot.slane %v6286, %v6554
    %v6556 = vsel %vm2102, %v6555, %v6551
    %v6557 = vlaneseq
    %v6558 = vshrl.u32 %v6557, 7
    %v6559 = vsub.s32 %v2104, %v6558
    %v6560 = vrot.slane %v6287, %v6559
    %v6561 = vsel %vm2109, %v6560, %v6556
    %v6562 = vlaneseq
    %v6563 = vshrl.u32 %v6562, 7
    %v6564 = vsub.s32 %v1410, %v6563
    %v6565 = vrot.slane %v6288, %v6564
    %v6566 = vlaneseq
    %v6567 = vshrl.u32 %v6566, 7
    %v6568 = vsub.s32 %v2083, %v6567
    %v6569 = vrot.slane %v6289, %v6568
    %v6570 = vsel %vm2088, %v6569, %v6565
    %v6571 = vlaneseq
    %v6572 = vshrl.u32 %v6571, 7
    %v6573 = vsub.s32 %v2090, %v6572
    %v6574 = vrot.slane %v6290, %v6573
    %v6575 = vsel %vm2095, %v6574, %v6570
    %v6576 = vlaneseq
    %v6577 = vshrl.u32 %v6576, 7
    %v6578 = vsub.s32 %v2097, %v6577
    %v6579 = vrot.slane %v6291, %v6578
    %v6580 = vsel %vm2102, %v6579, %v6575
    %v6581 = vlaneseq
    %v6582 = vshrl.u32 %v6581, 7
    %v6583 = vsub.s32 %v2104, %v6582
    %v6584 = vrot.slane %v6292, %v6583
    %v6585 = vsel %vm2109, %v6584, %v6580
    %v6586 = vlaneseq
    %v6587 = vshrl.u32 %v6586, 7
    %v6588 = vsub.s32 %v1410, %v6587
    %v6589 = vrot.slane %v6293, %v6588
    %v6590 = vlaneseq
    %v6591 = vshrl.u32 %v6590, 7
    %v6592 = vsub.s32 %v2083, %v6591
    %v6593 = vrot.slane %v6294, %v6592
    %v6594 = vsel %vm2088, %v6593, %v6589
    %v6595 = vlaneseq
    %v6596 = vshrl.u32 %v6595, 7
    %v6597 = vsub.s32 %v2090, %v6596
    %v6598 = vrot.slane %v6295, %v6597
    %v6599 = vsel %vm2095, %v6598, %v6594
    %v6600 = vlaneseq
    %v6601 = vshrl.u32 %v6600, 7
    %v6602 = vsub.s32 %v2097, %v6601
    %v6603 = vrot.slane %v6296, %v6602
    %v6604 = vsel %vm2102, %v6603, %v6599
    %v6605 = vlaneseq
    %v6606 = vshrl.u32 %v6605, 7
    %v6607 = vsub.s32 %v2104, %v6606
    %v6608 = vrot.slane %v6297, %v6607
    %v6609 = vsel %vm2109, %v6608, %v6604
    %v6610 = vlaneseq
    %v6611 = vshrl.u32 %v6610, 7
    %v6612 = vsub.s32 %v1410, %v6611
    %v6613 = vrot.slane %v6298, %v6612
    %v6614 = vlaneseq
    %v6615 = vshrl.u32 %v6614, 7
    %v6616 = vsub.s32 %v2083, %v6615
    %v6617 = vrot.slane %v6299, %v6616
    %v6618 = vsel %vm2088, %v6617, %v6613
    %v6619 = vlaneseq
    %v6620 = vshrl.u32 %v6619, 7
    %v6621 = vsub.s32 %v2090, %v6620
    %v6622 = vrot.slane %v6300, %v6621
    %v6623 = vsel %vm2095, %v6622, %v6618
    %v6624 = vlaneseq
    %v6625 = vshrl.u32 %v6624, 7
    %v6626 = vsub.s32 %v2097, %v6625
    %v6627 = vrot.slane %v6301, %v6626
    %v6628 = vsel %vm2102, %v6627, %v6623
    %v6629 = vlaneseq
    %v6630 = vshrl.u32 %v6629, 7
    %v6631 = vsub.s32 %v2104, %v6630
    %v6632 = vrot.slane %v6302, %v6631
    %v6633 = vsel %vm2109, %v6632, %v6628
    %v6634 = vlaneseq
    %v6635 = vshrl.u32 %v6634, 7
    %v6636 = vsub.s32 %v1410, %v6635
    %v6637 = vrot.slane %v6303, %v6636
    %v6638 = vlaneseq
    %v6639 = vshrl.u32 %v6638, 7
    %v6640 = vsub.s32 %v2083, %v6639
    %v6641 = vrot.slane %v6304, %v6640
    %v6642 = vsel %vm2088, %v6641, %v6637
    %v6643 = vlaneseq
    %v6644 = vshrl.u32 %v6643, 7
    %v6645 = vsub.s32 %v2090, %v6644
    %v6646 = vrot.slane %v6305, %v6645
    %v6647 = vsel %vm2095, %v6646, %v6642
    %v6648 = vlaneseq
    %v6649 = vshrl.u32 %v6648, 7
    %v6650 = vsub.s32 %v2097, %v6649
    %v6651 = vrot.slane %v6306, %v6650
    %v6652 = vsel %vm2102, %v6651, %v6647
    %v6653 = vlaneseq
    %v6654 = vshrl.u32 %v6653, 7
    %v6655 = vsub.s32 %v2104, %v6654
    %v6656 = vrot.slane %v6307, %v6655
    %v6657 = vsel %vm2109, %v6656, %v6652
    %v6658 = vlaneseq
    %v6659 = vshrl.u32 %v6658, 7
    %v6660 = vsub.s32 %v1410, %v6659
    %v6661 = vrot.slane %v6308, %v6660
    %v6662 = vlaneseq
    %v6663 = vshrl.u32 %v6662, 7
    %v6664 = vsub.s32 %v2083, %v6663
    %v6665 = vrot.slane %v6309, %v6664
    %v6666 = vsel %vm2088, %v6665, %v6661
    %v6667 = vlaneseq
    %v6668 = vshrl.u32 %v6667, 7
    %v6669 = vsub.s32 %v2090, %v6668
    %v6670 = vrot.slane %v6310, %v6669
    %v6671 = vsel %vm2095, %v6670, %v6666
    %v6672 = vlaneseq
    %v6673 = vshrl.u32 %v6672, 7
    %v6674 = vsub.s32 %v2097, %v6673
    %v6675 = vrot.slane %v6311, %v6674
    %v6676 = vsel %vm2102, %v6675, %v6671
    %v6677 = vlaneseq
    %v6678 = vshrl.u32 %v6677, 7
    %v6679 = vsub.s32 %v2104, %v6678
    %v6680 = vrot.slane %v6312, %v6679
    %v6681 = vsel %vm2109, %v6680, %v6676
    %v6682 = vlaneseq
    %v6683 = vshrl.u32 %v6682, 7
    %v6684 = vsub.s32 %v1410, %v6683
    %v6685 = vrot.slane %v6313, %v6684
    %v6686 = vlaneseq
    %v6687 = vshrl.u32 %v6686, 7
    %v6688 = vsub.s32 %v2083, %v6687
    %v6689 = vrot.slane %v6314, %v6688
    %v6690 = vsel %vm2088, %v6689, %v6685
    %v6691 = vlaneseq
    %v6692 = vshrl.u32 %v6691, 7
    %v6693 = vsub.s32 %v2090, %v6692
    %v6694 = vrot.slane %v6315, %v6693
    %v6695 = vsel %vm2095, %v6694, %v6690
    %v6696 = vlaneseq
    %v6697 = vshrl.u32 %v6696, 7
    %v6698 = vsub.s32 %v2097, %v6697
    %v6699 = vrot.slane %v6316, %v6698
    %v6700 = vsel %vm2102, %v6699, %v6695
    %v6701 = vlaneseq
    %v6702 = vshrl.u32 %v6701, 7
    %v6703 = vsub.s32 %v2104, %v6702
    %v6704 = vrot.slane %v6317, %v6703
    %v6705 = vsel %vm2109, %v6704, %v6700
    %v6706 = vlaneseq
    %v6707 = vshrl.u32 %v6706, 7
    %v6708 = vsub.s32 %v1410, %v6707
    %v6709 = vrot.slane %v6318, %v6708
    %v6710 = vlaneseq
    %v6711 = vshrl.u32 %v6710, 7
    %v6712 = vsub.s32 %v2083, %v6711
    %v6713 = vrot.slane %v6319, %v6712
    %v6714 = vsel %vm2088, %v6713, %v6709
    %v6715 = vlaneseq
    %v6716 = vshrl.u32 %v6715, 7
    %v6717 = vsub.s32 %v2090, %v6716
    %v6718 = vrot.slane %v6320, %v6717
    %v6719 = vsel %vm2095, %v6718, %v6714
    %v6720 = vlaneseq
    %v6721 = vshrl.u32 %v6720, 7
    %v6722 = vsub.s32 %v2097, %v6721
    %v6723 = vrot.slane %v6321, %v6722
    %v6724 = vsel %vm2102, %v6723, %v6719
    %v6725 = vlaneseq
    %v6726 = vshrl.u32 %v6725, 7
    %v6727 = vsub.s32 %v2104, %v6726
    %v6728 = vrot.slane %v6322, %v6727
    %v6729 = vsel %vm2109, %v6728, %v6724
    %v6730 = vlaneseq
    %v6731 = vshrl.u32 %v6730, 7
    %v6732 = vsub.s32 %v1410, %v6731
    %v6733 = vrot.slane %v6323, %v6732
    %v6734 = vlaneseq
    %v6735 = vshrl.u32 %v6734, 7
    %v6736 = vsub.s32 %v2083, %v6735
    %v6737 = vrot.slane %v6324, %v6736
    %v6738 = vsel %vm2088, %v6737, %v6733
    %v6739 = vlaneseq
    %v6740 = vshrl.u32 %v6739, 7
    %v6741 = vsub.s32 %v2090, %v6740
    %v6742 = vrot.slane %v6325, %v6741
    %v6743 = vsel %vm2095, %v6742, %v6738
    %v6744 = vlaneseq
    %v6745 = vshrl.u32 %v6744, 7
    %v6746 = vsub.s32 %v2097, %v6745
    %v6747 = vrot.slane %v6326, %v6746
    %v6748 = vsel %vm2102, %v6747, %v6743
    %v6749 = vlaneseq
    %v6750 = vshrl.u32 %v6749, 7
    %v6751 = vsub.s32 %v2104, %v6750
    %v6752 = vrot.slane %v6327, %v6751
    %v6753 = vsel %vm2109, %v6752, %v6748
    %v6754 = vlaneseq
    %v6755 = vshrl.u32 %v6754, 7
    %v6756 = vsub.s32 %v1410, %v6755
    %v6757 = vrot.slane %v6328, %v6756
    %v6758 = vlaneseq
    %v6759 = vshrl.u32 %v6758, 7
    %v6760 = vsub.s32 %v2083, %v6759
    %v6761 = vrot.slane %v6329, %v6760
    %v6762 = vsel %vm2088, %v6761, %v6757
    %v6763 = vlaneseq
    %v6764 = vshrl.u32 %v6763, 7
    %v6765 = vsub.s32 %v2090, %v6764
    %v6766 = vrot.slane %v6330, %v6765
    %v6767 = vsel %vm2095, %v6766, %v6762
    %v6768 = vlaneseq
    %v6769 = vshrl.u32 %v6768, 7
    %v6770 = vsub.s32 %v2097, %v6769
    %v6771 = vrot.slane %v6331, %v6770
    %v6772 = vsel %vm2102, %v6771, %v6767
    %v6773 = vlaneseq
    %v6774 = vshrl.u32 %v6773, 7
    %v6775 = vsub.s32 %v2104, %v6774
    %v6776 = vrot.slane %v6332, %v6775
    %v6777 = vsel %vm2109, %v6776, %v6772
    %v6778 = vlaneseq
    %v6779 = vshrl.u32 %v6778, 7
    %v6780 = vsub.s32 %v1410, %v6779
    %v6781 = vrot.slane %v6333, %v6780
    %v6782 = vlaneseq
    %v6783 = vshrl.u32 %v6782, 7
    %v6784 = vsub.s32 %v2083, %v6783
    %v6785 = vrot.slane %v6334, %v6784
    %v6786 = vsel %vm2088, %v6785, %v6781
    %v6787 = vlaneseq
    %v6788 = vshrl.u32 %v6787, 7
    %v6789 = vsub.s32 %v2090, %v6788
    %v6790 = vrot.slane %v6335, %v6789
    %v6791 = vsel %vm2095, %v6790, %v6786
    %v6792 = vlaneseq
    %v6793 = vshrl.u32 %v6792, 7
    %v6794 = vsub.s32 %v2097, %v6793
    %v6795 = vrot.slane %v6336, %v6794
    %v6796 = vsel %vm2102, %v6795, %v6791
    %v6797 = vlaneseq
    %v6798 = vshrl.u32 %v6797, 7
    %v6799 = vsub.s32 %v2104, %v6798
    %v6800 = vrot.slane %v6337, %v6799
    %v6801 = vsel %vm2109, %v6800, %v6796
    %v6802 = vsel %vm2471, %v6465, %v6441
    %v6803 = vsel %vm2473, %v6489, %v6802
    %v6804 = vsel %vm2475, %v6513, %v6803
    %v6805 = vsel %vm2477, %v6537, %v6804
    %v6806 = vsel %vm2479, %v6561, %v6805
    %v6807 = vsel %vm2481, %v6585, %v6806
    %v6808 = vsel %vm2483, %v6609, %v6807
    %v6809 = vsel %vm2471, %v6657, %v6633
    %v6810 = vsel %vm2473, %v6681, %v6809
    %v6811 = vsel %vm2475, %v6705, %v6810
    %v6812 = vsel %vm2477, %v6729, %v6811
    %v6813 = vsel %vm2479, %v6753, %v6812
    %v6814 = vsel %vm2481, %v6777, %v6813
    %v6815 = vsel %vm2483, %v6801, %v6814
    %v6818 = vsub.f32 %v5753, %v6808
    %v6819 = vsub.f32 %v5754, %v6815
    %s6820 = sld [smem:[#allocation8 + $0x4]]
    %v6821 = vstv %s6820
    %v6822 = vmul.f32 %v6821, %v6818
    %v6823 = vmul.f32 %v6821, %v6819
    %v6824 = vtanh.pop %v6822
    %v6825 = vtanh.pop %v6823
    %s6826 = sld [smem:[#allocation6 + $0x4]]
    %v6827 = vsub.f32 %v6824, %v5753
    %v6828 = vsub.f32 %v6825, %v5754
    %v6829 = vstv %s6826
    %v6830 = vmul.f32 %v6829, %v6827
    %v6831 = vmul.f32 %v6829, %v6828
    %v6832 = vadd.f32 %v5753, %v6830
    %v6833 = vadd.f32 %v5754, %v6831
    %v6834 = vsel %vm1411, -1.0, %v6832
    %v6835 = vsel %vm1411, -1.0, %v6833
    %6836 = vst.msk [vmem:[#allocation12] sm:$0xff] %vm173, %v6834
    %6837 = vst.msk [vmem:[#allocation12 + $0x8] sm:$0xff] %vm173, %v6835
    // Predicated region
    $region42: #{tpu_custom_call.1} parent=1 // pred_check
      _
    $region43: #{tpu_custom_call.1} parent=1 // pred_check_branch
      %6839 = sbr.rel (0) target = $region45
    $region44: #{tpu_custom_call.1} parent=1 // pred_region
      %s6841 = ssub.s32 256, 256
      %6842 = vsyncadd [#allocation4], %s6841
      %s6843 = sshll.u32 [#allocation12], 4
      %s6844 = int_to_ptr.vmem [resolvable:$true] %s6843
      %6849 = dma.vmem_to_hbm [thread:$0]  %s6844, 256, %s5, [#allocation4], 128, 128, 8
    $region45: #{tpu_custom_call.1} parent=1 // pred_fallthru
      _
    // Predicated region
    $region46: #{tpu_custom_call.1} parent=1 // pred_check
      _
    $region47: #{tpu_custom_call.1} parent=1 // pred_check_branch
      %6851 = sbr.rel (0) target = $region49
    $region48: #{tpu_custom_call.1} parent=1 // pred_region
      %6852 = dma.done [#allocation4], 256
    $region49: #{tpu_custom_call.1} parent=1 // pred_fallthru
      _
    %6853 = vsyncpa [#allocation3], 1
    %6854 = vsyncpa [#allocation11], 1
    %6855 = vsyncpa [#allocation4], 1
    %6856 = vsyncpa [#allocation5], 1
    %6857 = vsyncpa [#allocation7], 1

</llo_original>
